<compile_context>
chip_gen: v7x
topology: tpu7x:2x2x1
jax: 0.10.0
libtpu: 0.0.40
codegen_flags: <defaults>
</compile_context>

<pallas_src>
import functools

import jax
import jax.numpy as jnp
from jax.experimental import pallas as pl
from jax.experimental.pallas import tpu as pltpu

_EPS = 1e-5
_HP = 128                      # lane-padded hidden / output width of the convs
_VMEM_LIMIT = 64 * 1024 * 1024


def _pick_block(n, cap=256):
    """Multiple-of-8 divisor of n, <= cap, preferring >=2 grid steps."""
    cands = [b for b in range(8, min(n, cap) + 1, 8) if n % b == 0]
    if not cands:
        return n
    small = [b for b in cands if b < n]
    return max(small) if small else max(cands)


# ---------------------------------------------------------------------------
# kNN neighbor-score kernels
# ---------------------------------------------------------------------------

def _graph_scores_kernel(x_ref, sq_ref, o_ref):
    # score[i, j] = ||x_j||^2 - 2 <x_i, x_j>; the row-constant ||x_i||^2 does
    # not change the per-row top-k ranking so it is dropped.  bf16 MXU
    # operands, f32 accumulation; one matmul per graph.
    x = x_ref[...].astype(jnp.bfloat16)
    dn = (((1,), (1,)), ((), ()))            # contract feature axis (A @ B^T)
    gram = jax.lax.dot_general(x, x, dn, preferred_element_type=jnp.float32)
    o_ref[...] = sq_ref[...] - 2.0 * gram[None]


def _graph_scores(x, num_graphs, npg):
    n, f = x.shape
    sq = jnp.sum(x * x, axis=-1).reshape(num_graphs, 1, npg)   # tiny VPU reduce
    return pl.pallas_call(
        _graph_scores_kernel,
        out_shape=jax.ShapeDtypeStruct((num_graphs, npg, npg), jnp.float32),
        grid=(num_graphs,),
        in_specs=[
            pl.BlockSpec((npg, f), lambda g: (g, 0)),
            pl.BlockSpec((1, 1, npg), lambda g: (g, 0, 0)),
        ],
        out_specs=pl.BlockSpec((1, npg, npg), lambda g: (g, 0, 0)),
        compiler_params=pltpu.CompilerParams(
            dimension_semantics=("parallel",)),
    )(x, sq)


def _masked_scores_kernel(xr_ref, br_ref, xc_ref, bc_ref, sqc_ref, o_ref):
    # Ragged fallback: row-tiled N x N scores; cross-graph mask and ||x_j||^2
    # are built in-kernel from (N,) vectors (no N x N addend array in HBM).
    dn = (((1,), (1,)), ((), ()))
    gram = jax.lax.dot_general(xr_ref[...].astype(jnp.bfloat16),
                               xc_ref[...].astype(jnp.bfloat16), dn,
                               preferred_element_type=jnp.float32)
    same = br_ref[...] == bc_ref[...]                        # (bm, N)
    o_ref[...] = jnp.where(same, sqc_ref[...] - 2.0 * gram, jnp.inf)


def _ragged_scores(x, batch):
    n, f = x.shape
    sq = jnp.sum(x * x, axis=-1).reshape(1, n)
    bcol = batch.reshape(1, n).astype(jnp.int32)
    brow = batch.reshape(n, 1).astype(jnp.int32)
    bm = _pick_block(n, cap=512)
    return pl.pallas_call(
        _masked_scores_kernel,
        out_shape=jax.ShapeDtypeStruct((n, n), jnp.float32),
        grid=(n // bm,),
        in_specs=[
            pl.BlockSpec((bm, f), lambda i: (i, 0)),
            pl.BlockSpec((bm, 1), lambda i: (i, 0)),
            pl.BlockSpec((n, f), lambda i: (0, 0)),
            pl.BlockSpec((1, n), lambda i: (0, 0)),
            pl.BlockSpec((1, n), lambda i: (0, 0)),
        ],
        out_specs=pl.BlockSpec((bm, n), lambda i: (i, 0)),
        compiler_params=pltpu.CompilerParams(
            dimension_semantics=("parallel",),
            vmem_limit_bytes=_VMEM_LIMIT),
    )(x, brow, x, bcol, sq)


# ---------------------------------------------------------------------------
# DynamicEdgeConv, stage 1: per-node split-W1 projections (hoisted, done once)
#   cat([x_i, x_j - x_i]) @ W1 + b1 = x_i @ (W1a - W1b) + x_j @ W1b + b1
# ---------------------------------------------------------------------------

def _project_kernel(x_ref, wa_ref, wb_ref, b1_ref, pa_ref, pb_ref):
    x = x_ref[...].astype(jnp.bfloat16)
    pa_ref[...] = (jnp.dot(x, wa_ref[...], preferred_element_type=jnp.float32)
                   + b1_ref[...])
    pb_ref[...] = jnp.dot(x, wb_ref[...],
                          preferred_element_type=jnp.float32
                          ).astype(jnp.bfloat16)


def project(x, p, bn):
    n, f = x.shape
    return pl.pallas_call(
        _project_kernel,
        out_shape=(jax.ShapeDtypeStruct((n, _HP), jnp.float32),    # pa + b1
                   jax.ShapeDtypeStruct((n, _HP), jnp.bfloat16)),  # pb (gather)
        grid=(n // bn,),
        in_specs=[
            pl.BlockSpec((bn, f), lambda i: (i, 0)),
            pl.BlockSpec((f, _HP), lambda i: (0, 0)),
            pl.BlockSpec((f, _HP), lambda i: (0, 0)),
            pl.BlockSpec((1, _HP), lambda i: (0, 0)),
        ],
        out_specs=(pl.BlockSpec((bn, _HP), lambda i: (i, 0)),
                   pl.BlockSpec((bn, _HP), lambda i: (i, 0))),
        compiler_params=pltpu.CompilerParams(
            dimension_semantics=("parallel",)),
    )(x, p["wa"], p["wb"], p["b1"])


# ---------------------------------------------------------------------------
# DynamicEdgeConv, stage 2: per-graph one-hot gather + layers 2/3 + mean-over-k
# ---------------------------------------------------------------------------

def _edge_gather_kernel(idx_ref, pa_ref, pb_ref, w2_ref, b2_ref, w3_ref,
                        b3_ref, o_ref):
    bn, hp = pa_ref.shape
    span = pb_ref.shape[0]                 # nodes_per_graph (or N for ragged)
    bnk = idx_ref.shape[0]
    k = bnk // bn

    # Neighbor gather as a bf16 one-hot MXU matmul restricted to this graph.
    nbr = jax.lax.broadcasted_iota(jnp.int32, (bnk, span), 1)
    onehot = (idx_ref[...] == nbr).astype(jnp.float32).astype(jnp.bfloat16)
    pbj = jnp.dot(onehot, pb_ref[...],
                  preferred_element_type=jnp.float32)          # (bnk, hp)

    # Layer 1 (bias/BN folded into pa) + ReLU; layer 2 + ReLU.
    h1 = jnp.maximum(pbj.reshape(bn, k, hp) + pa_ref[...][:, None, :], 0.0)
    h2 = jnp.dot(h1.reshape(bnk, hp).astype(jnp.bfloat16), w2_ref[...],
                 preferred_element_type=jnp.float32) + b2_ref[...]
    h2 = jnp.maximum(h2, 0.0)

    # aggr='mean': mean over k BEFORE the final linear (mean is linear).
    h2m = jnp.mean(h2.reshape(bn, k, hp), axis=1)              # (bn, hp)
    out = jnp.dot(h2m.astype(jnp.bfloat16), w3_ref[...],
                  preferred_element_type=jnp.float32) + b3_ref[...]
    o_ref[...] = out.astype(o_ref.dtype)


def edge_gather(idx, pa, pb, p, span, graphs, bn):
    n = pa.shape[0]
    k = idx.shape[1]
    bpg = span // bn
    # TODO(synk): idx travels as a 1-lane-wide VMEM block; a scalar-prefetch /
    # SMEM path would avoid the lane padding for very large k*bn.
    idx2 = idx.reshape(n * k, 1).astype(jnp.int32)
    return pl.pallas_call(
        _edge_gather_kernel,
        out_shape=jax.ShapeDtypeStruct((n, _HP), jnp.float32),
        grid=(graphs, bpg),
        in_specs=[
            pl.BlockSpec((bn * k, 1), lambda g, b: (g * bpg + b, 0)),
            pl.BlockSpec((bn, _HP), lambda g, b: (g * bpg + b, 0)),
            pl.BlockSpec((span, _HP), lambda g, b: (g, 0)),    # this graph only
            pl.BlockSpec((_HP, _HP), lambda g, b: (0, 0)),
            pl.BlockSpec((1, _HP), lambda g, b: (0, 0)),
            pl.BlockSpec((_HP, _HP), lambda g, b: (0, 0)),
            pl.BlockSpec((1, _HP), lambda g, b: (0, 0)),
        ],
        out_specs=pl.BlockSpec((bn, _HP), lambda g, b: (g * bpg + b, 0)),
        compiler_params=pltpu.CompilerParams(
            dimension_semantics=("parallel", "parallel"),
            vmem_limit_bytes=_VMEM_LIMIT),
    )(idx2, pa, pb, p["w2"], p["b2"], p["w3"], p["b3"])


def dynamic_edge_conv(x, batch, p, k, dout, num_graphs, nodes_per_graph):
    n = x.shape[0]
    uniform = (nodes_per_graph is not None
               and nodes_per_graph * num_graphs == n
               and nodes_per_graph % 8 == 0
               and k <= nodes_per_graph)
    if uniform:
        # Per-graph blocked scores; graph-local indices (nodes are assumed to
        # be laid out contiguously per graph, as in the demo batch).
        scores = _graph_scores(x, num_graphs, nodes_per_graph)
        # TODO(synk): top-k neighbor selection (sorting) stays in plain JAX.
        _, idx = jax.lax.top_k(-scores, k)            # (B, npg, k), graph-local
        idx = idx.reshape(n, k).astype(jnp.int32)
        span, graphs = nodes_per_graph, num_graphs
    else:
        # Ragged fallback: masked scores, global indices, whole-batch gather.
        # TODO(synk): for very large ragged batches the gather span should be
        # chunked over column blocks instead of one (N, 128) pb slab.
        scores = _ragged_scores(x, batch)
        _, idx = jax.lax.top_k(-scores, k)
        idx = idx.astype(jnp.int32)
        span, graphs = n, 1

    pa, pb = project(x, p, _pick_block(n, cap=512))
    out = edge_gather(idx, pa, pb, p, span, graphs, _pick_block(span, cap=128))
    return out[:, :dout]                  # drop the lane pad (kernel stores 128)


# ---------------------------------------------------------------------------
# Fused output stage: tiled scatter_mean (accumulator) + 3-layer out MLP
# ---------------------------------------------------------------------------

def _out_kernel(segT_ref, xc_ref, u1_ref, w1x_ref, w1u_ref, b1_ref,
                w2_ref, b2_ref, w3_ref, b3_ref, o_ref, acc_ref):
    @pl.when(pl.program_id(0) == 0)
    def _():
        acc_ref[...] = jnp.zeros_like(acc_ref)

    # scatter_mean chunk: segT (bn, B) already normalized by graph counts.
    acc_ref[...] += jax.lax.dot_general(
        segT_ref[...], xc_ref[...], (((0,), (0,)), ((), ())),
        preferred_element_type=jnp.float32)

    @pl.when(pl.program_id(0) == pl.num_programs(0) - 1)
    def _():
        cdt = w2_ref.dtype
        u2 = acc_ref[...]
        h = (jnp.dot(u2.astype(cdt), w1x_ref[...],
                     preferred_element_type=jnp.float32)
             + jnp.dot(u1_ref[...].astype(cdt), w1u_ref[...],
                       preferred_element_type=jnp.float32)
             + b1_ref[...])
        h = jnp.maximum(h, 0.0)
        h = jnp.maximum(
            jnp.dot(h.astype(cdt), w2_ref[...],
                    preferred_element_type=jnp.float32) + b2_ref[...], 0.0)
        o_ref[...] = (jnp.dot(h.astype(cdt), w3_ref[...],
                              preferred_element_type=jnp.float32)
                      + b3_ref[...]).astype(o_ref.dtype)


def out_mlp(xc, segT, u1, p, output_dim):
    n, dx = xc.shape
    b, g = u1.shape
    bn = _pick_block(n, cap=1024)
    return pl.pallas_call(
        _out_kernel,
        out_shape=jax.ShapeDtypeStruct((b, output_dim), jnp.float32),
        grid=(n // bn,),
        in_specs=[
            pl.BlockSpec((bn, b), lambda i: (i, 0)),
            pl.BlockSpec((bn, dx), lambda i: (i, 0)),
            pl.BlockSpec((b, g), lambda i: (0, 0)),
            pl.BlockSpec(p["w1x"].shape, lambda i: (0, 0)),
            pl.BlockSpec(p["w1u"].shape, lambda i: (0, 0)),
            pl.BlockSpec(p["b1"].shape, lambda i: (0, 0)),
            pl.BlockSpec(p["w2"].shape, lambda i: (0, 0)),
            pl.BlockSpec(p["b2"].shape, lambda i: (0, 0)),
            pl.BlockSpec(p["w3"].shape, lambda i: (0, 0)),
            pl.BlockSpec(p["b3"].shape, lambda i: (0, 0)),
        ],
        out_specs=pl.BlockSpec((b, output_dim), lambda i: (0, 0)),
        scratch_shapes=[pltpu.VMEM((b, dx), jnp.float32)],
        compiler_params=pltpu.CompilerParams(
            dimension_semantics=("arbitrary",),
            vmem_limit_bytes=_VMEM_LIMIT),
    )(segT, xc, u1, p["w1x"], p["w1u"], p["b1"],
      p["w2"], p["b2"], p["w3"], p["b3"])


# ---------------------------------------------------------------------------
# Deterministic parameter init (synthetic; mirrors the PyTorch module shapes),
# eval-mode BN folded into the adjacent Linear, W1 pre-split, lane padding.
# ---------------------------------------------------------------------------

def _init_linear(key, din, dout, scale=0.1):
    kw, kb = jax.random.split(key)
    w = scale * jax.random.normal(kw, (din, dout), jnp.float32)
    b = scale * jax.random.normal(kb, (1, dout), jnp.float32)
    return w, b


def _init_bn(key, dim):
    kg, kb = jax.random.split(key)
    gamma = 1.0 + 0.1 * jax.random.normal(kg, (dim,), jnp.float32)
    beta = 0.1 * jax.random.normal(kb, (dim,), jnp.float32)
    running_mean = jnp.zeros((dim,), jnp.float32)
    running_var = jnp.ones((dim,), jnp.float32)
    scale = gamma / jnp.sqrt(running_var + _EPS)
    shift = beta - running_mean * scale
    return scale.reshape(1, -1), shift.reshape(1, -1)


def _pad_cols(a):
    return jnp.pad(a, ((0, 0), (0, _HP - a.shape[1])))


def _pad_rows_cols(a):
    return jnp.pad(a, ((0, _HP - a.shape[0]), (0, _HP - a.shape[1])))


def _init_conv_mlp(key, fin, h, dout, wdtype=jnp.bfloat16):
    # Sequential(Linear(2*fin,h), BN(h), ReLU, Linear(h,h), BN(h), ReLU,
    #            Linear(h,dout)); BN folded; W1 split; h/dout padded to 128.
    ks = jax.random.split(key, 5)
    w1, b1 = _init_linear(ks[0], 2 * fin, h)
    s1, t1 = _init_bn(ks[1], h)
    w2, b2 = _init_linear(ks[2], h, h)
    s2, t2 = _init_bn(ks[3], h)
    w3, b3 = _init_linear(ks[4], h, dout)
    w1a, w1b = w1[:fin], w1[fin:]
    wa = (w1a - w1b) * s1          # x_i projection
    wb = w1b * s1                  # x_j projection (gather source)
    b1f = b1 * s1 + t1
    w2f, b2f = w2 * s2, b2 * s2 + t2
    # Zero-padding keeps padded channels exactly 0 through ReLUs and matmuls.
    return dict(wa=_pad_cols(wa).astype(wdtype),
                wb=_pad_cols(wb).astype(wdtype),
                b1=_pad_cols(b1f),
                w2=_pad_rows_cols(w2f).astype(wdtype),
                b2=_pad_cols(b2f),
                w3=_pad_rows_cols(w3).astype(wdtype),
                b3=_pad_cols(b3))


def _init_out_mlp(key, global_dim, node_dim, h, dout, wdtype=jnp.bfloat16):
    ks = jax.random.split(key, 5)
    w1, b1 = _init_linear(ks[0], global_dim + node_dim, h)
    s1, t1 = _init_bn(ks[1], h)
    w2, b2 = _init_linear(ks[2], h, h)
    s2, t2 = _init_bn(ks[3], h)
    w3, b3 = _init_linear(ks[4], h, dout)
    # cat([u1, u2]) @ W1 = u1 @ W1[:global_dim] + u2 @ W1[global_dim:]
    return dict(w1u=(w1[:global_dim] * s1).astype(wdtype),
                w1x=(w1[global_dim:] * s1).astype(wdtype),
                b1=b1 * s1 + t1,
                w2=(w2 * s2).astype(wdtype),
                b2=b2 * s2 + t2,
                w3=w3.astype(wdtype),
                b3=b3)


def init_params(key, input_dim=3, big_dim=32, bigger_dim=256,
                global_dim=2, output_dim=1):
    ks = jax.random.split(key, 6)
    return {
        "bn_x": _init_bn(ks[0], input_dim),
        "bn_u": _init_bn(ks[1], global_dim),
        "convnn": _init_conv_mlp(ks[2], input_dim, big_dim, big_dim),
        "convnn2": _init_conv_mlp(ks[3], big_dim + input_dim,
                                  big_dim * 2, big_dim * 2),
        "convnn3": _init_conv_mlp(ks[4], big_dim * 2 + input_dim,
                                  big_dim * 4, big_dim * 4),
        "outnn": _init_out_mlp(ks[5], global_dim, big_dim * 4 + input_dim,
                               bigger_dim, output_dim),
    }


# ---------------------------------------------------------------------------
# Model forward
# ---------------------------------------------------------------------------

def forward(params, x, batch, u, k=16, big_dim=32, output_dim=1,
            nodes_per_graph=None):
    num_graphs = u.shape[0]

    # Eval-mode BatchNorm1d on node / global inputs: tiny elementwise affine,
    # left to XLA (a dedicated pallas_call for <1 KB would be pure overhead).
    sx, tx = params["bn_x"]
    su, tu = params["bn_u"]
    x1 = x * sx + tx
    u1 = u * su + tu

    # conv1 consumes RAW x (matches the PyTorch forward); BN(x) only in concats
    x2 = dynamic_edge_conv(x, batch, params["convnn"], k, big_dim,
                           num_graphs, nodes_per_graph)
    xc = jnp.concatenate([x1, x2], axis=-1)                        # (N, 35)
    x2 = dynamic_edge_conv(xc, batch, params["convnn2"], k, big_dim * 2,
                           num_graphs, nodes_per_graph)
    xc = jnp.concatenate([x1, x2], axis=-1)                        # (N, 67)
    x2 = dynamic_edge_conv(xc, batch, params["convnn3"], k, big_dim * 4,
                           num_graphs, nodes_per_graph)
    xc = jnp.concatenate([x1, x2], axis=-1)                        # (N, 131)

    # scatter_mean(xc, batch) as a normalized (N, B) segment matrix, tiled over
    # node chunks and fused with the 3-layer out MLP in one Pallas kernel.
    onehot = (batch[:, None]
              == jnp.arange(num_graphs, dtype=batch.dtype)[None, :]
              ).astype(jnp.float32)
    segT = onehot / jnp.maximum(onehot.sum(axis=0, keepdims=True), 1.0)
    return out_mlp(xc, segT, u1, params["outnn"], output_dim)      # (B, 1)


# ---------------------------------------------------------------------------
# Main
# ---------------------------------------------------------------------------

if __name__ == "__main__":
    key = jax.random.PRNGKey(0)
    k_x, k_u, k_p = jax.random.split(key, 3)

    num_graphs = 2
    nodes_per_graph = 24
    knn_k = 16
    input_dim, global_dim = 3, 2
    n = num_graphs * nodes_per_graph

    x = jax.random.normal(k_x, (n, input_dim), jnp.float32)            # nodes
    u = jax.random.normal(k_u, (num_graphs, global_dim), jnp.float32)  # globals
    batch = jnp.repeat(jnp.arange(num_graphs, dtype=jnp.int32),
                       nodes_per_graph)

    params = init_params(k_p, input_dim=input_dim, big_dim=32, bigger_dim=256,
                         global_dim=global_dim, output_dim=1)

    fwd = jax.jit(functools.partial(forward, k=knn_k, big_dim=32, output_dim=1,
                                    nodes_per_graph=nodes_per_graph))
    out = jax.block_until_ready(fwd(params, x, batch, u))
    assert out.shape == (num_graphs, 1) and out.dtype == jnp.float32
    print("KERNEL_OK")
</pallas_src>

<mosaic_0001>
module attributes {stable_mosaic.version = 11 : i64} {
  func.func @_graph_scores_kernel(%arg0: i32, %arg1: memref<24x3xf32, #tpu.memory_space<vmem>>, %arg2: memref<1x1x24xf32, #tpu.memory_space<vmem>>, %arg3: memref<1x24x24xf32, #tpu.memory_space<vmem>>) attributes {dimension_semantics = [#tpu.dimension_semantics<parallel>], iteration_bounds = array<i64: 2>, scalar_prefetch = 0 : i64, scratch_operands = 0 : i64, tpu.core_type = #tpu.core_type<tc>, window_params = [{transform_indices = @transform_0, window_bounds = array<i64: 24, 3>}, {transform_indices = @transform_1, window_bounds = array<i64: 1, 1, 24>}, {transform_indices = @transform_2, window_bounds = array<i64: 1, 24, 24>}]} {
    %c0 = arith.constant 0 : index
    %c0_0 = arith.constant 0 : index
    %0 = vector.load %arg1[%c0, %c0_0] : memref<24x3xf32, #tpu.memory_space<vmem>>, vector<24x3xf32>
    %1 = arith.truncf %0 : vector<24x3xf32> to vector<24x3xbf16>
    %cst = arith.constant dense<0.000000e+00> : vector<24x24xf32>
    %2 = tpu.matmul %1, %1, %cst {dimension_numbers = #tpu.dot_dimension_numbers<[1], [1], [0], [0], [0, 0, 1, 0], [], []>} : vector<24x3xbf16>, vector<24x3xbf16>, vector<24x24xf32> -> vector<24x24xf32>
    %c0_1 = arith.constant 0 : index
    %c0_2 = arith.constant 0 : index
    %c0_3 = arith.constant 0 : index
    %3 = vector.load %arg2[%c0_1, %c0_2, %c0_3] : memref<1x1x24xf32, #tpu.memory_space<vmem>>, vector<1x1x24xf32>
    %4 = vector.shape_cast %2 : vector<24x24xf32> to vector<1x24x24xf32>
    %cst_4 = arith.constant 2.000000e+00 : f32
    %5 = vector.broadcast %cst_4 : f32 to vector<1x24x24xf32>
    %6 = arith.mulf %5, %4 : vector<1x24x24xf32>
    %7 = vector.broadcast %3 : vector<1x1x24xf32> to vector<1x24x24xf32>
    %8 = arith.subf %7, %6 : vector<1x24x24xf32>
    %c0_5 = arith.constant 0 : index
    %c0_6 = arith.constant 0 : index
    %c0_7 = arith.constant 0 : index
    %9 = vector.load %arg3[%c0_5, %c0_6, %c0_7] : memref<1x24x24xf32, #tpu.memory_space<vmem>>, vector<1x24x24xf32>
    tpu.vector_store %arg3[%c0_5, %c0_6, %c0_7], %8 {strides = array<i32>} : memref<1x24x24xf32, #tpu.memory_space<vmem>>, vector<1x24x24xf32>,
    return
  }
  func.func @transform_0(%arg0: i32) -> (i32, i32) {
    %c0_i32 = arith.constant 0 : i32
    %c0_i32_0 = arith.constant 0 : i32
    return %arg0, %c0_i32 : i32, i32
  }
  func.func @transform_1(%arg0: i32) -> (i32, i32, i32) {
    %c0_i32 = arith.constant 0 : i32
    %c0_i32_0 = arith.constant 0 : i32
    %c0_i32_1 = arith.constant 0 : i32
    return %arg0, %c0_i32, %c0_i32_0 : i32, i32, i32
  }
  func.func @transform_2(%arg0: i32) -> (i32, i32, i32) {
    %c0_i32 = arith.constant 0 : i32
    %c0_i32_0 = arith.constant 0 : i32
    %c0_i32_1 = arith.constant 0 : i32
    return %arg0, %c0_i32, %c0_i32_0 : i32, i32, i32
  }
}

module attributes {stable_mosaic.version = 11 : i64} {
  func.func @_project_kernel(%arg0: i32, %arg1: memref<24x3xf32, #tpu.memory_space<vmem>>, %arg2: memref<3x128xbf16, #tpu.memory_space<vmem>>, %arg3: memref<3x128xbf16, #tpu.memory_space<vmem>>, %arg4: memref<1x128xf32, #tpu.memory_space<vmem>>, %arg5: memref<24x128xf32, #tpu.memory_space<vmem>>, %arg6: memref<24x128xbf16, #tpu.memory_space<vmem>>) attributes {dimension_semantics = [#tpu.dimension_semantics<parallel>], iteration_bounds = array<i64: 2>, scalar_prefetch = 0 : i64, scratch_operands = 0 : i64, tpu.core_type = #tpu.core_type<tc>, window_params = [{transform_indices = @transform_0, window_bounds = array<i64: 24, 3>}, {pipeline_mode = #tpu.pipeline_mode<synchronous>, transform_indices = @transform_1, window_bounds = array<i64: 3, 128>}, {pipeline_mode = #tpu.pipeline_mode<synchronous>, transform_indices = @transform_2, window_bounds = array<i64: 3, 128>}, {pipeline_mode = #tpu.pipeline_mode<synchronous>, transform_indices = @transform_3, window_bounds = array<i64: 1, 128>}, {transform_indices = @transform_4, window_bounds = array<i64: 24, 128>}, {transform_indices = @transform_5, window_bounds = array<i64: 24, 128>}]} {
    %c0 = arith.constant 0 : index
    %c0_0 = arith.constant 0 : index
    %0 = vector.load %arg1[%c0, %c0_0] : memref<24x3xf32, #tpu.memory_space<vmem>>, vector<24x3xf32>
    %1 = arith.truncf %0 : vector<24x3xf32> to vector<24x3xbf16>
    %c0_1 = arith.constant 0 : index
    %c0_2 = arith.constant 0 : index
    %2 = vector.load %arg2[%c0_1, %c0_2] : memref<3x128xbf16, #tpu.memory_space<vmem>>, vector<3x128xbf16>
    %cst = arith.constant dense<0.000000e+00> : vector<24x128xf32>
    %3 = tpu.matmul %1, %2, %cst {dimension_numbers = #tpu.dot_dimension_numbers<[1], [0], [0], [1], [0, 0, 1, 1], [], []>} : vector<24x3xbf16>, vector<3x128xbf16>, vector<24x128xf32> -> vector<24x128xf32>
    %c0_3 = arith.constant 0 : index
    %c0_4 = arith.constant 0 : index
    %4 = vector.load %arg4[%c0_3, %c0_4] : memref<1x128xf32, #tpu.memory_space<vmem>>, vector<1x128xf32>
    %5 = vector.broadcast %4 : vector<1x128xf32> to vector<24x128xf32>
    %6 = arith.addf %3, %5 : vector<24x128xf32>
    %c0_5 = arith.constant 0 : index
    %c0_6 = arith.constant 0 : index
    %7 = vector.load %arg5[%c0_5, %c0_6] : memref<24x128xf32, #tpu.memory_space<vmem>>, vector<24x128xf32>
    tpu.vector_store %arg5[%c0_5, %c0_6], %6 {strides = array<i32>} : memref<24x128xf32, #tpu.memory_space<vmem>>, vector<24x128xf32>,
    %c0_7 = arith.constant 0 : index
    %c0_8 = arith.constant 0 : index
    %8 = vector.load %arg3[%c0_7, %c0_8] : memref<3x128xbf16, #tpu.memory_space<vmem>>, vector<3x128xbf16>
    %cst_9 = arith.constant dense<0.000000e+00> : vector<24x128xf32>
    %9 = tpu.matmul %1, %8, %cst_9 {dimension_numbers = #tpu.dot_dimension_numbers<[1], [0], [0], [1], [0, 0, 1, 1], [], []>} : vector<24x3xbf16>, vector<3x128xbf16>, vector<24x128xf32> -> vector<24x128xf32>
    %10 = arith.truncf %9 : vector<24x128xf32> to vector<24x128xbf16>
    %c0_10 = arith.constant 0 : index
    %c0_11 = arith.constant 0 : index
    %11 = vector.load %arg6[%c0_10, %c0_11] : memref<24x128xbf16, #tpu.memory_space<vmem>>, vector<24x128xbf16>
    tpu.vector_store %arg6[%c0_10, %c0_11], %10 {strides = array<i32>} : memref<24x128xbf16, #tpu.memory_space<vmem>>, vector<24x128xbf16>,
    return
  }
  func.func @transform_0(%arg0: i32) -> (i32, i32) {
    %c0_i32 = arith.constant 0 : i32
    %c0_i32_0 = arith.constant 0 : i32
    return %arg0, %c0_i32 : i32, i32
  }
  func.func @transform_1(%arg0: i32) -> (i32, i32) {
    %c0_i32 = arith.constant 0 : i32
    %c0_i32_0 = arith.constant 0 : i32
    %c0_i32_1 = arith.constant 0 : i32
    return %c0_i32, %c0_i32_0 : i32, i32
  }
  func.func @transform_2(%arg0: i32) -> (i32, i32) {
    %c0_i32 = arith.constant 0 : i32
    %c0_i32_0 = arith.constant 0 : i32
    %c0_i32_1 = arith.constant 0 : i32
    return %c0_i32, %c0_i32_0 : i32, i32
  }
  func.func @transform_3(%arg0: i32) -> (i32, i32) {
    %c0_i32 = arith.constant 0 : i32
    %c0_i32_0 = arith.constant 0 : i32
    %c0_i32_1 = arith.constant 0 : i32
    return %c0_i32, %c0_i32_0 : i32, i32
  }
  func.func @transform_4(%arg0: i32) -> (i32, i32) {
    %c0_i32 = arith.constant 0 : i32
    %c0_i32_0 = arith.constant 0 : i32
    return %arg0, %c0_i32 : i32, i32
  }
  func.func @transform_5(%arg0: i32) -> (i32, i32) {
    %c0_i32 = arith.constant 0 : i32
    %c0_i32_0 = arith.constant 0 : i32
    return %arg0, %c0_i32 : i32, i32
  }
}

module attributes {stable_mosaic.version = 11 : i64} {
  func.func @_edge_gather_kernel(%arg0: i32, %arg1: i32, %arg2: memref<128x1xi32, #tpu.memory_space<vmem>>, %arg3: memref<8x128xf32, #tpu.memory_space<vmem>>, %arg4: memref<24x128xbf16, #tpu.memory_space<vmem>>, %arg5: memref<128x128xbf16, #tpu.memory_space<vmem>>, %arg6: memref<1x128xf32, #tpu.memory_space<vmem>>, %arg7: memref<128x128xbf16, #tpu.memory_space<vmem>>, %arg8: memref<1x128xf32, #tpu.memory_space<vmem>>, %arg9: memref<8x128xf32, #tpu.memory_space<vmem>>) attributes {dimension_semantics = [#tpu.dimension_semantics<parallel>, #tpu.dimension_semantics<parallel>], iteration_bounds = array<i64: 2, 3>, scalar_prefetch = 0 : i64, scratch_operands = 0 : i64, tpu.core_type = #tpu.core_type<tc>, window_params = [{transform_indices = @transform_0, window_bounds = array<i64: 128, 1>}, {transform_indices = @transform_1, window_bounds = array<i64: 8, 128>}, {transform_indices = @transform_2, window_bounds = array<i64: 24, 128>}, {pipeline_mode = #tpu.pipeline_mode<synchronous>, transform_indices = @transform_3, window_bounds = array<i64: 128, 128>}, {pipeline_mode = #tpu.pipeline_mode<synchronous>, transform_indices = @transform_4, window_bounds = array<i64: 1, 128>}, {pipeline_mode = #tpu.pipeline_mode<synchronous>, transform_indices = @transform_5, window_bounds = array<i64: 128, 128>}, {pipeline_mode = #tpu.pipeline_mode<synchronous>, transform_indices = @transform_6, window_bounds = array<i64: 1, 128>}, {transform_indices = @transform_7, window_bounds = array<i64: 8, 128>}]} {
    %0 = tpu.iota {dimensions = array<i32: 1>} : vector<128x24xi32>
    %c0 = arith.constant 0 : index
    %c0_0 = arith.constant 0 : index
    %1 = vector.load %arg2[%c0, %c0_0] : memref<128x1xi32, #tpu.memory_space<vmem>>, vector<128x1xi32>
    %2 = vector.broadcast %1 : vector<128x1xi32> to vector<128x24xi32>
    %3 = arith.cmpi eq, %2, %0 : vector<128x24xi32>
    %4 = arith.extui %3 : vector<128x24xi1> to vector<128x24xi32>
    %5 = arith.sitofp %4 : vector<128x24xi32> to vector<128x24xf32>
    %6 = arith.truncf %5 : vector<128x24xf32> to vector<128x24xbf16>
    %c0_1 = arith.constant 0 : index
    %c0_2 = arith.constant 0 : index
    %7 = vector.load %arg4[%c0_1, %c0_2] : memref<24x128xbf16, #tpu.memory_space<vmem>>, vector<24x128xbf16>
    %cst = arith.constant dense<0.000000e+00> : vector<128x128xf32>
    %8 = tpu.matmul %6, %7, %cst {dimension_numbers = #tpu.dot_dimension_numbers<[1], [0], [0], [1], [0, 0, 1, 1], [], []>} : vector<128x24xbf16>, vector<24x128xbf16>, vector<128x128xf32> -> vector<128x128xf32>
    %9 = vector.shape_cast %8 : vector<128x128xf32> to vector<8x16x128xf32>
    %c0_3 = arith.constant 0 : index
    %c0_4 = arith.constant 0 : index
    %10 = vector.load %arg3[%c0_3, %c0_4] : memref<8x128xf32, #tpu.memory_space<vmem>>, vector<8x128xf32>
    %11 = vector.shape_cast %10 : vector<8x128xf32> to vector<8x1x128xf32>
    %12 = vector.broadcast %11 : vector<8x1x128xf32> to vector<8x16x128xf32>
    %13 = arith.addf %9, %12 : vector<8x16x128xf32>
    %cst_5 = arith.constant 0.000000e+00 : f32
    %14 = vector.broadcast %cst_5 : f32 to vector<8x16x128xf32>
    %15 = arith.maximumf %13, %14 : vector<8x16x128xf32>
    %16 = vector.shape_cast %15 : vector<8x16x128xf32> to vector<128x128xf32>
    %17 = arith.truncf %16 : vector<128x128xf32> to vector<128x128xbf16>
    %c0_6 = arith.constant 0 : index
    %c0_7 = arith.constant 0 : index
    %18 = vector.load %arg5[%c0_6, %c0_7] : memref<128x128xbf16, #tpu.memory_space<vmem>>, vector<128x128xbf16>
    %cst_8 = arith.constant dense<0.000000e+00> : vector<128x128xf32>
    %19 = tpu.matmul %17, %18, %cst_8 {dimension_numbers = #tpu.dot_dimension_numbers<[1], [0], [0], [1], [0, 0, 1, 1], [], []>} : vector<128x128xbf16>, vector<128x128xbf16>, vector<128x128xf32> -> vector<128x128xf32>
    %c0_9 = arith.constant 0 : index
    %c0_10 = arith.constant 0 : index
    %20 = vector.load %arg6[%c0_9, %c0_10] : memref<1x128xf32, #tpu.memory_space<vmem>>, vector<1x128xf32>
    %21 = vector.broadcast %20 : vector<1x128xf32> to vector<128x128xf32>
    %22 = arith.addf %19, %21 : vector<128x128xf32>
    %cst_11 = arith.constant 0.000000e+00 : f32
    %23 = vector.broadcast %cst_11 : f32 to vector<128x128xf32>
    %24 = arith.maximumf %22, %23 : vector<128x128xf32>
    %25 = vector.shape_cast %24 : vector<128x128xf32> to vector<8x16x128xf32>
    %cst_12 = arith.constant dense<0.000000e+00> : vector<8x128xf32>
    %26 = vector.multi_reduction <add>, %25, %cst_12 [1] : vector<8x16x128xf32> to vector<8x128xf32>
    %cst_13 = arith.constant 1.600000e+01 : f32
    %27 = vector.broadcast %cst_13 : f32 to vector<8x128xf32>
    %28 = arith.divf %26, %27 : vector<8x128xf32>
    %29 = arith.truncf %28 : vector<8x128xf32> to vector<8x128xbf16>
    %c0_14 = arith.constant 0 : index
    %c0_15 = arith.constant 0 : index
    %30 = vector.load %arg7[%c0_14, %c0_15] : memref<128x128xbf16, #tpu.memory_space<vmem>>, vector<128x128xbf16>
    %cst_16 = arith.constant dense<0.000000e+00> : vector<8x128xf32>
    %31 = tpu.matmul %29, %30, %cst_16 {dimension_numbers = #tpu.dot_dimension_numbers<[1], [0], [0], [1], [0, 0, 1, 1], [], []>} : vector<8x128xbf16>, vector<128x128xbf16>, vector<8x128xf32> -> vector<8x128xf32>
    %c0_17 = arith.constant 0 : index
    %c0_18 = arith.constant 0 : index
    %32 = vector.load %arg8[%c0_17, %c0_18] : memref<1x128xf32, #tpu.memory_space<vmem>>, vector<1x128xf32>
    %33 = vector.broadcast %32 : vector<1x128xf32> to vector<8x128xf32>
    %34 = arith.addf %31, %33 : vector<8x128xf32>
    %c0_19 = arith.constant 0 : index
    %c0_20 = arith.constant 0 : index
    %35 = vector.load %arg9[%c0_19, %c0_20] : memref<8x128xf32, #tpu.memory_space<vmem>>, vector<8x128xf32>
    tpu.vector_store %arg9[%c0_19, %c0_20], %34 {strides = array<i32>} : memref<8x128xf32, #tpu.memory_space<vmem>>, vector<8x128xf32>,
    return
  }
  func.func @transform_0(%arg0: i32, %arg1: i32) -> (i32, i32) {
    %c3_i32 = arith.constant 3 : i32
    %0 = arith.muli %arg0, %c3_i32 : i32
    %1 = arith.addi %0, %arg1 : i32
    %c0_i32 = arith.constant 0 : i32
    %c0_i32_0 = arith.constant 0 : i32
    return %1, %c0_i32 : i32, i32
  }
  func.func @transform_1(%arg0: i32, %arg1: i32) -> (i32, i32) {
    %c3_i32 = arith.constant 3 : i32
    %0 = arith.muli %arg0, %c3_i32 : i32
    %1 = arith.addi %0, %arg1 : i32
    %c0_i32 = arith.constant 0 : i32
    %c0_i32_0 = arith.constant 0 : i32
    return %1, %c0_i32 : i32, i32
  }
  func.func @transform_2(%arg0: i32, %arg1: i32) -> (i32, i32) {
    %c0_i32 = arith.constant 0 : i32
    %c0_i32_0 = arith.constant 0 : i32
    return %arg0, %c0_i32 : i32, i32
  }
  func.func @transform_3(%arg0: i32, %arg1: i32) -> (i32, i32) {
    %c0_i32 = arith.constant 0 : i32
    %c0_i32_0 = arith.constant 0 : i32
    %c0_i32_1 = arith.constant 0 : i32
    return %c0_i32, %c0_i32_0 : i32, i32
  }
  func.func @transform_4(%arg0: i32, %arg1: i32) -> (i32, i32) {
    %c0_i32 = arith.constant 0 : i32
    %c0_i32_0 = arith.constant 0 : i32
    %c0_i32_1 = arith.constant 0 : i32
    return %c0_i32, %c0_i32_0 : i32, i32
  }
  func.func @transform_5(%arg0: i32, %arg1: i32) -> (i32, i32) {
    %c0_i32 = arith.constant 0 : i32
    %c0_i32_0 = arith.constant 0 : i32
    %c0_i32_1 = arith.constant 0 : i32
    return %c0_i32, %c0_i32_0 : i32, i32
  }
  func.func @transform_6(%arg0: i32, %arg1: i32) -> (i32, i32) {
    %c0_i32 = arith.constant 0 : i32
    %c0_i32_0 = arith.constant 0 : i32
    %c0_i32_1 = arith.constant 0 : i32
    return %c0_i32, %c0_i32_0 : i32, i32
  }
  func.func @transform_7(%arg0: i32, %arg1: i32) -> (i32, i32) {
    %c3_i32 = arith.constant 3 : i32
    %0 = arith.muli %arg0, %c3_i32 : i32
    %1 = arith.addi %0, %arg1 : i32
    %c0_i32 = arith.constant 0 : i32
    %c0_i32_0 = arith.constant 0 : i32
    return %1, %c0_i32 : i32, i32
  }
}

module attributes {stable_mosaic.version = 11 : i64} {
  func.func @_graph_scores_kernel(%arg0: i32, %arg1: memref<24x35xf32, #tpu.memory_space<vmem>>, %arg2: memref<1x1x24xf32, #tpu.memory_space<vmem>>, %arg3: memref<1x24x24xf32, #tpu.memory_space<vmem>>) attributes {dimension_semantics = [#tpu.dimension_semantics<parallel>], iteration_bounds = array<i64: 2>, scalar_prefetch = 0 : i64, scratch_operands = 0 : i64, tpu.core_type = #tpu.core_type<tc>, window_params = [{transform_indices = @transform_0, window_bounds = array<i64: 24, 35>}, {transform_indices = @transform_1, window_bounds = array<i64: 1, 1, 24>}, {transform_indices = @transform_2, window_bounds = array<i64: 1, 24, 24>}]} {
    %c0 = arith.constant 0 : index
    %c0_0 = arith.constant 0 : index
    %0 = vector.load %arg1[%c0, %c0_0] : memref<24x35xf32, #tpu.memory_space<vmem>>, vector<24x35xf32>
    %1 = arith.truncf %0 : vector<24x35xf32> to vector<24x35xbf16>
    %cst = arith.constant dense<0.000000e+00> : vector<24x24xf32>
    %2 = tpu.matmul %1, %1, %cst {dimension_numbers = #tpu.dot_dimension_numbers<[1], [1], [0], [0], [0, 0, 1, 0], [], []>} : vector<24x35xbf16>, vector<24x35xbf16>, vector<24x24xf32> -> vector<24x24xf32>
    %c0_1 = arith.constant 0 : index
    %c0_2 = arith.constant 0 : index
    %c0_3 = arith.constant 0 : index
    %3 = vector.load %arg2[%c0_1, %c0_2, %c0_3] : memref<1x1x24xf32, #tpu.memory_space<vmem>>, vector<1x1x24xf32>
    %4 = vector.shape_cast %2 : vector<24x24xf32> to vector<1x24x24xf32>
    %cst_4 = arith.constant 2.000000e+00 : f32
    %5 = vector.broadcast %cst_4 : f32 to vector<1x24x24xf32>
    %6 = arith.mulf %5, %4 : vector<1x24x24xf32>
    %7 = vector.broadcast %3 : vector<1x1x24xf32> to vector<1x24x24xf32>
    %8 = arith.subf %7, %6 : vector<1x24x24xf32>
    %c0_5 = arith.constant 0 : index
    %c0_6 = arith.constant 0 : index
    %c0_7 = arith.constant 0 : index
    %9 = vector.load %arg3[%c0_5, %c0_6, %c0_7] : memref<1x24x24xf32, #tpu.memory_space<vmem>>, vector<1x24x24xf32>
    tpu.vector_store %arg3[%c0_5, %c0_6, %c0_7], %8 {strides = array<i32>} : memref<1x24x24xf32, #tpu.memory_space<vmem>>, vector<1x24x24xf32>,
    return
  }
  func.func @transform_0(%arg0: i32) -> (i32, i32) {
    %c0_i32 = arith.constant 0 : i32
    %c0_i32_0 = arith.constant 0 : i32
    return %arg0, %c0_i32 : i32, i32
  }
  func.func @transform_1(%arg0: i32) -> (i32, i32, i32) {
    %c0_i32 = arith.constant 0 : i32
    %c0_i32_0 = arith.constant 0 : i32
    %c0_i32_1 = arith.constant 0 : i32
    return %arg0, %c0_i32, %c0_i32_0 : i32, i32, i32
  }
  func.func @transform_2(%arg0: i32) -> (i32, i32, i32) {
    %c0_i32 = arith.constant 0 : i32
    %c0_i32_0 = arith.constant 0 : i32
    %c0_i32_1 = arith.constant 0 : i32
    return %arg0, %c0_i32, %c0_i32_0 : i32, i32, i32
  }
}

module attributes {stable_mosaic.version = 11 : i64} {
  func.func @_project_kernel(%arg0: i32, %arg1: memref<24x35xf32, #tpu.memory_space<vmem>>, %arg2: memref<35x128xbf16, #tpu.memory_space<vmem>>, %arg3: memref<35x128xbf16, #tpu.memory_space<vmem>>, %arg4: memref<1x128xf32, #tpu.memory_space<vmem>>, %arg5: memref<24x128xf32, #tpu.memory_space<vmem>>, %arg6: memref<24x128xbf16, #tpu.memory_space<vmem>>) attributes {dimension_semantics = [#tpu.dimension_semantics<parallel>], iteration_bounds = array<i64: 2>, scalar_prefetch = 0 : i64, scratch_operands = 0 : i64, tpu.core_type = #tpu.core_type<tc>, window_params = [{transform_indices = @transform_0, window_bounds = array<i64: 24, 35>}, {pipeline_mode = #tpu.pipeline_mode<synchronous>, transform_indices = @transform_1, window_bounds = array<i64: 35, 128>}, {pipeline_mode = #tpu.pipeline_mode<synchronous>, transform_indices = @transform_2, window_bounds = array<i64: 35, 128>}, {pipeline_mode = #tpu.pipeline_mode<synchronous>, transform_indices = @transform_3, window_bounds = array<i64: 1, 128>}, {transform_indices = @transform_4, window_bounds = array<i64: 24, 128>}, {transform_indices = @transform_5, window_bounds = array<i64: 24, 128>}]} {
    %c0 = arith.constant 0 : index
    %c0_0 = arith.constant 0 : index
    %0 = vector.load %arg1[%c0, %c0_0] : memref<24x35xf32, #tpu.memory_space<vmem>>, vector<24x35xf32>
    %1 = arith.truncf %0 : vector<24x35xf32> to vector<24x35xbf16>
    %c0_1 = arith.constant 0 : index
    %c0_2 = arith.constant 0 : index
    %2 = vector.load %arg2[%c0_1, %c0_2] : memref<35x128xbf16, #tpu.memory_space<vmem>>, vector<35x128xbf16>
    %cst = arith.constant dense<0.000000e+00> : vector<24x128xf32>
    %3 = tpu.matmul %1, %2, %cst {dimension_numbers = #tpu.dot_dimension_numbers<[1], [0], [0], [1], [0, 0, 1, 1], [], []>} : vector<24x35xbf16>, vector<35x128xbf16>, vector<24x128xf32> -> vector<24x128xf32>
    %c0_3 = arith.constant 0 : index
    %c0_4 = arith.constant 0 : index
    %4 = vector.load %arg4[%c0_3, %c0_4] : memref<1x128xf32, #tpu.memory_space<vmem>>, vector<1x128xf32>
    %5 = vector.broadcast %4 : vector<1x128xf32> to vector<24x128xf32>
    %6 = arith.addf %3, %5 : vector<24x128xf32>
    %c0_5 = arith.constant 0 : index
    %c0_6 = arith.constant 0 : index
    %7 = vector.load %arg5[%c0_5, %c0_6] : memref<24x128xf32, #tpu.memory_space<vmem>>, vector<24x128xf32>
    tpu.vector_store %arg5[%c0_5, %c0_6], %6 {strides = array<i32>} : memref<24x128xf32, #tpu.memory_space<vmem>>, vector<24x128xf32>,
    %c0_7 = arith.constant 0 : index
    %c0_8 = arith.constant 0 : index
    %8 = vector.load %arg3[%c0_7, %c0_8] : memref<35x128xbf16, #tpu.memory_space<vmem>>, vector<35x128xbf16>
    %cst_9 = arith.constant dense<0.000000e+00> : vector<24x128xf32>
    %9 = tpu.matmul %1, %8, %cst_9 {dimension_numbers = #tpu.dot_dimension_numbers<[1], [0], [0], [1], [0, 0, 1, 1], [], []>} : vector<24x35xbf16>, vector<35x128xbf16>, vector<24x128xf32> -> vector<24x128xf32>
    %10 = arith.truncf %9 : vector<24x128xf32> to vector<24x128xbf16>
    %c0_10 = arith.constant 0 : index
    %c0_11 = arith.constant 0 : index
    %11 = vector.load %arg6[%c0_10, %c0_11] : memref<24x128xbf16, #tpu.memory_space<vmem>>, vector<24x128xbf16>
    tpu.vector_store %arg6[%c0_10, %c0_11], %10 {strides = array<i32>} : memref<24x128xbf16, #tpu.memory_space<vmem>>, vector<24x128xbf16>,
    return
  }
  func.func @transform_0(%arg0: i32) -> (i32, i32) {
    %c0_i32 = arith.constant 0 : i32
    %c0_i32_0 = arith.constant 0 : i32
    return %arg0, %c0_i32 : i32, i32
  }
  func.func @transform_1(%arg0: i32) -> (i32, i32) {
    %c0_i32 = arith.constant 0 : i32
    %c0_i32_0 = arith.constant 0 : i32
    %c0_i32_1 = arith.constant 0 : i32
    return %c0_i32, %c0_i32_0 : i32, i32
  }
  func.func @transform_2(%arg0: i32) -> (i32, i32) {
    %c0_i32 = arith.constant 0 : i32
    %c0_i32_0 = arith.constant 0 : i32
    %c0_i32_1 = arith.constant 0 : i32
    return %c0_i32, %c0_i32_0 : i32, i32
  }
  func.func @transform_3(%arg0: i32) -> (i32, i32) {
    %c0_i32 = arith.constant 0 : i32
    %c0_i32_0 = arith.constant 0 : i32
    %c0_i32_1 = arith.constant 0 : i32
    return %c0_i32, %c0_i32_0 : i32, i32
  }
  func.func @transform_4(%arg0: i32) -> (i32, i32) {
    %c0_i32 = arith.constant 0 : i32
    %c0_i32_0 = arith.constant 0 : i32
    return %arg0, %c0_i32 : i32, i32
  }
  func.func @transform_5(%arg0: i32) -> (i32, i32) {
    %c0_i32 = arith.constant 0 : i32
    %c0_i32_0 = arith.constant 0 : i32
    return %arg0, %c0_i32 : i32, i32
  }
}

module attributes {stable_mosaic.version = 11 : i64} {
  func.func @_graph_scores_kernel(%arg0: i32, %arg1: memref<24x67xf32, #tpu.memory_space<vmem>>, %arg2: memref<1x1x24xf32, #tpu.memory_space<vmem>>, %arg3: memref<1x24x24xf32, #tpu.memory_space<vmem>>) attributes {dimension_semantics = [#tpu.dimension_semantics<parallel>], iteration_bounds = array<i64: 2>, scalar_prefetch = 0 : i64, scratch_operands = 0 : i64, tpu.core_type = #tpu.core_type<tc>, window_params = [{transform_indices = @transform_0, window_bounds = array<i64: 24, 67>}, {transform_indices = @transform_1, window_bounds = array<i64: 1, 1, 24>}, {transform_indices = @transform_2, window_bounds = array<i64: 1, 24, 24>}]} {
    %c0 = arith.constant 0 : index
    %c0_0 = arith.constant 0 : index
    %0 = vector.load %arg1[%c0, %c0_0] : memref<24x67xf32, #tpu.memory_space<vmem>>, vector<24x67xf32>
    %1 = arith.truncf %0 : vector<24x67xf32> to vector<24x67xbf16>
    %cst = arith.constant dense<0.000000e+00> : vector<24x24xf32>
    %2 = tpu.matmul %1, %1, %cst {dimension_numbers = #tpu.dot_dimension_numbers<[1], [1], [0], [0], [0, 0, 1, 0], [], []>} : vector<24x67xbf16>, vector<24x67xbf16>, vector<24x24xf32> -> vector<24x24xf32>
    %c0_1 = arith.constant 0 : index
    %c0_2 = arith.constant 0 : index
    %c0_3 = arith.constant 0 : index
    %3 = vector.load %arg2[%c0_1, %c0_2, %c0_3] : memref<1x1x24xf32, #tpu.memory_space<vmem>>, vector<1x1x24xf32>
    %4 = vector.shape_cast %2 : vector<24x24xf32> to vector<1x24x24xf32>
    %cst_4 = arith.constant 2.000000e+00 : f32
    %5 = vector.broadcast %cst_4 : f32 to vector<1x24x24xf32>
    %6 = arith.mulf %5, %4 : vector<1x24x24xf32>
    %7 = vector.broadcast %3 : vector<1x1x24xf32> to vector<1x24x24xf32>
    %8 = arith.subf %7, %6 : vector<1x24x24xf32>
    %c0_5 = arith.constant 0 : index
    %c0_6 = arith.constant 0 : index
    %c0_7 = arith.constant 0 : index
    %9 = vector.load %arg3[%c0_5, %c0_6, %c0_7] : memref<1x24x24xf32, #tpu.memory_space<vmem>>, vector<1x24x24xf32>
    tpu.vector_store %arg3[%c0_5, %c0_6, %c0_7], %8 {strides = array<i32>} : memref<1x24x24xf32, #tpu.memory_space<vmem>>, vector<1x24x24xf32>,
    return
  }
  func.func @transform_0(%arg0: i32) -> (i32, i32) {
    %c0_i32 = arith.constant 0 : i32
    %c0_i32_0 = arith.constant 0 : i32
    return %arg0, %c0_i32 : i32, i32
  }
  func.func @transform_1(%arg0: i32) -> (i32, i32, i32) {
    %c0_i32 = arith.constant 0 : i32
    %c0_i32_0 = arith.constant 0 : i32
    %c0_i32_1 = arith.constant 0 : i32
    return %arg0, %c0_i32, %c0_i32_0 : i32, i32, i32
  }
  func.func @transform_2(%arg0: i32) -> (i32, i32, i32) {
    %c0_i32 = arith.constant 0 : i32
    %c0_i32_0 = arith.constant 0 : i32
    %c0_i32_1 = arith.constant 0 : i32
    return %arg0, %c0_i32, %c0_i32_0 : i32, i32, i32
  }
}

module attributes {stable_mosaic.version = 11 : i64} {
  func.func @_project_kernel(%arg0: i32, %arg1: memref<24x67xf32, #tpu.memory_space<vmem>>, %arg2: memref<67x128xbf16, #tpu.memory_space<vmem>>, %arg3: memref<67x128xbf16, #tpu.memory_space<vmem>>, %arg4: memref<1x128xf32, #tpu.memory_space<vmem>>, %arg5: memref<24x128xf32, #tpu.memory_space<vmem>>, %arg6: memref<24x128xbf16, #tpu.memory_space<vmem>>) attributes {dimension_semantics = [#tpu.dimension_semantics<parallel>], iteration_bounds = array<i64: 2>, scalar_prefetch = 0 : i64, scratch_operands = 0 : i64, tpu.core_type = #tpu.core_type<tc>, window_params = [{transform_indices = @transform_0, window_bounds = array<i64: 24, 67>}, {pipeline_mode = #tpu.pipeline_mode<synchronous>, transform_indices = @transform_1, window_bounds = array<i64: 67, 128>}, {pipeline_mode = #tpu.pipeline_mode<synchronous>, transform_indices = @transform_2, window_bounds = array<i64: 67, 128>}, {pipeline_mode = #tpu.pipeline_mode<synchronous>, transform_indices = @transform_3, window_bounds = array<i64: 1, 128>}, {transform_indices = @transform_4, window_bounds = array<i64: 24, 128>}, {transform_indices = @transform_5, window_bounds = array<i64: 24, 128>}]} {
    %c0 = arith.constant 0 : index
    %c0_0 = arith.constant 0 : index
    %0 = vector.load %arg1[%c0, %c0_0] : memref<24x67xf32, #tpu.memory_space<vmem>>, vector<24x67xf32>
    %1 = arith.truncf %0 : vector<24x67xf32> to vector<24x67xbf16>
    %c0_1 = arith.constant 0 : index
    %c0_2 = arith.constant 0 : index
    %2 = vector.load %arg2[%c0_1, %c0_2] : memref<67x128xbf16, #tpu.memory_space<vmem>>, vector<67x128xbf16>
    %cst = arith.constant dense<0.000000e+00> : vector<24x128xf32>
    %3 = tpu.matmul %1, %2, %cst {dimension_numbers = #tpu.dot_dimension_numbers<[1], [0], [0], [1], [0, 0, 1, 1], [], []>} : vector<24x67xbf16>, vector<67x128xbf16>, vector<24x128xf32> -> vector<24x128xf32>
    %c0_3 = arith.constant 0 : index
    %c0_4 = arith.constant 0 : index
    %4 = vector.load %arg4[%c0_3, %c0_4] : memref<1x128xf32, #tpu.memory_space<vmem>>, vector<1x128xf32>
    %5 = vector.broadcast %4 : vector<1x128xf32> to vector<24x128xf32>
    %6 = arith.addf %3, %5 : vector<24x128xf32>
    %c0_5 = arith.constant 0 : index
    %c0_6 = arith.constant 0 : index
    %7 = vector.load %arg5[%c0_5, %c0_6] : memref<24x128xf32, #tpu.memory_space<vmem>>, vector<24x128xf32>
    tpu.vector_store %arg5[%c0_5, %c0_6], %6 {strides = array<i32>} : memref<24x128xf32, #tpu.memory_space<vmem>>, vector<24x128xf32>,
    %c0_7 = arith.constant 0 : index
    %c0_8 = arith.constant 0 : index
    %8 = vector.load %arg3[%c0_7, %c0_8] : memref<67x128xbf16, #tpu.memory_space<vmem>>, vector<67x128xbf16>
    %cst_9 = arith.constant dense<0.000000e+00> : vector<24x128xf32>
    %9 = tpu.matmul %1, %8, %cst_9 {dimension_numbers = #tpu.dot_dimension_numbers<[1], [0], [0], [1], [0, 0, 1, 1], [], []>} : vector<24x67xbf16>, vector<67x128xbf16>, vector<24x128xf32> -> vector<24x128xf32>
    %10 = arith.truncf %9 : vector<24x128xf32> to vector<24x128xbf16>
    %c0_10 = arith.constant 0 : index
    %c0_11 = arith.constant 0 : index
    %11 = vector.load %arg6[%c0_10, %c0_11] : memref<24x128xbf16, #tpu.memory_space<vmem>>, vector<24x128xbf16>
    tpu.vector_store %arg6[%c0_10, %c0_11], %10 {strides = array<i32>} : memref<24x128xbf16, #tpu.memory_space<vmem>>, vector<24x128xbf16>,
    return
  }
  func.func @transform_0(%arg0: i32) -> (i32, i32) {
    %c0_i32 = arith.constant 0 : i32
    %c0_i32_0 = arith.constant 0 : i32
    return %arg0, %c0_i32 : i32, i32
  }
  func.func @transform_1(%arg0: i32) -> (i32, i32) {
    %c0_i32 = arith.constant 0 : i32
    %c0_i32_0 = arith.constant 0 : i32
    %c0_i32_1 = arith.constant 0 : i32
    return %c0_i32, %c0_i32_0 : i32, i32
  }
  func.func @transform_2(%arg0: i32) -> (i32, i32) {
    %c0_i32 = arith.constant 0 : i32
    %c0_i32_0 = arith.constant 0 : i32
    %c0_i32_1 = arith.constant 0 : i32
    return %c0_i32, %c0_i32_0 : i32, i32
  }
  func.func @transform_3(%arg0: i32) -> (i32, i32) {
    %c0_i32 = arith.constant 0 : i32
    %c0_i32_0 = arith.constant 0 : i32
    %c0_i32_1 = arith.constant 0 : i32
    return %c0_i32, %c0_i32_0 : i32, i32
  }
  func.func @transform_4(%arg0: i32) -> (i32, i32) {
    %c0_i32 = arith.constant 0 : i32
    %c0_i32_0 = arith.constant 0 : i32
    return %arg0, %c0_i32 : i32, i32
  }
  func.func @transform_5(%arg0: i32) -> (i32, i32) {
    %c0_i32 = arith.constant 0 : i32
    %c0_i32_0 = arith.constant 0 : i32
    return %arg0, %c0_i32 : i32, i32
  }
}

module attributes {stable_mosaic.version = 11 : i64} {
  func.func @_out_kernel(%arg0: i32, %arg1: memref<24x2xf32, #tpu.memory_space<vmem>>, %arg2: memref<24x131xf32, #tpu.memory_space<vmem>>, %arg3: memref<2x2xf32, #tpu.memory_space<vmem>>, %arg4: memref<131x256xbf16, #tpu.memory_space<vmem>>, %arg5: memref<2x256xbf16, #tpu.memory_space<vmem>>, %arg6: memref<1x256xf32, #tpu.memory_space<vmem>>, %arg7: memref<256x256xbf16, #tpu.memory_space<vmem>>, %arg8: memref<1x256xf32, #tpu.memory_space<vmem>>, %arg9: memref<256x1xbf16, #tpu.memory_space<vmem>>, %arg10: memref<1x1xf32, #tpu.memory_space<vmem>>, %arg11: memref<2x1xf32, #tpu.memory_space<vmem>>, %arg12: memref<2x131xf32, #tpu.memory_space<vmem>>) attributes {dimension_semantics = [#tpu.dimension_semantics<arbitrary>], iteration_bounds = array<i64: 2>, scalar_prefetch = 0 : i64, scratch_operands = 1 : i64, tpu.core_type = #tpu.core_type<tc>, window_params = [{transform_indices = @transform_0, window_bounds = array<i64: 24, 2>}, {transform_indices = @transform_1, window_bounds = array<i64: 24, 131>}, {pipeline_mode = #tpu.pipeline_mode<synchronous>, transform_indices = @transform_2, window_bounds = array<i64: 2, 2>}, {pipeline_mode = #tpu.pipeline_mode<synchronous>, transform_indices = @transform_3, window_bounds = array<i64: 131, 256>}, {pipeline_mode = #tpu.pipeline_mode<synchronous>, transform_indices = @transform_4, window_bounds = array<i64: 2, 256>}, {pipeline_mode = #tpu.pipeline_mode<synchronous>, transform_indices = @transform_5, window_bounds = array<i64: 1, 256>}, {pipeline_mode = #tpu.pipeline_mode<synchronous>, transform_indices = @transform_6, window_bounds = array<i64: 256, 256>}, {pipeline_mode = #tpu.pipeline_mode<synchronous>, transform_indices = @transform_7, window_bounds = array<i64: 1, 256>}, {pipeline_mode = #tpu.pipeline_mode<synchronous>, transform_indices = @transform_8, window_bounds = array<i64: 256, 1>}, {pipeline_mode = #tpu.pipeline_mode<synchronous>, transform_indices = @transform_9, window_bounds = array<i64: 1, 1>}, {pipeline_mode = #tpu.pipeline_mode<synchronous>, transform_indices = @transform_10, window_bounds = array<i64: 2, 1>}]} {
    %c0_i32 = arith.constant 0 : i32
    %0 = arith.cmpi eq, %arg0, %c0_i32 : i32
    %1 = arith.extui %0 : i1 to i32
    %c0_i32_0 = arith.constant 0 : i32
    %2 = arith.cmpi ne, %1, %c0_i32_0 : i32
    scf.if %2 {
      %cst_9 = arith.constant 0.000000e+00 : f32
      %12 = vector.broadcast %cst_9 : f32 to vector<2x131xf32>
      %c0_10 = arith.constant 0 : index
      %c0_11 = arith.constant 0 : index
      %13 = vector.load %arg12[%c0_10, %c0_11] : memref<2x131xf32, #tpu.memory_space<vmem>>, vector<2x131xf32>
      tpu.vector_store %arg12[%c0_10, %c0_11], %12 {strides = array<i32>} : memref<2x131xf32, #tpu.memory_space<vmem>>, vector<2x131xf32>,
    } else {
    }
    %c0 = arith.constant 0 : index
    %c0_1 = arith.constant 0 : index
    %3 = vector.load %arg12[%c0, %c0_1] : memref<2x131xf32, #tpu.memory_space<vmem>>, vector<2x131xf32>
    %c0_2 = arith.constant 0 : index
    %c0_3 = arith.constant 0 : index
    %4 = vector.load %arg1[%c0_2, %c0_3] : memref<24x2xf32, #tpu.memory_space<vmem>>, vector<24x2xf32>
    %c0_4 = arith.constant 0 : index
    %c0_5 = arith.constant 0 : index
    %5 = vector.load %arg2[%c0_4, %c0_5] : memref<24x131xf32, #tpu.memory_space<vmem>>, vector<24x131xf32>
    %cst = arith.constant dense<0.000000e+00> : vector<2x131xf32>
    %6 = tpu.matmul %4, %5, %cst {dimension_numbers = #tpu.dot_dimension_numbers<[0], [0], [1], [1], [0, 1, 1, 1], [], []>} : vector<24x2xf32>, vector<24x131xf32>, vector<2x131xf32> -> vector<2x131xf32>
    %7 = arith.addf %3, %6 : vector<2x131xf32>
    %c0_6 = arith.constant 0 : index
    %c0_7 = arith.constant 0 : index
    %8 = vector.load %arg12[%c0_6, %c0_7] : memref<2x131xf32, #tpu.memory_space<vmem>>, vector<2x131xf32>
    tpu.vector_store %arg12[%c0_6, %c0_7], %7 {strides = array<i32>} : memref<2x131xf32, #tpu.memory_space<vmem>>, vector<2x131xf32>,
    %c1_i32 = arith.constant 1 : i32
    %9 = arith.cmpi eq, %arg0, %c1_i32 : i32
    %10 = arith.extui %9 : i1 to i32
    %c0_i32_8 = arith.constant 0 : i32
    %11 = arith.cmpi ne, %10, %c0_i32_8 : i32
    scf.if %11 {
      %c0_9 = arith.constant 0 : index
      %c0_10 = arith.constant 0 : index
      %12 = vector.load %arg12[%c0_9, %c0_10] : memref<2x131xf32, #tpu.memory_space<vmem>>, vector<2x131xf32>
      %13 = arith.truncf %12 : vector<2x131xf32> to vector<2x131xbf16>
      %c0_11 = arith.constant 0 : index
      %c0_12 = arith.constant 0 : index
      %14 = vector.load %arg4[%c0_11, %c0_12] : memref<131x256xbf16, #tpu.memory_space<vmem>>, vector<131x256xbf16>
      %cst_13 = arith.constant dense<0.000000e+00> : vector<2x256xf32>
      %15 = tpu.matmul %13, %14, %cst_13 {dimension_numbers = #tpu.dot_dimension_numbers<[1], [0], [0], [1], [0, 0, 1, 1], [], []>} : vector<2x131xbf16>, vector<131x256xbf16>, vector<2x256xf32> -> vector<2x256xf32>
      %c0_14 = arith.constant 0 : index
      %c0_15 = arith.constant 0 : index
      %16 = vector.load %arg3[%c0_14, %c0_15] : memref<2x2xf32, #tpu.memory_space<vmem>>, vector<2x2xf32>
      %17 = arith.truncf %16 : vector<2x2xf32> to vector<2x2xbf16>
      %c0_16 = arith.constant 0 : index
      %c0_17 = arith.constant 0 : index
      %18 = vector.load %arg5[%c0_16, %c0_17] : memref<2x256xbf16, #tpu.memory_space<vmem>>, vector<2x256xbf16>
      %cst_18 = arith.constant dense<0.000000e+00> : vector<2x256xf32>
      %19 = tpu.matmul %17, %18, %cst_18 {dimension_numbers = #tpu.dot_dimension_numbers<[1], [0], [0], [1], [0, 0, 1, 1], [], []>} : vector<2x2xbf16>, vector<2x256xbf16>, vector<2x256xf32> -> vector<2x256xf32>
      %20 = arith.addf %15, %19 : vector<2x256xf32>
      %c0_19 = arith.constant 0 : index
      %c0_20 = arith.constant 0 : index
      %21 = vector.load %arg6[%c0_19, %c0_20] : memref<1x256xf32, #tpu.memory_space<vmem>>, vector<1x256xf32>
      %22 = vector.broadcast %21 : vector<1x256xf32> to vector<2x256xf32>
      %23 = arith.addf %20, %22 : vector<2x256xf32>
      %cst_21 = arith.constant 0.000000e+00 : f32
      %24 = vector.broadcast %cst_21 : f32 to vector<2x256xf32>
      %25 = arith.maximumf %23, %24 : vector<2x256xf32>
      %26 = arith.truncf %25 : vector<2x256xf32> to vector<2x256xbf16>
      %c0_22 = arith.constant 0 : index
      %c0_23 = arith.constant 0 : index
      %27 = vector.load %arg7[%c0_22, %c0_23] : memref<256x256xbf16, #tpu.memory_space<vmem>>, vector<256x256xbf16>
      %cst_24 = arith.constant dense<0.000000e+00> : vector<2x256xf32>
      %28 = tpu.matmul %26, %27, %cst_24 {dimension_numbers = #tpu.dot_dimension_numbers<[1], [0], [0], [1], [0, 0, 1, 1], [], []>} : vector<2x256xbf16>, vector<256x256xbf16>, vector<2x256xf32> -> vector<2x256xf32>
      %c0_25 = arith.constant 0 : index
      %c0_26 = arith.constant 0 : index
      %29 = vector.load %arg8[%c0_25, %c0_26] : memref<1x256xf32, #tpu.memory_space<vmem>>, vector<1x256xf32>
      %30 = vector.broadcast %29 : vector<1x256xf32> to vector<2x256xf32>
      %31 = arith.addf %28, %30 : vector<2x256xf32>
      %cst_27 = arith.constant 0.000000e+00 : f32
      %32 = vector.broadcast %cst_27 : f32 to vector<2x256xf32>
      %33 = arith.maximumf %31, %32 : vector<2x256xf32>
      %34 = arith.truncf %33 : vector<2x256xf32> to vector<2x256xbf16>
      %c0_28 = arith.constant 0 : index
      %c0_29 = arith.constant 0 : index
      %35 = vector.load %arg9[%c0_28, %c0_29] : memref<256x1xbf16, #tpu.memory_space<vmem>>, vector<256x1xbf16>
      %cst_30 = arith.constant dense<0.000000e+00> : vector<2x1xf32>
      %36 = tpu.matmul %34, %35, %cst_30 {dimension_numbers = #tpu.dot_dimension_numbers<[1], [0], [0], [1], [0, 0, 1, 1], [], []>} : vector<2x256xbf16>, vector<256x1xbf16>, vector<2x1xf32> -> vector<2x1xf32>
      %c0_31 = arith.constant 0 : index
      %c0_32 = arith.constant 0 : index
      %37 = vector.load %arg10[%c0_31, %c0_32] : memref<1x1xf32, #tpu.memory_space<vmem>>, vector<1x1xf32>
      %38 = vector.broadcast %37 : vector<1x1xf32> to vector<2x1xf32>
      %39 = arith.addf %36, %38 : vector<2x1xf32>
      %c0_33 = arith.constant 0 : index
      %c0_34 = arith.constant 0 : index
      %40 = vector.load %arg11[%c0_33, %c0_34] : memref<2x1xf32, #tpu.memory_space<vmem>>, vector<2x1xf32>
      tpu.vector_store %arg11[%c0_33, %c0_34], %39 {strides = array<i32>} : memref<2x1xf32, #tpu.memory_space<vmem>>, vector<2x1xf32>,
    } else {
    }
    return
  }
  func.func @transform_0(%arg0: i32) -> (i32, i32) {
    %c0_i32 = arith.constant 0 : i32
    %c0_i32_0 = arith.constant 0 : i32
    return %arg0, %c0_i32 : i32, i32
  }
  func.func @transform_1(%arg0: i32) -> (i32, i32) {
    %c0_i32 = arith.constant 0 : i32
    %c0_i32_0 = arith.constant 0 : i32
    return %arg0, %c0_i32 : i32, i32
  }
  func.func @transform_2(%arg0: i32) -> (i32, i32) {
    %c0_i32 = arith.constant 0 : i32
    %c0_i32_0 = arith.constant 0 : i32
    %c0_i32_1 = arith.constant 0 : i32
    return %c0_i32, %c0_i32_0 : i32, i32
  }
  func.func @transform_3(%arg0: i32) -> (i32, i32) {
    %c0_i32 = arith.constant 0 : i32
    %c0_i32_0 = arith.constant 0 : i32
    %c0_i32_1 = arith.constant 0 : i32
    return %c0_i32, %c0_i32_0 : i32, i32
  }
  func.func @transform_4(%arg0: i32) -> (i32, i32) {
    %c0_i32 = arith.constant 0 : i32
    %c0_i32_0 = arith.constant 0 : i32
    %c0_i32_1 = arith.constant 0 : i32
    return %c0_i32, %c0_i32_0 : i32, i32
  }
  func.func @transform_5(%arg0: i32) -> (i32, i32) {
    %c0_i32 = arith.constant 0 : i32
    %c0_i32_0 = arith.constant 0 : i32
    %c0_i32_1 = arith.constant 0 : i32
    return %c0_i32, %c0_i32_0 : i32, i32
  }
  func.func @transform_6(%arg0: i32) -> (i32, i32) {
    %c0_i32 = arith.constant 0 : i32
    %c0_i32_0 = arith.constant 0 : i32
    %c0_i32_1 = arith.constant 0 : i32
    return %c0_i32, %c0_i32_0 : i32, i32
  }
  func.func @transform_7(%arg0: i32) -> (i32, i32) {
    %c0_i32 = arith.constant 0 : i32
    %c0_i32_0 = arith.constant 0 : i32
    %c0_i32_1 = arith.constant 0 : i32
    return %c0_i32, %c0_i32_0 : i32, i32
  }
  func.func @transform_8(%arg0: i32) -> (i32, i32) {
    %c0_i32 = arith.constant 0 : i32
    %c0_i32_0 = arith.constant 0 : i32
    %c0_i32_1 = arith.constant 0 : i32
    return %c0_i32, %c0_i32_0 : i32, i32
  }
  func.func @transform_9(%arg0: i32) -> (i32, i32) {
    %c0_i32 = arith.constant 0 : i32
    %c0_i32_0 = arith.constant 0 : i32
    %c0_i32_1 = arith.constant 0 : i32
    return %c0_i32, %c0_i32_0 : i32, i32
  }
  func.func @transform_10(%arg0: i32) -> (i32, i32) {
    %c0_i32 = arith.constant 0 : i32
    %c0_i32_0 = arith.constant 0 : i32
    %c0_i32_1 = arith.constant 0 : i32
    return %c0_i32, %c0_i32_0 : i32, i32
  }
}

</mosaic_0001>

<llo_original>
// kernel: neg.3
$region0: #{neg.3}
  #allocation0 [shape = 's32[1]{0}', space=sflag, size = 0x4, scoped, tag = 'scoped memory for neg.3']
  %s0 = inlined_call_operand.vmem [shape: f32[2,24,24], index: 0, kind: input, shape index: {}]
  %s1 = inlined_call_operand.vmem [shape: f32[2,24,24], index: 1, kind: output, shape index: {}]
  %v2 = vld [vmem:[%s0] sm:$0xff]
  %3 = xla_tuple %v2
  %4 = xla_tuple %3
  %v5 = vxor.u32 %v2, 2147483648
  %6 = xla_tuple %v5
  %7 = vst [vmem:[%s1] sm:$0xff] %v5
  %s8 = scalar_lea.vmem %s0, 24
  %v9 = vld [vmem:[%s8] sm:$0xff]
  %10 = xla_tuple %v9
  %11 = xla_tuple %10
  %v12 = vxor.u32 %v9, 2147483648
  %13 = xla_tuple %v12
  %s14 = scalar_lea.vmem %s1, 24
  %15 = vst [vmem:[%s14] sm:$0xff] %v12
  %s16 = scalar_lea.vmem %s0, 8
  %v17 = vld [vmem:[%s16] sm:$0xff]
  %18 = xla_tuple %v17
  %19 = xla_tuple %18
  %v20 = vxor.u32 %v17, 2147483648
  %21 = xla_tuple %v20
  %s22 = scalar_lea.vmem %s1, 8
  %23 = vst [vmem:[%s22] sm:$0xff] %v20
  %s24 = scalar_lea.vmem %s0, 32
  %v25 = vld [vmem:[%s24] sm:$0xff]
  %26 = xla_tuple %v25
  %27 = xla_tuple %26
  %v28 = vxor.u32 %v25, 2147483648
  %29 = xla_tuple %v28
  %s30 = scalar_lea.vmem %s1, 32
  %31 = vst [vmem:[%s30] sm:$0xff] %v28
  %s32 = scalar_lea.vmem %s0, 16
  %v33 = vld [vmem:[%s32] sm:$0xff]
  %34 = xla_tuple %v33
  %35 = xla_tuple %34
  %v36 = vxor.u32 %v33, 2147483648
  %37 = xla_tuple %v36
  %s38 = scalar_lea.vmem %s1, 16
  %39 = vst [vmem:[%s38] sm:$0xff] %v36
  %s40 = scalar_lea.vmem %s0, 40
  %v41 = vld [vmem:[%s40] sm:$0xff]
  %42 = xla_tuple %v41
  %43 = xla_tuple %42
  %v44 = vxor.u32 %v41, 2147483648
  %45 = xla_tuple %v44
  %s46 = scalar_lea.vmem %s1, 40
  %47 = vst [vmem:[%s46] sm:$0xff] %v44

// kernel: forward.10
$region0: #{forward.10}
  #allocation0 [shape = 'u32[]', space=smem, size = 0x4, offset = 0x4, fixed_abs, tag = 'smem constant byte address 0x4 - core index']
  #allocation1 [shape = 'u32[144,128]{1,0:T(1,128)}', space=vmem, size = 0x12000, scoped, tag = 'internal scratch']
  %s0 = inlined_call_operand.vmem [shape: f32[48,3], index: 0, kind: input, shape index: {}]
  %s1 = inlined_call_operand.vmem [shape: f32[2,1,24], index: 1, kind: input, shape index: {}]
  %s2 = inlined_call_operand.vmem [shape: f32[2,24,24], index: 2, kind: output, shape index: {}]
  %s3 = sld [smem:[#allocation0]]
  $region41: #{forward.10} parent=0
    _
  %s5 = ssub.s32 1, %s3
  %s6 = scalar_select 0, %s5, %s3
  loop: start=0, step=1, limit=4
  $region2: #{forward.10} parent=0 // loop_pre_header
    _
  $region3: #{forward.10} parent=0 // loop_header
    %s8 = sphi 0, %s12
    %p9 = scmp.ge.s32.totalorder %s8, 4
    %s18 = sphi 0, %s20
    %s21 = sphi 0, %s18
    %s22 = sphi 0, %s21
    %s38 = sphi 0, %s22
    %s44 = sphi 0, %s46
    %s47 = sphi 0, %s44
    %s48 = sphi 0, %s47
    %s64 = sphi 0, %s48
    %s70 = sphi 0, %s72
    %s73 = sphi 0, %s70
    %s74 = sphi 0, %s73
    %s90 = sphi 0, %s74
  $region4: #{forward.10} parent=0 // loop_header_branch
    %11 = sbr.rel (%p9) target = $region8
  $region5: #{forward.10} parent=0 // loop_body
    %s13 = ssub.s32 %s8, 1
    %s14 = ssub.s32 %s8, 2
    %s15 = sadd.s32 %s8, 1
    %s16 = ssub.s32 %s8, %s15
    %p17 = scmp.eq.s32.totalorder %s16, 0
    %s19 = sadd.s32 %s18, 1
    %s20 = scalar_select %p17, %s18, %s19
    %p23 = pneg %p17
    %p24 = scmp.eq.s32.totalorder %s8, 1
    %p25 = por %p23, %p24
    %p26 = scmp.ne.s32.totalorder %s18, %s21
    %p27 = scmp.eq.s32.totalorder %s8, 0
    %p28 = por %p26, %p27
    %p29 = scmp.ne.s32.totalorder %s18, %s21
    %p30 = scmp.eq.s32.totalorder %s13, 1
    %p31 = por %p29, %p30
    %p32 = scmp.ne.s32.totalorder %s21, %s22
    %p33 = scmp.eq.s32.totalorder %s13, 0
    %p34 = por %p32, %p33
    %p35 = scmp.ne.s32.totalorder %s21, %s22
    %p36 = scmp.eq.s32.totalorder %s14, 1
    %p37 = por %p35, %p36
    %p39 = scmp.ne.s32.totalorder %s22, %s38
    %p40 = scmp.eq.s32.totalorder %s14, 0
    %p41 = por %p39, %p40
    %s42 = ssub.s32 %s8, %s15
    %p43 = scmp.eq.s32.totalorder %s42, 0
    %s45 = sadd.s32 %s44, 1
    %s46 = scalar_select %p43, %s44, %s45
    %p49 = pneg %p43
    %p50 = scmp.eq.s32.totalorder %s8, 1
    %p51 = por %p49, %p50
    %p52 = scmp.ne.s32.totalorder %s44, %s47
    %p53 = scmp.eq.s32.totalorder %s8, 0
    %p54 = por %p52, %p53
    %p55 = scmp.ne.s32.totalorder %s44, %s47
    %p56 = scmp.eq.s32.totalorder %s13, 1
    %p57 = por %p55, %p56
    %p58 = scmp.ne.s32.totalorder %s47, %s48
    %p59 = scmp.eq.s32.totalorder %s13, 0
    %p60 = por %p58, %p59
    %p61 = scmp.ne.s32.totalorder %s47, %s48
    %p62 = scmp.eq.s32.totalorder %s14, 1
    %p63 = por %p61, %p62
    %p65 = scmp.ne.s32.totalorder %s48, %s64
    %p66 = scmp.eq.s32.totalorder %s14, 0
    %p67 = por %p65, %p66
    %s68 = ssub.s32 %s8, %s15
    %p69 = scmp.eq.s32.totalorder %s68, 0
    %s71 = sadd.s32 %s70, 1
    %s72 = scalar_select %p69, %s70, %s71
    %p75 = pneg %p69
    %p76 = scmp.eq.s32.totalorder %s8, 1
    %p77 = por %p75, %p76
    %p78 = scmp.ne.s32.totalorder %s70, %s73
    %p79 = scmp.eq.s32.totalorder %s8, 0
    %p80 = por %p78, %p79
    %p81 = scmp.ne.s32.totalorder %s70, %s73
    %p82 = scmp.eq.s32.totalorder %s13, 1
    %p83 = por %p81, %p82
    %p84 = scmp.ne.s32.totalorder %s73, %s74
    %p85 = scmp.eq.s32.totalorder %s13, 0
    %p86 = por %p84, %p85
    %p87 = scmp.ne.s32.totalorder %s73, %s74
    %p88 = scmp.eq.s32.totalorder %s14, 1
    %p89 = por %p87, %p88
    %p91 = scmp.ne.s32.totalorder %s74, %s90
    %p92 = scmp.eq.s32.totalorder %s14, 0
    %p93 = por %p91, %p92
    %p94 = scmp.le.s32.totalorder 1, %s8
    %p95 = scmp.lt.s32.totalorder %s8, 3
    %p96 = pnand %p94, %p95
    %p97 = pneg %p96
    // Predicated region
    $region9: #{forward.10} parent=5 // pred_check
      _
    $region10: #{forward.10} parent=5 // pred_check_branch
      %99 = sbr.rel (%p96) target = $region12
    $region11: #{forward.10} parent=5 // pred_region
      %s100 = ssub.s32 %s8, 1
    $region12: #{forward.10} parent=5 // pred_fallthru
      _
    %p101 = scmp.lt.s32.totalorder %s8, 2
    // Predicated region
    $region13: #{forward.10} parent=5 // pred_check
      %p102 = pneg %p101
    $region14: #{forward.10} parent=5 // pred_check_branch
      %104 = sbr.rel (%p102) target = $region16
    $region15: #{forward.10} parent=5 // pred_region
      // Predicated region
      $region17: #{forward.10} parent=15 // pred_check
        %p105 = pneg %p28
      $region18: #{forward.10} parent=15 // pred_check_branch
        %107 = sbr.rel (%p105) target = $region20
      $region19: #{forward.10} parent=15 // pred_region
        %s108 = smul.u32 3, %s8
        %p109 = scmp.lt.s32.totalorder %s108, 5
        %s110 = scalar_select %p109, %s108, 5
        %s111 = smul.addr %s110, 8
        %s112 = scalar_lea.vmem %s0, %s111
        %s113 = smul.u32 3, %s8
      $region20: #{forward.10} parent=15 // pred_fallthru
        _
      // Predicated region
      $region21: #{forward.10} parent=15 // pred_check
        %p114 = pneg %p54
      $region22: #{forward.10} parent=15 // pred_check_branch
        %116 = sbr.rel (%p114) target = $region24
      $region23: #{forward.10} parent=15 // pred_region
        %p117 = scmp.lt.s32.totalorder %s8, 1
        %s118 = scalar_select %p117, %s8, 1
        %s119 = scalar_lea.vmem %s1, %s118
      $region24: #{forward.10} parent=15 // pred_fallthru
        _
    $region16: #{forward.10} parent=5 // pred_fallthru
      _
    %p120 = scmp.le.s32.totalorder 1, %s8
    %p121 = scmp.lt.s32.totalorder %s8, 3
    %p122 = pnand %p120, %p121
    %p123 = pneg %p122
    // Predicated region
    $region25: #{forward.10} parent=5 // pred_check
      _
    $region26: #{forward.10} parent=5 // pred_check_branch
      %125 = sbr.rel (%p122) target = $region28
    $region27: #{forward.10} parent=5 // pred_region
      %s126 = ssub.s32 %s8, 1
      %s127 = smul.u32 3, %s13
      %p128 = scmp.lt.s32.totalorder %s127, 5
      %s129 = scalar_select %p128, %s127, 5
      %s130 = smul.addr %s129, 8
      %s131 = scalar_lea.vmem %s0, %s130
      %p132 = pneg %p34
      %p133 = pneg %p31
      %p134 = scmp.lt.s32.totalorder %s13, 1
      %s135 = scalar_select %p134, %s13, 1
      %s136 = scalar_lea.vmem %s1, %s135
      %p137 = pneg %p60
      %p138 = pneg %p57
      %p139 = pneg %p86
      %p140 = pneg %p83
      %p141 = scmp.lt.s32.totalorder %s13, 1
      %s142 = scalar_select %p141, %s13, 1
      %s143 = smul.addr %s142, 3
      %s144 = smul.addr %s143, 8
      %s145 = scalar_lea.vmem %s2, %s144
      %s146 = smul.u32 3, %s13
      %p147 = scmp.lt.s32.totalorder %s146, 5
      %s148 = scalar_select %p147, %s146, 5
      %s149 = smul.addr %s148, 8
      %s150 = scalar_lea.vmem %s0, %s149
      %s151 = smul.u32 3, %s13
      %p152 = scmp.lt.s32.totalorder %s13, 1
      %s153 = scalar_select %p152, %s13, 1
      %s154 = scalar_lea.vmem %s1, %s153
      %p155 = scmp.lt.s32.totalorder %s13, 1
      %s156 = scalar_select %p155, %s13, 1
      %s157 = smul.addr %s156, 3
      %s158 = smul.addr %s157, 8
      %s159 = scalar_lea.vmem %s2, %s158
      %v161 = vld [vmem:[%s150] sm:$0xff]
      %v162 = vld [vmem:[%s150 + $0x8] sm:$0xff]
      %v163 = vld [vmem:[%s150 + $0x10] sm:$0xff]
      %v164 = vpack.c.bf16 %v162, %v161
      %v165 = vpack.c.bf16 %v163, %v163
      %vm166 = vcmask 23552
      %v168 = vsel %vm166, %v164, 0
      %v171 = vsel %vm166, %v165, 0
      %173 = vmatprep.subr.bf16.mxu0 0
      %174 = vmatpush1.bf16.xpose.msra.mxu0 %v168
      %175 = vmatprep.subr.bf16.mxu0 0
      %176 = vmatpush1.bf16.xpose.msra.mxu0 %v171
      %177 = vmatprep.subr.bf16.mxu0 0
      %178 = vmatpush1.bf16.xpose.msra.mxu0 0
      %179 = vmatprep.subr.bf16.mxu0 0
      %180 = vmatpush1.bf16.xpose.msra.mxu0 0
      %181 = vmatprep.subr.bf16.mxu0 0
      %182 = vmatpush1.bf16.xpose.msra.mxu0 0
      %183 = vmatprep.subr.bf16.mxu0 0
      %184 = vmatpush1.bf16.xpose.msra.mxu0 0
      %185 = vmatprep.subr.bf16.mxu0 0
      %186 = vmatpush1.bf16.xpose.msra.mxu0 0
      %187 = vmatprep.subr.bf16.mxu0 0
      %188 = vmatpush1.bf16.xpose.msra.mxu0 0
      %189 = vmatprep.subr.bf16.mxu0 0
      %190 = vmatpush1.bf16.xpose.msra.mxu0 0
      %191 = vmatprep.subr.bf16.mxu0 0
      %192 = vmatpush1.bf16.xpose.msra.mxu0 0
      %193 = vmatprep.subr.bf16.mxu0 0
      %194 = vmatpush1.bf16.xpose.msra.mxu0 0
      %195 = vmatprep.subr.bf16.mxu0 0
      %196 = vmatpush1.bf16.xpose.msra.mxu0 0
      %197 = vmatprep.subr.bf16.mxu0 0
      %198 = vmatpush1.bf16.xpose.msra.mxu0 0
      %199 = vmatprep.subr.bf16.mxu0 0
      %200 = vmatpush1.bf16.xpose.msra.mxu0 0
      %201 = vmatprep.subr.bf16.mxu0 0
      %202 = vmatpush1.bf16.xpose.msra.mxu0 0
      %203 = vmatprep.subr.bf16.mxu0 0
      %204 = vmatpush1.bf16.xpose.msra.mxu0 0
      %205 = vmatprep.mubr.bf16.mxu0 0
      %206 = vmatmul.mubr.bf16.gmra.mrb[0].mxu0 %v168
      %v207 = vpop.f32.mrb[0].mxu0
      %v208 = vadd.f32 0.0, %v207
      %v209 = vpop.f32.mrb[0].mxu0
      %v210 = vpop.f32.mrb[0].mxu0
      %v211 = vadd.f32 0.0, %v210
      %v212 = vpop.f32.mrb[0].mxu0
      %213 = vmatprep.mubr.bf16.mxu0 0
      %214 = vmatmul.mubr.bf16.gmra.mrb[0].mxu0 %v171
      %v215 = vpop.f32.mrb[0].mxu0
      %v216 = vadd.f32 0.0, %v215
      %v217 = vpop.f32.mrb[0].mxu0
      %v218 = vpop.f32.mrb[0].mxu0
      %v219 = vpop.f32.mrb[0].mxu0
      %220 = vdwg.mxu0
      %v221 = vld [vmem:[%s154] sm:$0x1]
      %v222 = vmul.f32 %v208, 2.0
      %v223 = vmul.f32 %v211, 2.0
      %v224 = vmul.f32 %v216, 2.0
      %v226 = vlaneseq
      %v227 = vshrl.u32 %v226, 7
      %v228 = vsub.s32 0, %v227
      %v229 = vrot.slane %v221, %v228
      %v231 = vsub.f32 %v229, %v222
      %v232 = vsub.f32 %v229, %v223
      %v233 = vsub.f32 %v229, %v224
      %vm234 = vcmask 195584
      %235 = vst.msk [vmem:[%s159] sm:$0xff] %vm234, %v231
      %236 = vst.msk [vmem:[%s159 + $0x8] sm:$0xff] %vm234, %v232
      %237 = vst.msk [vmem:[%s159 + $0x10] sm:$0xff] %vm234, %v233
      %p238 = scmp.lt.s32.totalorder %s13, 1
      %s239 = scalar_select %p238, %s13, 1
      %s240 = smul.addr %s239, 3
      %s241 = smul.addr %s240, 8
      %s242 = scalar_lea.vmem %s2, %s241
      // Predicated region
      $region29: #{forward.10} parent=27 // pred_check
        %p243 = pneg %p83
      $region30: #{forward.10} parent=27 // pred_check_branch
        %245 = sbr.rel (%p243) target = $region32
      $region31: #{forward.10} parent=27 // pred_region
        _
      $region32: #{forward.10} parent=27 // pred_fallthru
        _
    $region28: #{forward.10} parent=5 // pred_fallthru
      _
    %p246 = scmp.le.s32.totalorder 2, %s8
    // Predicated region
    $region33: #{forward.10} parent=5 // pred_check
      %p247 = pneg %p246
    $region34: #{forward.10} parent=5 // pred_check_branch
      %249 = sbr.rel (%p247) target = $region36
    $region35: #{forward.10} parent=5 // pred_region
      %s250 = ssub.s32 %s8, 2
      // Predicated region
      $region37: #{forward.10} parent=35 // pred_check
        %p251 = pneg %p89
      $region38: #{forward.10} parent=35 // pred_check_branch
        %253 = sbr.rel (%p251) target = $region40
      $region39: #{forward.10} parent=35 // pred_region
        %p254 = scmp.lt.s32.totalorder %s14, 1
        %s255 = scalar_select %p254, %s14, 1
        %s256 = smul.addr %s255, 3
        %s257 = smul.addr %s256, 8
        %s258 = scalar_lea.vmem %s2, %s257
      $region40: #{forward.10} parent=35 // pred_fallthru
        _
    $region36: #{forward.10} parent=5 // pred_fallthru
      _
  $region6: #{forward.10} parent=0 // loop_footer
    %s12 = sadd.s32 1, %s8
  $region7: #{forward.10} parent=0 // loop_footer_branch
    %7 = sbr.rel target = $region3
  $region8: #{forward.10} parent=0 // loop_exit
    _

// kernel: forward.11
$region0: #{forward.11}
  #allocation0 [shape = 'u32[]', space=smem, size = 0x4, offset = 0x4, fixed_abs, tag = 'smem constant byte address 0x4 - core index']
  #allocation1 [shape = 'u32[144,128]{1,0:T(1,128)}', space=vmem, size = 0x12000, scoped, tag = 'internal scratch']
  %s0 = inlined_call_operand.vmem [shape: f32[48,3], index: 0, kind: input, shape index: {}]
  %s1 = inlined_call_operand.vmem [shape: bf16[3,128], index: 1, kind: input, shape index: {}]
  %s2 = inlined_call_operand.vmem [shape: bf16[3,128], index: 2, kind: input, shape index: {}]
  %s3 = inlined_call_operand.vmem [shape: f32[1,128], index: 3, kind: input, shape index: {}]
  %s4 = inlined_call_operand.hbm [shape: f32[48,128], index: 4, kind: output, shape index: {0}]
  %s5 = inlined_call_operand.hbm [shape: bf16[48,128], index: 5, kind: output, shape index: {1}]
  %6 = xla_tuple %s4, %s5
  %s7 = sld [smem:[#allocation0]]
  $region57: #{forward.11} parent=0
    _
  %s9 = ssub.s32 1, %s7
  %s10 = scalar_select 0, %s9, %s7
  $region1: #{forward.11} parent=0
    #allocation2 [shape = 'u8[24576]{0}', space=vmem, size = 0x6000, scoped, tag = 'output window, operand 0']
    #allocation3 [shape = 's32[2]{0}', space=sflag, size = 0x8, scoped, tag = 'scoped memory for forward.11']
    #allocation4 [shape = 'u8[12288]{0}', space=vmem, size = 0x3000, scoped, tag = 'output window, operand 1']
    #allocation5 [shape = 's32[2]{0}', space=sflag, size = 0x8, scoped, tag = 'scoped memory for forward.11']
    %11 = vsyncpa [#allocation3], 0
    %s12 = scalar_lea.sflag [#allocation3], 1
    %13 = vsyncpa %s12, 0
    %14 = vsyncpa [#allocation5], 0
    %s15 = scalar_lea.sflag [#allocation5], 1
    %16 = vsyncpa %s15, 0
    loop: start=0, step=1, limit=4
    $region2: #{forward.11} parent=1 // loop_pre_header
      _
    $region3: #{forward.11} parent=1 // loop_header
      %s18 = sphi 0, %s22
      %p19 = scmp.ge.s32.totalorder %s18, 4
      %s28 = sphi 0, %s30
      %s31 = sphi 0, %s28
      %s32 = sphi 0, %s31
      %s48 = sphi 0, %s32
      %s52 = sphi 0, %s52
      %s54 = sphi 0, %s52
      %s55 = sphi 0, %s54
      %s69 = sphi 0, %s55
      %s73 = sphi 0, %s73
      %s75 = sphi 0, %s73
      %s76 = sphi 0, %s75
      %s90 = sphi 0, %s76
      %s94 = sphi 0, %s94
      %s96 = sphi 0, %s94
      %s97 = sphi 0, %s96
      %s111 = sphi 0, %s97
      %s117 = sphi 0, %s119
      %s120 = sphi 0, %s117
      %s121 = sphi 0, %s120
      %s137 = sphi 0, %s121
      %s143 = sphi 0, %s145
      %s146 = sphi 0, %s143
      %s147 = sphi 0, %s146
      %s163 = sphi 0, %s147
    $region4: #{forward.11} parent=1 // loop_header_branch
      %21 = sbr.rel (%p19) target = $region8
    $region5: #{forward.11} parent=1 // loop_body
      %s23 = ssub.s32 %s18, 1
      %s24 = ssub.s32 %s18, 2
      %s25 = sadd.s32 %s18, 1
      %s26 = ssub.s32 %s18, %s25
      %p27 = scmp.eq.s32.totalorder %s26, 0
      %s29 = sadd.s32 %s28, 1
      %s30 = scalar_select %p27, %s28, %s29
      %p33 = pneg %p27
      %p34 = scmp.eq.s32.totalorder %s18, 1
      %p35 = por %p33, %p34
      %p36 = scmp.ne.s32.totalorder %s28, %s31
      %p37 = scmp.eq.s32.totalorder %s18, 0
      %p38 = por %p36, %p37
      %p39 = scmp.ne.s32.totalorder %s28, %s31
      %p40 = scmp.eq.s32.totalorder %s23, 1
      %p41 = por %p39, %p40
      %p42 = scmp.ne.s32.totalorder %s31, %s32
      %p43 = scmp.eq.s32.totalorder %s23, 0
      %p44 = por %p42, %p43
      %p45 = scmp.ne.s32.totalorder %s31, %s32
      %p46 = scmp.eq.s32.totalorder %s24, 1
      %p47 = por %p45, %p46
      %p49 = scmp.ne.s32.totalorder %s32, %s48
      %p50 = scmp.eq.s32.totalorder %s24, 0
      %p51 = por %p49, %p50
      %s53 = sadd.s32 %s52, 1
      %p56 = scmp.eq.s32.totalorder %s18, 1
      %p57 = scmp.ne.s32.totalorder %s52, %s54
      %p58 = scmp.eq.s32.totalorder %s18, 0
      %p59 = por %p57, %p58
      %p60 = scmp.ne.s32.totalorder %s52, %s54
      %p61 = scmp.eq.s32.totalorder %s23, 1
      %p62 = por %p60, %p61
      %p63 = scmp.ne.s32.totalorder %s54, %s55
      %p64 = scmp.eq.s32.totalorder %s23, 0
      %p65 = por %p63, %p64
      %p66 = scmp.ne.s32.totalorder %s54, %s55
      %p67 = scmp.eq.s32.totalorder %s24, 1
      %p68 = por %p66, %p67
      %p70 = scmp.ne.s32.totalorder %s55, %s69
      %p71 = scmp.eq.s32.totalorder %s24, 0
      %p72 = por %p70, %p71
      %s74 = sadd.s32 %s73, 1
      %p77 = scmp.eq.s32.totalorder %s18, 1
      %p78 = scmp.ne.s32.totalorder %s73, %s75
      %p79 = scmp.eq.s32.totalorder %s18, 0
      %p80 = por %p78, %p79
      %p81 = scmp.ne.s32.totalorder %s73, %s75
      %p82 = scmp.eq.s32.totalorder %s23, 1
      %p83 = por %p81, %p82
      %p84 = scmp.ne.s32.totalorder %s75, %s76
      %p85 = scmp.eq.s32.totalorder %s23, 0
      %p86 = por %p84, %p85
      %p87 = scmp.ne.s32.totalorder %s75, %s76
      %p88 = scmp.eq.s32.totalorder %s24, 1
      %p89 = por %p87, %p88
      %p91 = scmp.ne.s32.totalorder %s76, %s90
      %p92 = scmp.eq.s32.totalorder %s24, 0
      %p93 = por %p91, %p92
      %s95 = sadd.s32 %s94, 1
      %p98 = scmp.eq.s32.totalorder %s18, 1
      %p99 = scmp.ne.s32.totalorder %s94, %s96
      %p100 = scmp.eq.s32.totalorder %s18, 0
      %p101 = por %p99, %p100
      %p102 = scmp.ne.s32.totalorder %s94, %s96
      %p103 = scmp.eq.s32.totalorder %s23, 1
      %p104 = por %p102, %p103
      %p105 = scmp.ne.s32.totalorder %s96, %s97
      %p106 = scmp.eq.s32.totalorder %s23, 0
      %p107 = por %p105, %p106
      %p108 = scmp.ne.s32.totalorder %s96, %s97
      %p109 = scmp.eq.s32.totalorder %s24, 1
      %p110 = por %p108, %p109
      %p112 = scmp.ne.s32.totalorder %s97, %s111
      %p113 = scmp.eq.s32.totalorder %s24, 0
      %p114 = por %p112, %p113
      %s115 = ssub.s32 %s18, %s25
      %p116 = scmp.eq.s32.totalorder %s115, 0
      %s118 = sadd.s32 %s117, 1
      %s119 = scalar_select %p116, %s117, %s118
      %p122 = pneg %p116
      %p123 = scmp.eq.s32.totalorder %s18, 1
      %p124 = por %p122, %p123
      %p125 = scmp.ne.s32.totalorder %s117, %s120
      %p126 = scmp.eq.s32.totalorder %s18, 0
      %p127 = por %p125, %p126
      %p128 = scmp.ne.s32.totalorder %s117, %s120
      %p129 = scmp.eq.s32.totalorder %s23, 1
      %p130 = por %p128, %p129
      %p131 = scmp.ne.s32.totalorder %s120, %s121
      %p132 = scmp.eq.s32.totalorder %s23, 0
      %p133 = por %p131, %p132
      %p134 = scmp.ne.s32.totalorder %s120, %s121
      %p135 = scmp.eq.s32.totalorder %s24, 1
      %p136 = por %p134, %p135
      %p138 = scmp.ne.s32.totalorder %s121, %s137
      %p139 = scmp.eq.s32.totalorder %s24, 0
      %p140 = por %p138, %p139
      %s141 = ssub.s32 %s18, %s25
      %p142 = scmp.eq.s32.totalorder %s141, 0
      %s144 = sadd.s32 %s143, 1
      %s145 = scalar_select %p142, %s143, %s144
      %p148 = pneg %p142
      %p149 = scmp.eq.s32.totalorder %s18, 1
      %p150 = por %p148, %p149
      %p151 = scmp.ne.s32.totalorder %s143, %s146
      %p152 = scmp.eq.s32.totalorder %s18, 0
      %p153 = por %p151, %p152
      %p154 = scmp.ne.s32.totalorder %s143, %s146
      %p155 = scmp.eq.s32.totalorder %s23, 1
      %p156 = por %p154, %p155
      %p157 = scmp.ne.s32.totalorder %s146, %s147
      %p158 = scmp.eq.s32.totalorder %s23, 0
      %p159 = por %p157, %p158
      %p160 = scmp.ne.s32.totalorder %s146, %s147
      %p161 = scmp.eq.s32.totalorder %s24, 1
      %p162 = por %p160, %p161
      %p164 = scmp.ne.s32.totalorder %s147, %s163
      %p165 = scmp.eq.s32.totalorder %s24, 0
      %p166 = por %p164, %p165
      %p167 = scmp.le.s32.totalorder 1, %s18
      %p168 = scmp.lt.s32.totalorder %s18, 3
      %p169 = pnand %p167, %p168
      %p170 = pneg %p169
      // Predicated region
      $region9: #{forward.11} parent=5 // pred_check
        _
      $region10: #{forward.11} parent=5 // pred_check_branch
        %172 = sbr.rel (%p169) target = $region12
      $region11: #{forward.11} parent=5 // pred_region
        %s173 = ssub.s32 %s18, 1
        // Predicated region
        $region13: #{forward.11} parent=11 // pred_check
          %p174 = pneg %p65
        $region14: #{forward.11} parent=11 // pred_check_branch
          %176 = sbr.rel (%p174) target = $region16
        $region15: #{forward.11} parent=11 // pred_region
          _
        $region16: #{forward.11} parent=11 // pred_fallthru
          _
        // Predicated region
        $region17: #{forward.11} parent=11 // pred_check
          %p177 = pneg %p86
        $region18: #{forward.11} parent=11 // pred_check_branch
          %179 = sbr.rel (%p177) target = $region20
        $region19: #{forward.11} parent=11 // pred_region
          _
        $region20: #{forward.11} parent=11 // pred_fallthru
          _
        // Predicated region
        $region21: #{forward.11} parent=11 // pred_check
          %p180 = pneg %p107
        $region22: #{forward.11} parent=11 // pred_check_branch
          %182 = sbr.rel (%p180) target = $region24
        $region23: #{forward.11} parent=11 // pred_region
          _
        $region24: #{forward.11} parent=11 // pred_fallthru
          _
      $region12: #{forward.11} parent=5 // pred_fallthru
        _
      %p183 = scmp.lt.s32.totalorder %s18, 2
      // Predicated region
      $region25: #{forward.11} parent=5 // pred_check
        %p184 = pneg %p183
      $region26: #{forward.11} parent=5 // pred_check_branch
        %186 = sbr.rel (%p184) target = $region28
      $region27: #{forward.11} parent=5 // pred_region
        // Predicated region
        $region29: #{forward.11} parent=27 // pred_check
          %p187 = pneg %p38
        $region30: #{forward.11} parent=27 // pred_check_branch
          %189 = sbr.rel (%p187) target = $region32
        $region31: #{forward.11} parent=27 // pred_region
          %s190 = smul.u32 3, %s18
          %p191 = scmp.lt.s32.totalorder %s190, 5
          %s192 = scalar_select %p191, %s190, 5
          %s193 = smul.addr %s192, 8
          %s194 = scalar_lea.vmem %s0, %s193
          %s195 = smul.u32 3, %s18
        $region32: #{forward.11} parent=27 // pred_fallthru
          _
      $region28: #{forward.11} parent=5 // pred_fallthru
        _
      %p196 = scmp.le.s32.totalorder 1, %s18
      %p197 = scmp.lt.s32.totalorder %s18, 3
      %p198 = pnand %p196, %p197
      %p199 = pneg %p198
      // Predicated region
      $region33: #{forward.11} parent=5 // pred_check
        _
      $region34: #{forward.11} parent=5 // pred_check_branch
        %201 = sbr.rel (%p198) target = $region36
      $region35: #{forward.11} parent=5 // pred_region
        %s202 = ssub.s32 %s18, 1
        %s203 = smul.u32 3, %s23
        %p204 = scmp.lt.s32.totalorder %s203, 5
        %s205 = scalar_select %p204, %s203, 5
        %s206 = smul.addr %s205, 8
        %s207 = scalar_lea.vmem %s0, %s206
        %p208 = pneg %p44
        %p209 = pneg %p41
        %p210 = pneg %p65
        %p211 = pneg %p62
        %p212 = pneg %p86
        %p213 = pneg %p83
        %p214 = pneg %p107
        %p215 = pneg %p104
        %p216 = pneg %p133
        %p217 = pneg %p130
        %s218 = sand.u32 %s120, 1
        %s219 = scalar_lea.sflag [#allocation3], %s218
        %s220 = sand.u32 %s120, 1
        %s221 = smul.addr %s220, 24
        %s222 = scalar_lea.vmem [#allocation2], %s221
        %p223 = pneg %p159
        %p224 = pneg %p156
        %s225 = sand.u32 %s146, 1
        %s226 = scalar_lea.sflag [#allocation5], %s225
        %s227 = sand.u32 %s146, 1
        %s228 = smul.addr %s227, 12
        %s229 = scalar_lea.vmem [#allocation4], %s228
        %s230 = smul.u32 3, %s23
        %p231 = scmp.lt.s32.totalorder %s230, 5
        %s232 = scalar_select %p231, %s230, 5
        %s233 = smul.addr %s232, 8
        %s234 = scalar_lea.vmem %s0, %s233
        %s235 = smul.u32 3, %s23
        %s236 = smul.u32 3, %s23
        %s237 = smul.u32 3, %s23
        %v239 = vld [vmem:[%s234] sm:$0xff]
        %v240 = vld [vmem:[%s234 + $0x8] sm:$0xff]
        %v241 = vld [vmem:[%s234 + $0x10] sm:$0xff]
        %v242 = vpack.c.bf16 %v240, %v239
        %v243 = vpack.c.bf16 %v241, %v241
        %v244 = vld [vmem:[%s1] sm:$0x3]
        %v245 = vld [vmem:[%s3] sm:$0x1]
        %v247 = vlaneseq
        %v248 = vshrl.u32 %v247, 7
        %v249 = vsub.s32 0, %v248
        %v250 = vrot.slane %v245, %v249
        %vm252 = vcmask 23552
        %v254 = vsel %vm252, %v242, 0
        %v257 = vsel %vm252, %v243, 0
        %vm259 = vcmask 1040384
        %vm260 = vcmask 1041408
        %v261 = vsel %vm259, 4294967295, 65535
        %v262 = vsel %vm260, %v261, 0
        %v264 = vand.u32 %v244, %v262
        %266 = vmatprep.subr.bf16.mxu0 0
        %267 = vmatpush1.bf16.msra.mxu0 %v264
        %268 = vmatprep.subr.bf16.mxu0 0
        %269 = vmatpush1.bf16.msra.mxu0 0
        %270 = vmatprep.subr.bf16.mxu0 0
        %271 = vmatpush1.bf16.msra.mxu0 0
        %272 = vmatprep.subr.bf16.mxu0 0
        %273 = vmatpush1.bf16.msra.mxu0 0
        %274 = vmatprep.subr.bf16.mxu0 0
        %275 = vmatpush1.bf16.msra.mxu0 0
        %276 = vmatprep.subr.bf16.mxu0 0
        %277 = vmatpush1.bf16.msra.mxu0 0
        %278 = vmatprep.subr.bf16.mxu0 0
        %279 = vmatpush1.bf16.msra.mxu0 0
        %280 = vmatprep.subr.bf16.mxu0 0
        %281 = vmatpush1.bf16.msra.mxu0 0
        %282 = vmatprep.subr.bf16.mxu0 0
        %283 = vmatpush1.bf16.msra.mxu0 0
        %284 = vmatprep.subr.bf16.mxu0 0
        %285 = vmatpush1.bf16.msra.mxu0 0
        %286 = vmatprep.subr.bf16.mxu0 0
        %287 = vmatpush1.bf16.msra.mxu0 0
        %288 = vmatprep.subr.bf16.mxu0 0
        %289 = vmatpush1.bf16.msra.mxu0 0
        %290 = vmatprep.subr.bf16.mxu0 0
        %291 = vmatpush1.bf16.msra.mxu0 0
        %292 = vmatprep.subr.bf16.mxu0 0
        %293 = vmatpush1.bf16.msra.mxu0 0
        %294 = vmatprep.subr.bf16.mxu0 0
        %295 = vmatpush1.bf16.msra.mxu0 0
        %296 = vmatprep.subr.bf16.mxu0 0
        %297 = vmatpush1.bf16.msra.mxu0 0
        %298 = vmatprep.mubr.bf16.mxu0 0
        %299 = vmatmul.mubr.bf16.gmra.mrb[0].mxu0 %v254
        %v300 = vpop.f32.mrb[0].mxu0
        %v301 = vadd.f32 %v250, %v300
        %v302 = vpop.f32.mrb[0].mxu0
        %v303 = vpop.f32.mrb[0].mxu0
        %v304 = vadd.f32 %v250, %v303
        %v305 = vpop.f32.mrb[0].mxu0
        %306 = vmatprep.mubr.bf16.mxu0 0
        %307 = vmatmul.mubr.bf16.gmra.mrb[0].mxu0 %v257
        %v308 = vpop.f32.mrb[0].mxu0
        %v309 = vadd.f32 %v250, %v308
        %v310 = vpop.f32.mrb[0].mxu0
        %v311 = vpop.f32.mrb[0].mxu0
        %v312 = vpop.f32.mrb[0].mxu0
        %313 = vdwg.mxu0
        %314 = vst [vmem:[%s222] sm:$0xff] %v301
        %315 = vst [vmem:[%s222 + $0x8] sm:$0xff] %v304
        %316 = vst [vmem:[%s222 + $0x10] sm:$0xff] %v309
        %v317 = vld [vmem:[%s2] sm:$0x3]
        %v319 = vand.u32 %v317, %v262
        %321 = vmatprep.subr.bf16.mxu0 0
        %322 = vmatpush1.bf16.msra.mxu0 %v319
        %323 = vmatprep.subr.bf16.mxu0 0
        %324 = vmatpush1.bf16.msra.mxu0 0
        %325 = vmatprep.subr.bf16.mxu0 0
        %326 = vmatpush1.bf16.msra.mxu0 0
        %327 = vmatprep.subr.bf16.mxu0 0
        %328 = vmatpush1.bf16.msra.mxu0 0
        %329 = vmatprep.subr.bf16.mxu0 0
        %330 = vmatpush1.bf16.msra.mxu0 0
        %331 = vmatprep.subr.bf16.mxu0 0
        %332 = vmatpush1.bf16.msra.mxu0 0
        %333 = vmatprep.subr.bf16.mxu0 0
        %334 = vmatpush1.bf16.msra.mxu0 0
        %335 = vmatprep.subr.bf16.mxu0 0
        %336 = vmatpush1.bf16.msra.mxu0 0
        %337 = vmatprep.subr.bf16.mxu0 0
        %338 = vmatpush1.bf16.msra.mxu0 0
        %339 = vmatprep.subr.bf16.mxu0 0
        %340 = vmatpush1.bf16.msra.mxu0 0
        %341 = vmatprep.subr.bf16.mxu0 0
        %342 = vmatpush1.bf16.msra.mxu0 0
        %343 = vmatprep.subr.bf16.mxu0 0
        %344 = vmatpush1.bf16.msra.mxu0 0
        %345 = vmatprep.subr.bf16.mxu0 0
        %346 = vmatpush1.bf16.msra.mxu0 0
        %347 = vmatprep.subr.bf16.mxu0 0
        %348 = vmatpush1.bf16.msra.mxu0 0
        %349 = vmatprep.subr.bf16.mxu0 0
        %350 = vmatpush1.bf16.msra.mxu0 0
        %351 = vmatprep.subr.bf16.mxu0 0
        %352 = vmatpush1.bf16.msra.mxu0 0
        %353 = vmatprep.mubr.bf16.mxu0 0
        %354 = vmatmul.mubr.bf16.gmra.mrb[0].mxu0 %v254
        %v355 = vpop.f32.mrb[0].mxu0
        %v356 = vadd.f32 0.0, %v355
        %v357 = vpop.f32.mrb[0].mxu0
        %v358 = vpop.f32.mrb[0].mxu0
        %v359 = vadd.f32 0.0, %v358
        %v360 = vpop.f32.mrb[0].mxu0
        %361 = vmatprep.mubr.bf16.mxu0 0
        %362 = vmatmul.mubr.bf16.gmra.mrb[0].mxu0 %v257
        %v363 = vpop.f32.mrb[0].mxu0
        %v364 = vadd.f32 0.0, %v363
        %v365 = vpop.f32.mrb[0].mxu0
        %v366 = vpop.f32.mrb[0].mxu0
        %v367 = vpop.f32.mrb[0].mxu0
        %368 = vdwg.mxu0
        %v369 = vpack.c.bf16 %v359, %v356
        %v370 = vpack.c.bf16 %v364, %v364
        %v373 = vunpack.c.l.b16 %v369
        %v374 = vunpack.c.h.b16 %v369
        %v375 = vunpack.c.l.b16 %v370
        %v376 = vpack.c.b16 %v373, %v373
        %v377 = vpack.c.b16 %v374, %v374
        %v378 = vpack.c.b16 %v375, %v375
        %382 = vst [vmem:[%s229] sm:$0xf] %v376
        %383 = vst [vmem:[%s229 + $0x4] sm:$0xf] %v377
        %384 = vst [vmem:[%s229 + $0x8] sm:$0xf] %v378
        %s385 = sand.u32 %s120, 1
        %s386 = scalar_lea.sflag [#allocation3], %s385
        %s387 = sand.u32 %s120, 1
        %s388 = smul.addr %s387, 24
        %s389 = scalar_lea.vmem [#allocation2], %s388
        %s390 = sand.u32 %s146, 1
        %s391 = scalar_lea.sflag [#allocation5], %s390
        %s392 = sand.u32 %s146, 1
        %s393 = smul.addr %s392, 12
        %s394 = scalar_lea.vmem [#allocation4], %s393
        // Predicated region
        $region37: #{forward.11} parent=35 // pred_check
          %p395 = pneg %p130
        $region38: #{forward.11} parent=35 // pred_check_branch
          %397 = sbr.rel (%p395) target = $region40
        $region39: #{forward.11} parent=35 // pred_region
          %s398 = smul.u32 3, %s23
          %s400 = ssub.s32 384, 384
          %401 = vsyncadd %s386, %s400
          %s402 = smul.addr %s398, 128
          %s403 = scalar_lea.hbm %s4, %s402
          %s404 = sshll.u32 %s389, 4
          %s405 = int_to_ptr.vmem [resolvable:$true] %s404
          %410 = dma.vmem_to_hbm [thread:$0]  %s405, 384, %s403, %s386, 128, 128, 8
        $region40: #{forward.11} parent=35 // pred_fallthru
          _
        // Predicated region
        $region41: #{forward.11} parent=35 // pred_check
          %p411 = pneg %p156
        $region42: #{forward.11} parent=35 // pred_check_branch
          %413 = sbr.rel (%p411) target = $region44
        $region43: #{forward.11} parent=35 // pred_region
          %s414 = smul.u32 3, %s23
          %s416 = ssub.s32 192, 192
          %417 = vsyncadd %s391, %s416
          %s418 = smul.addr %s414, 64
          %s419 = scalar_lea.hbm %s5, %s418
          %s420 = sshll.u32 %s394, 4
          %s421 = int_to_ptr.vmem [resolvable:$true] %s420
          %426 = dma.vmem_to_hbm [thread:$0]  %s421, 192, %s419, %s391, 64, 64, 4
        $region44: #{forward.11} parent=35 // pred_fallthru
          _
      $region36: #{forward.11} parent=5 // pred_fallthru
        _
      %p427 = scmp.le.s32.totalorder 2, %s18
      // Predicated region
      $region45: #{forward.11} parent=5 // pred_check
        %p428 = pneg %p427
      $region46: #{forward.11} parent=5 // pred_check_branch
        %430 = sbr.rel (%p428) target = $region48
      $region47: #{forward.11} parent=5 // pred_region
        %s431 = ssub.s32 %s18, 2
        // Predicated region
        $region49: #{forward.11} parent=47 // pred_check
          %p432 = pneg %p136
        $region50: #{forward.11} parent=47 // pred_check_branch
          %434 = sbr.rel (%p432) target = $region52
        $region51: #{forward.11} parent=47 // pred_region
          %s435 = sand.u32 %s121, 1
          %s436 = scalar_lea.sflag [#allocation3], %s435
          %s437 = sand.u32 %s121, 1
          %s438 = smul.addr %s437, 24
          %s439 = scalar_lea.vmem [#allocation2], %s438
          %440 = dma.done %s436, 384
        $region52: #{forward.11} parent=47 // pred_fallthru
          _
        // Predicated region
        $region53: #{forward.11} parent=47 // pred_check
          %p441 = pneg %p162
        $region54: #{forward.11} parent=47 // pred_check_branch
          %443 = sbr.rel (%p441) target = $region56
        $region55: #{forward.11} parent=47 // pred_region
          %s444 = sand.u32 %s147, 1
          %s445 = scalar_lea.sflag [#allocation5], %s444
          %s446 = sand.u32 %s147, 1
          %s447 = smul.addr %s446, 12
          %s448 = scalar_lea.vmem [#allocation4], %s447
          %449 = dma.done %s445, 192
        $region56: #{forward.11} parent=47 // pred_fallthru
          _
      $region48: #{forward.11} parent=5 // pred_fallthru
        _
    $region6: #{forward.11} parent=1 // loop_footer
      %s22 = sadd.s32 1, %s18
    $region7: #{forward.11} parent=1 // loop_footer_branch
      %17 = sbr.rel target = $region3
    $region8: #{forward.11} parent=1 // loop_exit
      _
    %450 = vsyncpa [#allocation3], 1
    %s451 = scalar_lea.sflag [#allocation3], 1
    %452 = vsyncpa %s451, 1
    %453 = vsyncpa [#allocation5], 1
    %s454 = scalar_lea.sflag [#allocation5], 1
    %455 = vsyncpa %s454, 1

// kernel: forward.13
$region0: #{forward.13}
  #allocation0 [shape = 'u32[]', space=smem, size = 0x4, offset = 0x4, fixed_abs, tag = 'smem constant byte address 0x4 - core index']
  #allocation1 [shape = 'u32[144,128]{1,0:T(1,128)}', space=vmem, size = 0x12000, scoped, tag = 'internal scratch']
  %s0 = inlined_call_operand.vmem [shape: f32[48,35], index: 0, kind: input, shape index: {}]
  %s1 = inlined_call_operand.vmem [shape: f32[2,1,24], index: 1, kind: input, shape index: {}]
  %s2 = inlined_call_operand.vmem [shape: f32[2,24,24], index: 2, kind: output, shape index: {}]
  %s3 = sld [smem:[#allocation0]]
  $region41: #{forward.13} parent=0
    _
  %s5 = ssub.s32 1, %s3
  %s6 = scalar_select 0, %s5, %s3
  loop: start=0, step=1, limit=4
  $region2: #{forward.13} parent=0 // loop_pre_header
    _
  $region3: #{forward.13} parent=0 // loop_header
    %s8 = sphi 0, %s12
    %p9 = scmp.ge.s32.totalorder %s8, 4
    %s18 = sphi 0, %s20
    %s21 = sphi 0, %s18
    %s22 = sphi 0, %s21
    %s38 = sphi 0, %s22
    %s44 = sphi 0, %s46
    %s47 = sphi 0, %s44
    %s48 = sphi 0, %s47
    %s64 = sphi 0, %s48
    %s70 = sphi 0, %s72
    %s73 = sphi 0, %s70
    %s74 = sphi 0, %s73
    %s90 = sphi 0, %s74
  $region4: #{forward.13} parent=0 // loop_header_branch
    %11 = sbr.rel (%p9) target = $region8
  $region5: #{forward.13} parent=0 // loop_body
    %s13 = ssub.s32 %s8, 1
    %s14 = ssub.s32 %s8, 2
    %s15 = sadd.s32 %s8, 1
    %s16 = ssub.s32 %s8, %s15
    %p17 = scmp.eq.s32.totalorder %s16, 0
    %s19 = sadd.s32 %s18, 1
    %s20 = scalar_select %p17, %s18, %s19
    %p23 = pneg %p17
    %p24 = scmp.eq.s32.totalorder %s8, 1
    %p25 = por %p23, %p24
    %p26 = scmp.ne.s32.totalorder %s18, %s21
    %p27 = scmp.eq.s32.totalorder %s8, 0
    %p28 = por %p26, %p27
    %p29 = scmp.ne.s32.totalorder %s18, %s21
    %p30 = scmp.eq.s32.totalorder %s13, 1
    %p31 = por %p29, %p30
    %p32 = scmp.ne.s32.totalorder %s21, %s22
    %p33 = scmp.eq.s32.totalorder %s13, 0
    %p34 = por %p32, %p33
    %p35 = scmp.ne.s32.totalorder %s21, %s22
    %p36 = scmp.eq.s32.totalorder %s14, 1
    %p37 = por %p35, %p36
    %p39 = scmp.ne.s32.totalorder %s22, %s38
    %p40 = scmp.eq.s32.totalorder %s14, 0
    %p41 = por %p39, %p40
    %s42 = ssub.s32 %s8, %s15
    %p43 = scmp.eq.s32.totalorder %s42, 0
    %s45 = sadd.s32 %s44, 1
    %s46 = scalar_select %p43, %s44, %s45
    %p49 = pneg %p43
    %p50 = scmp.eq.s32.totalorder %s8, 1
    %p51 = por %p49, %p50
    %p52 = scmp.ne.s32.totalorder %s44, %s47
    %p53 = scmp.eq.s32.totalorder %s8, 0
    %p54 = por %p52, %p53
    %p55 = scmp.ne.s32.totalorder %s44, %s47
    %p56 = scmp.eq.s32.totalorder %s13, 1
    %p57 = por %p55, %p56
    %p58 = scmp.ne.s32.totalorder %s47, %s48
    %p59 = scmp.eq.s32.totalorder %s13, 0
    %p60 = por %p58, %p59
    %p61 = scmp.ne.s32.totalorder %s47, %s48
    %p62 = scmp.eq.s32.totalorder %s14, 1
    %p63 = por %p61, %p62
    %p65 = scmp.ne.s32.totalorder %s48, %s64
    %p66 = scmp.eq.s32.totalorder %s14, 0
    %p67 = por %p65, %p66
    %s68 = ssub.s32 %s8, %s15
    %p69 = scmp.eq.s32.totalorder %s68, 0
    %s71 = sadd.s32 %s70, 1
    %s72 = scalar_select %p69, %s70, %s71
    %p75 = pneg %p69
    %p76 = scmp.eq.s32.totalorder %s8, 1
    %p77 = por %p75, %p76
    %p78 = scmp.ne.s32.totalorder %s70, %s73
    %p79 = scmp.eq.s32.totalorder %s8, 0
    %p80 = por %p78, %p79
    %p81 = scmp.ne.s32.totalorder %s70, %s73
    %p82 = scmp.eq.s32.totalorder %s13, 1
    %p83 = por %p81, %p82
    %p84 = scmp.ne.s32.totalorder %s73, %s74
    %p85 = scmp.eq.s32.totalorder %s13, 0
    %p86 = por %p84, %p85
    %p87 = scmp.ne.s32.totalorder %s73, %s74
    %p88 = scmp.eq.s32.totalorder %s14, 1
    %p89 = por %p87, %p88
    %p91 = scmp.ne.s32.totalorder %s74, %s90
    %p92 = scmp.eq.s32.totalorder %s14, 0
    %p93 = por %p91, %p92
    %p94 = scmp.le.s32.totalorder 1, %s8
    %p95 = scmp.lt.s32.totalorder %s8, 3
    %p96 = pnand %p94, %p95
    %p97 = pneg %p96
    // Predicated region
    $region9: #{forward.13} parent=5 // pred_check
      _
    $region10: #{forward.13} parent=5 // pred_check_branch
      %99 = sbr.rel (%p96) target = $region12
    $region11: #{forward.13} parent=5 // pred_region
      %s100 = ssub.s32 %s8, 1
    $region12: #{forward.13} parent=5 // pred_fallthru
      _
    %p101 = scmp.lt.s32.totalorder %s8, 2
    // Predicated region
    $region13: #{forward.13} parent=5 // pred_check
      %p102 = pneg %p101
    $region14: #{forward.13} parent=5 // pred_check_branch
      %104 = sbr.rel (%p102) target = $region16
    $region15: #{forward.13} parent=5 // pred_region
      // Predicated region
      $region17: #{forward.13} parent=15 // pred_check
        %p105 = pneg %p28
      $region18: #{forward.13} parent=15 // pred_check_branch
        %107 = sbr.rel (%p105) target = $region20
      $region19: #{forward.13} parent=15 // pred_region
        %s108 = smul.u32 3, %s8
        %p109 = scmp.lt.s32.totalorder %s108, 5
        %s110 = scalar_select %p109, %s108, 5
        %s111 = smul.addr %s110, 8
        %s112 = scalar_lea.vmem %s0, %s111
        %s113 = smul.u32 3, %s8
      $region20: #{forward.13} parent=15 // pred_fallthru
        _
      // Predicated region
      $region21: #{forward.13} parent=15 // pred_check
        %p114 = pneg %p54
      $region22: #{forward.13} parent=15 // pred_check_branch
        %116 = sbr.rel (%p114) target = $region24
      $region23: #{forward.13} parent=15 // pred_region
        %p117 = scmp.lt.s32.totalorder %s8, 1
        %s118 = scalar_select %p117, %s8, 1
        %s119 = scalar_lea.vmem %s1, %s118
      $region24: #{forward.13} parent=15 // pred_fallthru
        _
    $region16: #{forward.13} parent=5 // pred_fallthru
      _
    %p120 = scmp.le.s32.totalorder 1, %s8
    %p121 = scmp.lt.s32.totalorder %s8, 3
    %p122 = pnand %p120, %p121
    %p123 = pneg %p122
    // Predicated region
    $region25: #{forward.13} parent=5 // pred_check
      _
    $region26: #{forward.13} parent=5 // pred_check_branch
      %125 = sbr.rel (%p122) target = $region28
    $region27: #{forward.13} parent=5 // pred_region
      %s126 = ssub.s32 %s8, 1
      %s127 = smul.u32 3, %s13
      %p128 = scmp.lt.s32.totalorder %s127, 5
      %s129 = scalar_select %p128, %s127, 5
      %s130 = smul.addr %s129, 8
      %s131 = scalar_lea.vmem %s0, %s130
      %p132 = pneg %p34
      %p133 = pneg %p31
      %p134 = scmp.lt.s32.totalorder %s13, 1
      %s135 = scalar_select %p134, %s13, 1
      %s136 = scalar_lea.vmem %s1, %s135
      %p137 = pneg %p60
      %p138 = pneg %p57
      %p139 = pneg %p86
      %p140 = pneg %p83
      %p141 = scmp.lt.s32.totalorder %s13, 1
      %s142 = scalar_select %p141, %s13, 1
      %s143 = smul.addr %s142, 3
      %s144 = smul.addr %s143, 8
      %s145 = scalar_lea.vmem %s2, %s144
      %s146 = smul.u32 3, %s13
      %p147 = scmp.lt.s32.totalorder %s146, 5
      %s148 = scalar_select %p147, %s146, 5
      %s149 = smul.addr %s148, 8
      %s150 = scalar_lea.vmem %s0, %s149
      %s151 = smul.u32 3, %s13
      %p152 = scmp.lt.s32.totalorder %s13, 1
      %s153 = scalar_select %p152, %s13, 1
      %s154 = scalar_lea.vmem %s1, %s153
      %p155 = scmp.lt.s32.totalorder %s13, 1
      %s156 = scalar_select %p155, %s13, 1
      %s157 = smul.addr %s156, 3
      %s158 = smul.addr %s157, 8
      %s159 = scalar_lea.vmem %s2, %s158
      %v161 = vld [vmem:[%s150] sm:$0xff]
      %v162 = vld [vmem:[%s150 + $0x8] sm:$0xff]
      %v163 = vld [vmem:[%s150 + $0x10] sm:$0xff]
      %v164 = vpack.c.bf16 %v162, %v161
      %v165 = vpack.c.bf16 %v163, %v163
      %vm166 = vcmask 285696
      %v168 = vsel %vm166, %v164, 0
      %v171 = vsel %vm166, %v165, 0
      %173 = vmatprep.subr.bf16.mxu0 0
      %174 = vmatpush1.bf16.xpose.msra.mxu0 %v168
      %175 = vmatprep.subr.bf16.mxu0 0
      %176 = vmatpush1.bf16.xpose.msra.mxu0 %v171
      %177 = vmatprep.subr.bf16.mxu0 0
      %178 = vmatpush1.bf16.xpose.msra.mxu0 0
      %179 = vmatprep.subr.bf16.mxu0 0
      %180 = vmatpush1.bf16.xpose.msra.mxu0 0
      %181 = vmatprep.subr.bf16.mxu0 0
      %182 = vmatpush1.bf16.xpose.msra.mxu0 0
      %183 = vmatprep.subr.bf16.mxu0 0
      %184 = vmatpush1.bf16.xpose.msra.mxu0 0
      %185 = vmatprep.subr.bf16.mxu0 0
      %186 = vmatpush1.bf16.xpose.msra.mxu0 0
      %187 = vmatprep.subr.bf16.mxu0 0
      %188 = vmatpush1.bf16.xpose.msra.mxu0 0
      %189 = vmatprep.subr.bf16.mxu0 0
      %190 = vmatpush1.bf16.xpose.msra.mxu0 0
      %191 = vmatprep.subr.bf16.mxu0 0
      %192 = vmatpush1.bf16.xpose.msra.mxu0 0
      %193 = vmatprep.subr.bf16.mxu0 0
      %194 = vmatpush1.bf16.xpose.msra.mxu0 0
      %195 = vmatprep.subr.bf16.mxu0 0
      %196 = vmatpush1.bf16.xpose.msra.mxu0 0
      %197 = vmatprep.subr.bf16.mxu0 0
      %198 = vmatpush1.bf16.xpose.msra.mxu0 0
      %199 = vmatprep.subr.bf16.mxu0 0
      %200 = vmatpush1.bf16.xpose.msra.mxu0 0
      %201 = vmatprep.subr.bf16.mxu0 0
      %202 = vmatpush1.bf16.xpose.msra.mxu0 0
      %203 = vmatprep.subr.bf16.mxu0 0
      %204 = vmatpush1.bf16.xpose.msra.mxu0 0
      %205 = vmatprep.mubr.bf16.mxu0 0
      %206 = vmatmul.mubr.bf16.gmra.mrb[0].mxu0 %v168
      %v207 = vpop.f32.mrb[0].mxu0
      %v208 = vadd.f32 0.0, %v207
      %v209 = vpop.f32.mrb[0].mxu0
      %v210 = vpop.f32.mrb[0].mxu0
      %v211 = vadd.f32 0.0, %v210
      %v212 = vpop.f32.mrb[0].mxu0
      %213 = vmatprep.mubr.bf16.mxu0 0
      %214 = vmatmul.mubr.bf16.gmra.mrb[0].mxu0 %v171
      %v215 = vpop.f32.mrb[0].mxu0
      %v216 = vadd.f32 0.0, %v215
      %v217 = vpop.f32.mrb[0].mxu0
      %v218 = vpop.f32.mrb[0].mxu0
      %v219 = vpop.f32.mrb[0].mxu0
      %220 = vdwg.mxu0
      %v221 = vld [vmem:[%s154] sm:$0x1]
      %v222 = vmul.f32 %v208, 2.0
      %v223 = vmul.f32 %v211, 2.0
      %v224 = vmul.f32 %v216, 2.0
      %v226 = vlaneseq
      %v227 = vshrl.u32 %v226, 7
      %v228 = vsub.s32 0, %v227
      %v229 = vrot.slane %v221, %v228
      %v231 = vsub.f32 %v229, %v222
      %v232 = vsub.f32 %v229, %v223
      %v233 = vsub.f32 %v229, %v224
      %vm234 = vcmask 195584
      %235 = vst.msk [vmem:[%s159] sm:$0xff] %vm234, %v231
      %236 = vst.msk [vmem:[%s159 + $0x8] sm:$0xff] %vm234, %v232
      %237 = vst.msk [vmem:[%s159 + $0x10] sm:$0xff] %vm234, %v233
      %p238 = scmp.lt.s32.totalorder %s13, 1
      %s239 = scalar_select %p238, %s13, 1
      %s240 = smul.addr %s239, 3
      %s241 = smul.addr %s240, 8
      %s242 = scalar_lea.vmem %s2, %s241
      // Predicated region
      $region29: #{forward.13} parent=27 // pred_check
        %p243 = pneg %p83
      $region30: #{forward.13} parent=27 // pred_check_branch
        %245 = sbr.rel (%p243) target = $region32
      $region31: #{forward.13} parent=27 // pred_region
        _
      $region32: #{forward.13} parent=27 // pred_fallthru
        _
    $region28: #{forward.13} parent=5 // pred_fallthru
      _
    %p246 = scmp.le.s32.totalorder 2, %s8
    // Predicated region
    $region33: #{forward.13} parent=5 // pred_check
      %p247 = pneg %p246
    $region34: #{forward.13} parent=5 // pred_check_branch
      %249 = sbr.rel (%p247) target = $region36
    $region35: #{forward.13} parent=5 // pred_region
      %s250 = ssub.s32 %s8, 2
      // Predicated region
      $region37: #{forward.13} parent=35 // pred_check
        %p251 = pneg %p89
      $region38: #{forward.13} parent=35 // pred_check_branch
        %253 = sbr.rel (%p251) target = $region40
      $region39: #{forward.13} parent=35 // pred_region
        %p254 = scmp.lt.s32.totalorder %s14, 1
        %s255 = scalar_select %p254, %s14, 1
        %s256 = smul.addr %s255, 3
        %s257 = smul.addr %s256, 8
        %s258 = scalar_lea.vmem %s2, %s257
      $region40: #{forward.13} parent=35 // pred_fallthru
        _
    $region36: #{forward.13} parent=5 // pred_fallthru
      _
  $region6: #{forward.13} parent=0 // loop_footer
    %s12 = sadd.s32 1, %s8
  $region7: #{forward.13} parent=0 // loop_footer_branch
    %7 = sbr.rel target = $region3
  $region8: #{forward.13} parent=0 // loop_exit
    _

// kernel: forward.14
$region0: #{forward.14}
  #allocation0 [shape = 'u32[]', space=smem, size = 0x4, offset = 0x4, fixed_abs, tag = 'smem constant byte address 0x4 - core index']
  #allocation1 [shape = 'u32[144,128]{1,0:T(1,128)}', space=vmem, size = 0x12000, scoped, tag = 'internal scratch']
  %s0 = inlined_call_operand.vmem [shape: f32[48,35], index: 0, kind: input, shape index: {}]
  %s1 = inlined_call_operand.vmem [shape: bf16[35,128], index: 1, kind: input, shape index: {}]
  %s2 = inlined_call_operand.vmem [shape: bf16[35,128], index: 2, kind: input, shape index: {}]
  %s3 = inlined_call_operand.vmem [shape: f32[1,128], index: 3, kind: input, shape index: {}]
  %s4 = inlined_call_operand.hbm [shape: f32[48,128], index: 4, kind: output, shape index: {0}]
  %s5 = inlined_call_operand.hbm [shape: bf16[48,128], index: 5, kind: output, shape index: {1}]
  %6 = xla_tuple %s4, %s5
  %s7 = sld [smem:[#allocation0]]
  $region57: #{forward.14} parent=0
    _
  %s9 = ssub.s32 1, %s7
  %s10 = scalar_select 0, %s9, %s7
  $region1: #{forward.14} parent=0
    #allocation2 [shape = 'u8[24576]{0}', space=vmem, size = 0x6000, scoped, tag = 'output window, operand 0']
    #allocation3 [shape = 's32[2]{0}', space=sflag, size = 0x8, scoped, tag = 'scoped memory for forward.14']
    #allocation4 [shape = 'u8[12288]{0}', space=vmem, size = 0x3000, scoped, tag = 'output window, operand 1']
    #allocation5 [shape = 's32[2]{0}', space=sflag, size = 0x8, scoped, tag = 'scoped memory for forward.14']
    %11 = vsyncpa [#allocation3], 0
    %s12 = scalar_lea.sflag [#allocation3], 1
    %13 = vsyncpa %s12, 0
    %14 = vsyncpa [#allocation5], 0
    %s15 = scalar_lea.sflag [#allocation5], 1
    %16 = vsyncpa %s15, 0
    loop: start=0, step=1, limit=4
    $region2: #{forward.14} parent=1 // loop_pre_header
      _
    $region3: #{forward.14} parent=1 // loop_header
      %s18 = sphi 0, %s22
      %p19 = scmp.ge.s32.totalorder %s18, 4
      %s28 = sphi 0, %s30
      %s31 = sphi 0, %s28
      %s32 = sphi 0, %s31
      %s48 = sphi 0, %s32
      %s52 = sphi 0, %s52
      %s54 = sphi 0, %s52
      %s55 = sphi 0, %s54
      %s69 = sphi 0, %s55
      %s73 = sphi 0, %s73
      %s75 = sphi 0, %s73
      %s76 = sphi 0, %s75
      %s90 = sphi 0, %s76
      %s94 = sphi 0, %s94
      %s96 = sphi 0, %s94
      %s97 = sphi 0, %s96
      %s111 = sphi 0, %s97
      %s117 = sphi 0, %s119
      %s120 = sphi 0, %s117
      %s121 = sphi 0, %s120
      %s137 = sphi 0, %s121
      %s143 = sphi 0, %s145
      %s146 = sphi 0, %s143
      %s147 = sphi 0, %s146
      %s163 = sphi 0, %s147
    $region4: #{forward.14} parent=1 // loop_header_branch
      %21 = sbr.rel (%p19) target = $region8
    $region5: #{forward.14} parent=1 // loop_body
      %s23 = ssub.s32 %s18, 1
      %s24 = ssub.s32 %s18, 2
      %s25 = sadd.s32 %s18, 1
      %s26 = ssub.s32 %s18, %s25
      %p27 = scmp.eq.s32.totalorder %s26, 0
      %s29 = sadd.s32 %s28, 1
      %s30 = scalar_select %p27, %s28, %s29
      %p33 = pneg %p27
      %p34 = scmp.eq.s32.totalorder %s18, 1
      %p35 = por %p33, %p34
      %p36 = scmp.ne.s32.totalorder %s28, %s31
      %p37 = scmp.eq.s32.totalorder %s18, 0
      %p38 = por %p36, %p37
      %p39 = scmp.ne.s32.totalorder %s28, %s31
      %p40 = scmp.eq.s32.totalorder %s23, 1
      %p41 = por %p39, %p40
      %p42 = scmp.ne.s32.totalorder %s31, %s32
      %p43 = scmp.eq.s32.totalorder %s23, 0
      %p44 = por %p42, %p43
      %p45 = scmp.ne.s32.totalorder %s31, %s32
      %p46 = scmp.eq.s32.totalorder %s24, 1
      %p47 = por %p45, %p46
      %p49 = scmp.ne.s32.totalorder %s32, %s48
      %p50 = scmp.eq.s32.totalorder %s24, 0
      %p51 = por %p49, %p50
      %s53 = sadd.s32 %s52, 1
      %p56 = scmp.eq.s32.totalorder %s18, 1
      %p57 = scmp.ne.s32.totalorder %s52, %s54
      %p58 = scmp.eq.s32.totalorder %s18, 0
      %p59 = por %p57, %p58
      %p60 = scmp.ne.s32.totalorder %s52, %s54
      %p61 = scmp.eq.s32.totalorder %s23, 1
      %p62 = por %p60, %p61
      %p63 = scmp.ne.s32.totalorder %s54, %s55
      %p64 = scmp.eq.s32.totalorder %s23, 0
      %p65 = por %p63, %p64
      %p66 = scmp.ne.s32.totalorder %s54, %s55
      %p67 = scmp.eq.s32.totalorder %s24, 1
      %p68 = por %p66, %p67
      %p70 = scmp.ne.s32.totalorder %s55, %s69
      %p71 = scmp.eq.s32.totalorder %s24, 0
      %p72 = por %p70, %p71
      %s74 = sadd.s32 %s73, 1
      %p77 = scmp.eq.s32.totalorder %s18, 1
      %p78 = scmp.ne.s32.totalorder %s73, %s75
      %p79 = scmp.eq.s32.totalorder %s18, 0
      %p80 = por %p78, %p79
      %p81 = scmp.ne.s32.totalorder %s73, %s75
      %p82 = scmp.eq.s32.totalorder %s23, 1
      %p83 = por %p81, %p82
      %p84 = scmp.ne.s32.totalorder %s75, %s76
      %p85 = scmp.eq.s32.totalorder %s23, 0
      %p86 = por %p84, %p85
      %p87 = scmp.ne.s32.totalorder %s75, %s76
      %p88 = scmp.eq.s32.totalorder %s24, 1
      %p89 = por %p87, %p88
      %p91 = scmp.ne.s32.totalorder %s76, %s90
      %p92 = scmp.eq.s32.totalorder %s24, 0
      %p93 = por %p91, %p92
      %s95 = sadd.s32 %s94, 1
      %p98 = scmp.eq.s32.totalorder %s18, 1
      %p99 = scmp.ne.s32.totalorder %s94, %s96
      %p100 = scmp.eq.s32.totalorder %s18, 0
      %p101 = por %p99, %p100
      %p102 = scmp.ne.s32.totalorder %s94, %s96
      %p103 = scmp.eq.s32.totalorder %s23, 1
      %p104 = por %p102, %p103
      %p105 = scmp.ne.s32.totalorder %s96, %s97
      %p106 = scmp.eq.s32.totalorder %s23, 0
      %p107 = por %p105, %p106
      %p108 = scmp.ne.s32.totalorder %s96, %s97
      %p109 = scmp.eq.s32.totalorder %s24, 1
      %p110 = por %p108, %p109
      %p112 = scmp.ne.s32.totalorder %s97, %s111
      %p113 = scmp.eq.s32.totalorder %s24, 0
      %p114 = por %p112, %p113
      %s115 = ssub.s32 %s18, %s25
      %p116 = scmp.eq.s32.totalorder %s115, 0
      %s118 = sadd.s32 %s117, 1
      %s119 = scalar_select %p116, %s117, %s118
      %p122 = pneg %p116
      %p123 = scmp.eq.s32.totalorder %s18, 1
      %p124 = por %p122, %p123
      %p125 = scmp.ne.s32.totalorder %s117, %s120
      %p126 = scmp.eq.s32.totalorder %s18, 0
      %p127 = por %p125, %p126
      %p128 = scmp.ne.s32.totalorder %s117, %s120
      %p129 = scmp.eq.s32.totalorder %s23, 1
      %p130 = por %p128, %p129
      %p131 = scmp.ne.s32.totalorder %s120, %s121
      %p132 = scmp.eq.s32.totalorder %s23, 0
      %p133 = por %p131, %p132
      %p134 = scmp.ne.s32.totalorder %s120, %s121
      %p135 = scmp.eq.s32.totalorder %s24, 1
      %p136 = por %p134, %p135
      %p138 = scmp.ne.s32.totalorder %s121, %s137
      %p139 = scmp.eq.s32.totalorder %s24, 0
      %p140 = por %p138, %p139
      %s141 = ssub.s32 %s18, %s25
      %p142 = scmp.eq.s32.totalorder %s141, 0
      %s144 = sadd.s32 %s143, 1
      %s145 = scalar_select %p142, %s143, %s144
      %p148 = pneg %p142
      %p149 = scmp.eq.s32.totalorder %s18, 1
      %p150 = por %p148, %p149
      %p151 = scmp.ne.s32.totalorder %s143, %s146
      %p152 = scmp.eq.s32.totalorder %s18, 0
      %p153 = por %p151, %p152
      %p154 = scmp.ne.s32.totalorder %s143, %s146
      %p155 = scmp.eq.s32.totalorder %s23, 1
      %p156 = por %p154, %p155
      %p157 = scmp.ne.s32.totalorder %s146, %s147
      %p158 = scmp.eq.s32.totalorder %s23, 0
      %p159 = por %p157, %p158
      %p160 = scmp.ne.s32.totalorder %s146, %s147
      %p161 = scmp.eq.s32.totalorder %s24, 1
      %p162 = por %p160, %p161
      %p164 = scmp.ne.s32.totalorder %s147, %s163
      %p165 = scmp.eq.s32.totalorder %s24, 0
      %p166 = por %p164, %p165
      %p167 = scmp.le.s32.totalorder 1, %s18
      %p168 = scmp.lt.s32.totalorder %s18, 3
      %p169 = pnand %p167, %p168
      %p170 = pneg %p169
      // Predicated region
      $region9: #{forward.14} parent=5 // pred_check
        _
      $region10: #{forward.14} parent=5 // pred_check_branch
        %172 = sbr.rel (%p169) target = $region12
      $region11: #{forward.14} parent=5 // pred_region
        %s173 = ssub.s32 %s18, 1
        // Predicated region
        $region13: #{forward.14} parent=11 // pred_check
          %p174 = pneg %p65
        $region14: #{forward.14} parent=11 // pred_check_branch
          %176 = sbr.rel (%p174) target = $region16
        $region15: #{forward.14} parent=11 // pred_region
          _
        $region16: #{forward.14} parent=11 // pred_fallthru
          _
        // Predicated region
        $region17: #{forward.14} parent=11 // pred_check
          %p177 = pneg %p86
        $region18: #{forward.14} parent=11 // pred_check_branch
          %179 = sbr.rel (%p177) target = $region20
        $region19: #{forward.14} parent=11 // pred_region
          _
        $region20: #{forward.14} parent=11 // pred_fallthru
          _
        // Predicated region
        $region21: #{forward.14} parent=11 // pred_check
          %p180 = pneg %p107
        $region22: #{forward.14} parent=11 // pred_check_branch
          %182 = sbr.rel (%p180) target = $region24
        $region23: #{forward.14} parent=11 // pred_region
          _
        $region24: #{forward.14} parent=11 // pred_fallthru
          _
      $region12: #{forward.14} parent=5 // pred_fallthru
        _
      %p183 = scmp.lt.s32.totalorder %s18, 2
      // Predicated region
      $region25: #{forward.14} parent=5 // pred_check
        %p184 = pneg %p183
      $region26: #{forward.14} parent=5 // pred_check_branch
        %186 = sbr.rel (%p184) target = $region28
      $region27: #{forward.14} parent=5 // pred_region
        // Predicated region
        $region29: #{forward.14} parent=27 // pred_check
          %p187 = pneg %p38
        $region30: #{forward.14} parent=27 // pred_check_branch
          %189 = sbr.rel (%p187) target = $region32
        $region31: #{forward.14} parent=27 // pred_region
          %s190 = smul.u32 3, %s18
          %p191 = scmp.lt.s32.totalorder %s190, 5
          %s192 = scalar_select %p191, %s190, 5
          %s193 = smul.addr %s192, 8
          %s194 = scalar_lea.vmem %s0, %s193
          %s195 = smul.u32 3, %s18
        $region32: #{forward.14} parent=27 // pred_fallthru
          _
      $region28: #{forward.14} parent=5 // pred_fallthru
        _
      %p196 = scmp.le.s32.totalorder 1, %s18
      %p197 = scmp.lt.s32.totalorder %s18, 3
      %p198 = pnand %p196, %p197
      %p199 = pneg %p198
      // Predicated region
      $region33: #{forward.14} parent=5 // pred_check
        _
      $region34: #{forward.14} parent=5 // pred_check_branch
        %201 = sbr.rel (%p198) target = $region36
      $region35: #{forward.14} parent=5 // pred_region
        %s202 = ssub.s32 %s18, 1
        %s203 = smul.u32 3, %s23
        %p204 = scmp.lt.s32.totalorder %s203, 5
        %s205 = scalar_select %p204, %s203, 5
        %s206 = smul.addr %s205, 8
        %s207 = scalar_lea.vmem %s0, %s206
        %p208 = pneg %p44
        %p209 = pneg %p41
        %p210 = pneg %p65
        %p211 = pneg %p62
        %p212 = pneg %p86
        %p213 = pneg %p83
        %p214 = pneg %p107
        %p215 = pneg %p104
        %p216 = pneg %p133
        %p217 = pneg %p130
        %s218 = sand.u32 %s120, 1
        %s219 = scalar_lea.sflag [#allocation3], %s218
        %s220 = sand.u32 %s120, 1
        %s221 = smul.addr %s220, 24
        %s222 = scalar_lea.vmem [#allocation2], %s221
        %p223 = pneg %p159
        %p224 = pneg %p156
        %s225 = sand.u32 %s146, 1
        %s226 = scalar_lea.sflag [#allocation5], %s225
        %s227 = sand.u32 %s146, 1
        %s228 = smul.addr %s227, 12
        %s229 = scalar_lea.vmem [#allocation4], %s228
        %s230 = smul.u32 3, %s23
        %p231 = scmp.lt.s32.totalorder %s230, 5
        %s232 = scalar_select %p231, %s230, 5
        %s233 = smul.addr %s232, 8
        %s234 = scalar_lea.vmem %s0, %s233
        %s235 = smul.u32 3, %s23
        %s236 = smul.u32 3, %s23
        %s237 = smul.u32 3, %s23
        %v239 = vld [vmem:[%s234] sm:$0xff]
        %v240 = vld [vmem:[%s234 + $0x8] sm:$0xff]
        %v241 = vld [vmem:[%s234 + $0x10] sm:$0xff]
        %v242 = vpack.c.bf16 %v240, %v239
        %v243 = vpack.c.bf16 %v241, %v241
        %v244 = vld [vmem:[%s1] sm:$0xf]
        %v245 = vld [vmem:[%s1 + $0x4] sm:$0xf]
        %v246 = vld [vmem:[%s1 + $0x8] sm:$0xf]
        %v247 = vld [vmem:[%s1 + $0xc] sm:$0xf]
        %v248 = vld [vmem:[%s1 + $0x10] sm:$0x3]
        %v249 = vld [vmem:[%s3] sm:$0x1]
        %v251 = vlaneseq
        %v252 = vshrl.u32 %v251, 7
        %v253 = vsub.s32 0, %v252
        %v254 = vrot.slane %v249, %v253
        %v261 = vunpack.c.l.b16 %v244
        %v262 = vunpack.c.l.b16 %v245
        %v263 = vunpack.c.l.b16 %v246
        %v264 = vunpack.c.l.b16 %v247
        %v265 = vunpack.c.l.b16 %v248
        %v266 = vpack.c.b16 %v262, %v261
        %v267 = vpack.c.b16 %v264, %v263
        %v268 = vpack.c.b16 %v265, %v265
        %vm271 = vcmask 285696
        %v273 = vsel %vm271, %v242, 0
        %v276 = vsel %vm271, %v243, 0
        %vm278 = vcmask 1040384
        %vm279 = vcmask 1041408
        %v280 = vsel %vm278, 4294967295, 65535
        %v281 = vsel %vm279, %v280, 0
        %v283 = vand.u32 %v268, %v281
        %285 = vmatprep.subr.bf16.mxu0 0
        %286 = vmatpush1.bf16.msra.mxu0 %v266
        %287 = vmatprep.subr.bf16.mxu0 0
        %288 = vmatpush1.bf16.msra.mxu0 %v267
        %289 = vmatprep.subr.bf16.mxu0 0
        %290 = vmatpush1.bf16.msra.mxu0 %v283
        %291 = vmatprep.subr.bf16.mxu0 0
        %292 = vmatpush1.bf16.msra.mxu0 0
        %293 = vmatprep.subr.bf16.mxu0 0
        %294 = vmatpush1.bf16.msra.mxu0 0
        %295 = vmatprep.subr.bf16.mxu0 0
        %296 = vmatpush1.bf16.msra.mxu0 0
        %297 = vmatprep.subr.bf16.mxu0 0
        %298 = vmatpush1.bf16.msra.mxu0 0
        %299 = vmatprep.subr.bf16.mxu0 0
        %300 = vmatpush1.bf16.msra.mxu0 0
        %301 = vmatprep.subr.bf16.mxu0 0
        %302 = vmatpush1.bf16.msra.mxu0 0
        %303 = vmatprep.subr.bf16.mxu0 0
        %304 = vmatpush1.bf16.msra.mxu0 0
        %305 = vmatprep.subr.bf16.mxu0 0
        %306 = vmatpush1.bf16.msra.mxu0 0
        %307 = vmatprep.subr.bf16.mxu0 0
        %308 = vmatpush1.bf16.msra.mxu0 0
        %309 = vmatprep.subr.bf16.mxu0 0
        %310 = vmatpush1.bf16.msra.mxu0 0
        %311 = vmatprep.subr.bf16.mxu0 0
        %312 = vmatpush1.bf16.msra.mxu0 0
        %313 = vmatprep.subr.bf16.mxu0 0
        %314 = vmatpush1.bf16.msra.mxu0 0
        %315 = vmatprep.subr.bf16.mxu0 0
        %316 = vmatpush1.bf16.msra.mxu0 0
        %317 = vmatprep.mubr.bf16.mxu0 0
        %318 = vmatmul.mubr.bf16.gmra.mrb[0].mxu0 %v273
        %v319 = vpop.f32.mrb[0].mxu0
        %v320 = vadd.f32 %v254, %v319
        %v321 = vpop.f32.mrb[0].mxu0
        %v322 = vpop.f32.mrb[0].mxu0
        %v323 = vadd.f32 %v254, %v322
        %v324 = vpop.f32.mrb[0].mxu0
        %325 = vmatprep.mubr.bf16.mxu0 0
        %326 = vmatmul.mubr.bf16.gmra.mrb[0].mxu0 %v276
        %v327 = vpop.f32.mrb[0].mxu0
        %v328 = vadd.f32 %v254, %v327
        %v329 = vpop.f32.mrb[0].mxu0
        %v330 = vpop.f32.mrb[0].mxu0
        %v331 = vpop.f32.mrb[0].mxu0
        %332 = vdwg.mxu0
        %333 = vst [vmem:[%s222] sm:$0xff] %v320
        %334 = vst [vmem:[%s222 + $0x8] sm:$0xff] %v323
        %335 = vst [vmem:[%s222 + $0x10] sm:$0xff] %v328
        %v336 = vld [vmem:[%s2] sm:$0xf]
        %v337 = vld [vmem:[%s2 + $0x4] sm:$0xf]
        %v338 = vld [vmem:[%s2 + $0x8] sm:$0xf]
        %v339 = vld [vmem:[%s2 + $0xc] sm:$0xf]
        %v340 = vld [vmem:[%s2 + $0x10] sm:$0x3]
        %v346 = vunpack.c.l.b16 %v336
        %v347 = vunpack.c.l.b16 %v337
        %v348 = vunpack.c.l.b16 %v338
        %v349 = vunpack.c.l.b16 %v339
        %v350 = vunpack.c.l.b16 %v340
        %v351 = vpack.c.b16 %v347, %v346
        %v352 = vpack.c.b16 %v349, %v348
        %v353 = vpack.c.b16 %v350, %v350
        %v357 = vand.u32 %v353, %v281
        %359 = vmatprep.subr.bf16.mxu0 0
        %360 = vmatpush1.bf16.msra.mxu0 %v351
        %361 = vmatprep.subr.bf16.mxu0 0
        %362 = vmatpush1.bf16.msra.mxu0 %v352
        %363 = vmatprep.subr.bf16.mxu0 0
        %364 = vmatpush1.bf16.msra.mxu0 %v357
        %365 = vmatprep.subr.bf16.mxu0 0
        %366 = vmatpush1.bf16.msra.mxu0 0
        %367 = vmatprep.subr.bf16.mxu0 0
        %368 = vmatpush1.bf16.msra.mxu0 0
        %369 = vmatprep.subr.bf16.mxu0 0
        %370 = vmatpush1.bf16.msra.mxu0 0
        %371 = vmatprep.subr.bf16.mxu0 0
        %372 = vmatpush1.bf16.msra.mxu0 0
        %373 = vmatprep.subr.bf16.mxu0 0
        %374 = vmatpush1.bf16.msra.mxu0 0
        %375 = vmatprep.subr.bf16.mxu0 0
        %376 = vmatpush1.bf16.msra.mxu0 0
        %377 = vmatprep.subr.bf16.mxu0 0
        %378 = vmatpush1.bf16.msra.mxu0 0
        %379 = vmatprep.subr.bf16.mxu0 0
        %380 = vmatpush1.bf16.msra.mxu0 0
        %381 = vmatprep.subr.bf16.mxu0 0
        %382 = vmatpush1.bf16.msra.mxu0 0
        %383 = vmatprep.subr.bf16.mxu0 0
        %384 = vmatpush1.bf16.msra.mxu0 0
        %385 = vmatprep.subr.bf16.mxu0 0
        %386 = vmatpush1.bf16.msra.mxu0 0
        %387 = vmatprep.subr.bf16.mxu0 0
        %388 = vmatpush1.bf16.msra.mxu0 0
        %389 = vmatprep.subr.bf16.mxu0 0
        %390 = vmatpush1.bf16.msra.mxu0 0
        %391 = vmatprep.mubr.bf16.mxu0 0
        %392 = vmatmul.mubr.bf16.gmra.mrb[0].mxu0 %v273
        %v393 = vpop.f32.mrb[0].mxu0
        %v394 = vadd.f32 0.0, %v393
        %v395 = vpop.f32.mrb[0].mxu0
        %v396 = vpop.f32.mrb[0].mxu0
        %v397 = vadd.f32 0.0, %v396
        %v398 = vpop.f32.mrb[0].mxu0
        %399 = vmatprep.mubr.bf16.mxu0 0
        %400 = vmatmul.mubr.bf16.gmra.mrb[0].mxu0 %v276
        %v401 = vpop.f32.mrb[0].mxu0
        %v402 = vadd.f32 0.0, %v401
        %v403 = vpop.f32.mrb[0].mxu0
        %v404 = vpop.f32.mrb[0].mxu0
        %v405 = vpop.f32.mrb[0].mxu0
        %406 = vdwg.mxu0
        %v407 = vpack.c.bf16 %v397, %v394
        %v408 = vpack.c.bf16 %v402, %v402
        %v411 = vunpack.c.l.b16 %v407
        %v412 = vunpack.c.h.b16 %v407
        %v413 = vunpack.c.l.b16 %v408
        %v414 = vpack.c.b16 %v411, %v411
        %v415 = vpack.c.b16 %v412, %v412
        %v416 = vpack.c.b16 %v413, %v413
        %420 = vst [vmem:[%s229] sm:$0xf] %v414
        %421 = vst [vmem:[%s229 + $0x4] sm:$0xf] %v415
        %422 = vst [vmem:[%s229 + $0x8] sm:$0xf] %v416
        %s423 = sand.u32 %s120, 1
        %s424 = scalar_lea.sflag [#allocation3], %s423
        %s425 = sand.u32 %s120, 1
        %s426 = smul.addr %s425, 24
        %s427 = scalar_lea.vmem [#allocation2], %s426
        %s428 = sand.u32 %s146, 1
        %s429 = scalar_lea.sflag [#allocation5], %s428
        %s430 = sand.u32 %s146, 1
        %s431 = smul.addr %s430, 12
        %s432 = scalar_lea.vmem [#allocation4], %s431
        // Predicated region
        $region37: #{forward.14} parent=35 // pred_check
          %p433 = pneg %p130
        $region38: #{forward.14} parent=35 // pred_check_branch
          %435 = sbr.rel (%p433) target = $region40
        $region39: #{forward.14} parent=35 // pred_region
          %s436 = smul.u32 3, %s23
          %s438 = ssub.s32 384, 384
          %439 = vsyncadd %s424, %s438
          %s440 = smul.addr %s436, 128
          %s441 = scalar_lea.hbm %s4, %s440
          %s442 = sshll.u32 %s427, 4
          %s443 = int_to_ptr.vmem [resolvable:$true] %s442
          %448 = dma.vmem_to_hbm [thread:$0]  %s443, 384, %s441, %s424, 128, 128, 8
        $region40: #{forward.14} parent=35 // pred_fallthru
          _
        // Predicated region
        $region41: #{forward.14} parent=35 // pred_check
          %p449 = pneg %p156
        $region42: #{forward.14} parent=35 // pred_check_branch
          %451 = sbr.rel (%p449) target = $region44
        $region43: #{forward.14} parent=35 // pred_region
          %s452 = smul.u32 3, %s23
          %s454 = ssub.s32 192, 192
          %455 = vsyncadd %s429, %s454
          %s456 = smul.addr %s452, 64
          %s457 = scalar_lea.hbm %s5, %s456
          %s458 = sshll.u32 %s432, 4
          %s459 = int_to_ptr.vmem [resolvable:$true] %s458
          %464 = dma.vmem_to_hbm [thread:$0]  %s459, 192, %s457, %s429, 64, 64, 4
        $region44: #{forward.14} parent=35 // pred_fallthru
          _
      $region36: #{forward.14} parent=5 // pred_fallthru
        _
      %p465 = scmp.le.s32.totalorder 2, %s18
      // Predicated region
      $region45: #{forward.14} parent=5 // pred_check
        %p466 = pneg %p465
      $region46: #{forward.14} parent=5 // pred_check_branch
        %468 = sbr.rel (%p466) target = $region48
      $region47: #{forward.14} parent=5 // pred_region
        %s469 = ssub.s32 %s18, 2
        // Predicated region
        $region49: #{forward.14} parent=47 // pred_check
          %p470 = pneg %p136
        $region50: #{forward.14} parent=47 // pred_check_branch
          %472 = sbr.rel (%p470) target = $region52
        $region51: #{forward.14} parent=47 // pred_region
          %s473 = sand.u32 %s121, 1
          %s474 = scalar_lea.sflag [#allocation3], %s473
          %s475 = sand.u32 %s121, 1
          %s476 = smul.addr %s475, 24
          %s477 = scalar_lea.vmem [#allocation2], %s476
          %478 = dma.done %s474, 384
        $region52: #{forward.14} parent=47 // pred_fallthru
          _
        // Predicated region
        $region53: #{forward.14} parent=47 // pred_check
          %p479 = pneg %p162
        $region54: #{forward.14} parent=47 // pred_check_branch
          %481 = sbr.rel (%p479) target = $region56
        $region55: #{forward.14} parent=47 // pred_region
          %s482 = sand.u32 %s147, 1
          %s483 = scalar_lea.sflag [#allocation5], %s482
          %s484 = sand.u32 %s147, 1
          %s485 = smul.addr %s484, 12
          %s486 = scalar_lea.vmem [#allocation4], %s485
          %487 = dma.done %s483, 192
        $region56: #{forward.14} parent=47 // pred_fallthru
          _
      $region48: #{forward.14} parent=5 // pred_fallthru
        _
    $region6: #{forward.14} parent=1 // loop_footer
      %s22 = sadd.s32 1, %s18
    $region7: #{forward.14} parent=1 // loop_footer_branch
      %17 = sbr.rel target = $region3
    $region8: #{forward.14} parent=1 // loop_exit
      _
    %488 = vsyncpa [#allocation3], 1
    %s489 = scalar_lea.sflag [#allocation3], 1
    %490 = vsyncpa %s489, 1
    %491 = vsyncpa [#allocation5], 1
    %s492 = scalar_lea.sflag [#allocation5], 1
    %493 = vsyncpa %s492, 1

// kernel: forward.12
$region0: #{forward.12}
  #allocation0 [shape = 'u32[]', space=smem, size = 0x4, offset = 0x4, fixed_abs, tag = 'smem constant byte address 0x4 - core index']
  #allocation1 [shape = 'u32[144,128]{1,0:T(1,128)}', space=vmem, size = 0x12000, scoped, tag = 'internal scratch']
  %s0 = inlined_call_operand.hbm [shape: s32[768,1], index: 0, kind: input, shape index: {}]
  %s1 = inlined_call_operand.hbm [shape: f32[48,128], index: 1, kind: input, shape index: {}]
  %s2 = inlined_call_operand.hbm [shape: bf16[48,128], index: 2, kind: input, shape index: {}]
  %s3 = inlined_call_operand.hbm [shape: bf16[128,128], index: 3, kind: input, shape index: {}]
  %s4 = inlined_call_operand.hbm [shape: f32[1,128], index: 4, kind: input, shape index: {}]
  %s5 = inlined_call_operand.hbm [shape: bf16[128,128], index: 5, kind: input, shape index: {}]
  %s6 = inlined_call_operand.hbm [shape: f32[1,128], index: 6, kind: input, shape index: {}]
  %s7 = inlined_call_operand.hbm [shape: f32[48,128], index: 7, kind: output, shape index: {}]
  %s8 = sld [smem:[#allocation0]]
  $region89: #{forward.12} parent=0
    _
  %s10 = ssub.s32 1, %s8
  %s11 = scalar_select 0, %s10, %s8
  $region1: #{forward.12} parent=0
    #allocation2 [shape = 'u8[131072]{0}', space=vmem, size = 0x20000, scoped, tag = 'input window, operand 0']
    #allocation3 [shape = 's32[2]{0}', space=sflag, size = 0x8, scoped, tag = 'scoped memory for forward.12']
    #allocation4 [shape = 's32[2]{0}', space=sflag, size = 0x8, scoped, tag = 'scoped memory for forward.12']
    #allocation5 [shape = 'u8[8192]{0}', space=vmem, size = 0x2000, scoped, tag = 'input window, operand 1']
    #allocation6 [shape = 's32[2]{0}', space=sflag, size = 0x8, scoped, tag = 'scoped memory for forward.12']
    #allocation7 [shape = 'u8[12288]{0}', space=vmem, size = 0x3000, scoped, tag = 'input window, operand 2']
    #allocation8 [shape = 'u8[32768]{0}', space=vmem, size = 0x8000, scoped, tag = 'input window, operand 3, single buffered']
    #allocation9 [shape = 's32[1]{0}', space=sflag, size = 0x4, scoped, tag = 'scoped memory for forward.12']
    #allocation10 [shape = 'u8[512]{0}', space=vmem, size = 0x400, scoped, tag = 'input window, operand 4, single buffered']
    #allocation11 [shape = 'u8[32768]{0}', space=vmem, size = 0x8000, scoped, tag = 'input window, operand 5, single buffered']
    #allocation12 [shape = 's32[1]{0}', space=sflag, size = 0x4, scoped, tag = 'scoped memory for forward.12']
    #allocation13 [shape = 'u8[512]{0}', space=vmem, size = 0x400, scoped, tag = 'input window, operand 6, single buffered']
    #allocation14 [shape = 'u8[8192]{0}', space=vmem, size = 0x2000, scoped, tag = 'output window, operand 0']
    %12 = vsyncpa [#allocation3], 0
    %s13 = scalar_lea.sflag [#allocation3], 1
    %14 = vsyncpa %s13, 0
    %15 = vsyncpa [#allocation6], 0
    %s16 = scalar_lea.sflag [#allocation6], 1
    %17 = vsyncpa %s16, 0
    %18 = vsyncpa [#allocation9], 0
    %19 = vsyncpa [#allocation12], 0
    %20 = vsyncpa [#allocation4], 0
    %s21 = scalar_lea.sflag [#allocation4], 1
    %22 = vsyncpa %s21, 0
    loop: start=0, step=1, limit=8
    $region2: #{forward.12} parent=1 // loop_pre_header
      _
    $region3: #{forward.12} parent=1 // loop_header
      %s24 = sphi 0, %s28
      %p25 = scmp.ge.s32.totalorder %s24, 8
      %s31 = sphi 0, %s43
      %s32 = sphi 0, %s39
      %s33 = sphi 0, %s31
      %s34 = sphi 0, %s32
      %s35 = sphi 0, %s33
      %s36 = sphi 0, %s34
      %s50 = sphi 0, %s52
      %s53 = sphi 0, %s50
      %s54 = sphi 0, %s53
      %s70 = sphi 0, %s54
      %s80 = sphi 0, %s82
      %s83 = sphi 0, %s80
      %s84 = sphi 0, %s83
      %s100 = sphi 0, %s84
      %s106 = sphi 0, %s108
      %s109 = sphi 0, %s106
      %s110 = sphi 0, %s109
      %s126 = sphi 0, %s110
      %s130 = sphi 0, %s130
      %s132 = sphi 0, %s130
      %s133 = sphi 0, %s132
      %s147 = sphi 0, %s133
      %s151 = sphi 0, %s151
      %s153 = sphi 0, %s151
      %s154 = sphi 0, %s153
      %s168 = sphi 0, %s154
      %s172 = sphi 0, %s172
      %s174 = sphi 0, %s172
      %s175 = sphi 0, %s174
      %s189 = sphi 0, %s175
      %s193 = sphi 0, %s193
      %s195 = sphi 0, %s193
      %s196 = sphi 0, %s195
      %s210 = sphi 0, %s196
      %s220 = sphi 0, %s222
      %s223 = sphi 0, %s220
      %s224 = sphi 0, %s223
      %s240 = sphi 0, %s224
    $region4: #{forward.12} parent=1 // loop_header_branch
      %27 = sbr.rel (%p25) target = $region8
    $region5: #{forward.12} parent=1 // loop_body
      %s29 = ssub.s32 %s24, 1
      %s30 = ssub.s32 %s24, 2
      %s37 = sadd.s32 1, %s32
      %p38 = scmp.ge.s32.totalorder %s37, 3
      %s39 = scalar_select %p38, 0, %s37
      %s40 = sadd.s32 1, %s31
      %s41 = scalar_select %p38, %s40, %s31
      %p42 = scmp.ge.s32.totalorder %s41, 2
      %s43 = scalar_select %p42, 0, %s41
      %s44 = smul.u32 %s31, 3
      %s45 = sadd.s32 %s44, %s32
      %s46 = smul.u32 %s43, 3
      %s47 = sadd.s32 %s46, %s39
      %s48 = ssub.s32 %s45, %s47
      %p49 = scmp.eq.s32.totalorder %s48, 0
      %s51 = sadd.s32 %s50, 1
      %s52 = scalar_select %p49, %s50, %s51
      %p55 = pneg %p49
      %p56 = scmp.eq.s32.totalorder %s24, 5
      %p57 = por %p55, %p56
      %p58 = scmp.ne.s32.totalorder %s50, %s53
      %p59 = scmp.eq.s32.totalorder %s24, 0
      %p60 = por %p58, %p59
      %p61 = scmp.ne.s32.totalorder %s50, %s53
      %p62 = scmp.eq.s32.totalorder %s29, 5
      %p63 = por %p61, %p62
      %p64 = scmp.ne.s32.totalorder %s53, %s54
      %p65 = scmp.eq.s32.totalorder %s29, 0
      %p66 = por %p64, %p65
      %p67 = scmp.ne.s32.totalorder %s53, %s54
      %p68 = scmp.eq.s32.totalorder %s30, 5
      %p69 = por %p67, %p68
      %p71 = scmp.ne.s32.totalorder %s54, %s70
      %p72 = scmp.eq.s32.totalorder %s30, 0
      %p73 = por %p71, %p72
      %s74 = smul.u32 %s31, 3
      %s75 = sadd.s32 %s74, %s32
      %s76 = smul.u32 %s43, 3
      %s77 = sadd.s32 %s76, %s39
      %s78 = ssub.s32 %s75, %s77
      %p79 = scmp.eq.s32.totalorder %s78, 0
      %s81 = sadd.s32 %s80, 1
      %s82 = scalar_select %p79, %s80, %s81
      %p85 = pneg %p79
      %p86 = scmp.eq.s32.totalorder %s24, 5
      %p87 = por %p85, %p86
      %p88 = scmp.ne.s32.totalorder %s80, %s83
      %p89 = scmp.eq.s32.totalorder %s24, 0
      %p90 = por %p88, %p89
      %p91 = scmp.ne.s32.totalorder %s80, %s83
      %p92 = scmp.eq.s32.totalorder %s29, 5
      %p93 = por %p91, %p92
      %p94 = scmp.ne.s32.totalorder %s83, %s84
      %p95 = scmp.eq.s32.totalorder %s29, 0
      %p96 = por %p94, %p95
      %p97 = scmp.ne.s32.totalorder %s83, %s84
      %p98 = scmp.eq.s32.totalorder %s30, 5
      %p99 = por %p97, %p98
      %p101 = scmp.ne.s32.totalorder %s84, %s100
      %p102 = scmp.eq.s32.totalorder %s30, 0
      %p103 = por %p101, %p102
      %s104 = ssub.s32 %s31, %s43
      %p105 = scmp.eq.s32.totalorder %s104, 0
      %s107 = sadd.s32 %s106, 1
      %s108 = scalar_select %p105, %s106, %s107
      %p111 = pneg %p105
      %p112 = scmp.eq.s32.totalorder %s24, 5
      %p113 = por %p111, %p112
      %p114 = scmp.ne.s32.totalorder %s106, %s109
      %p115 = scmp.eq.s32.totalorder %s24, 0
      %p116 = por %p114, %p115
      %p117 = scmp.ne.s32.totalorder %s106, %s109
      %p118 = scmp.eq.s32.totalorder %s29, 5
      %p119 = por %p117, %p118
      %p120 = scmp.ne.s32.totalorder %s109, %s110
      %p121 = scmp.eq.s32.totalorder %s29, 0
      %p122 = por %p120, %p121
      %p123 = scmp.ne.s32.totalorder %s109, %s110
      %p124 = scmp.eq.s32.totalorder %s30, 5
      %p125 = por %p123, %p124
      %p127 = scmp.ne.s32.totalorder %s110, %s126
      %p128 = scmp.eq.s32.totalorder %s30, 0
      %p129 = por %p127, %p128
      %s131 = sadd.s32 %s130, 1
      %p134 = scmp.eq.s32.totalorder %s24, 5
      %p135 = scmp.ne.s32.totalorder %s130, %s132
      %p136 = scmp.eq.s32.totalorder %s24, 0
      %p137 = por %p135, %p136
      %p138 = scmp.ne.s32.totalorder %s130, %s132
      %p139 = scmp.eq.s32.totalorder %s29, 5
      %p140 = por %p138, %p139
      %p141 = scmp.ne.s32.totalorder %s132, %s133
      %p142 = scmp.eq.s32.totalorder %s29, 0
      %p143 = por %p141, %p142
      %p144 = scmp.ne.s32.totalorder %s132, %s133
      %p145 = scmp.eq.s32.totalorder %s30, 5
      %p146 = por %p144, %p145
      %p148 = scmp.ne.s32.totalorder %s133, %s147
      %p149 = scmp.eq.s32.totalorder %s30, 0
      %p150 = por %p148, %p149
      %s152 = sadd.s32 %s151, 1
      %p155 = scmp.eq.s32.totalorder %s24, 5
      %p156 = scmp.ne.s32.totalorder %s151, %s153
      %p157 = scmp.eq.s32.totalorder %s24, 0
      %p158 = por %p156, %p157
      %p159 = scmp.ne.s32.totalorder %s151, %s153
      %p160 = scmp.eq.s32.totalorder %s29, 5
      %p161 = por %p159, %p160
      %p162 = scmp.ne.s32.totalorder %s153, %s154
      %p163 = scmp.eq.s32.totalorder %s29, 0
      %p164 = por %p162, %p163
      %p165 = scmp.ne.s32.totalorder %s153, %s154
      %p166 = scmp.eq.s32.totalorder %s30, 5
      %p167 = por %p165, %p166
      %p169 = scmp.ne.s32.totalorder %s154, %s168
      %p170 = scmp.eq.s32.totalorder %s30, 0
      %p171 = por %p169, %p170
      %s173 = sadd.s32 %s172, 1
      %p176 = scmp.eq.s32.totalorder %s24, 5
      %p177 = scmp.ne.s32.totalorder %s172, %s174
      %p178 = scmp.eq.s32.totalorder %s24, 0
      %p179 = por %p177, %p178
      %p180 = scmp.ne.s32.totalorder %s172, %s174
      %p181 = scmp.eq.s32.totalorder %s29, 5
      %p182 = por %p180, %p181
      %p183 = scmp.ne.s32.totalorder %s174, %s175
      %p184 = scmp.eq.s32.totalorder %s29, 0
      %p185 = por %p183, %p184
      %p186 = scmp.ne.s32.totalorder %s174, %s175
      %p187 = scmp.eq.s32.totalorder %s30, 5
      %p188 = por %p186, %p187
      %p190 = scmp.ne.s32.totalorder %s175, %s189
      %p191 = scmp.eq.s32.totalorder %s30, 0
      %p192 = por %p190, %p191
      %s194 = sadd.s32 %s193, 1
      %p197 = scmp.eq.s32.totalorder %s24, 5
      %p198 = scmp.ne.s32.totalorder %s193, %s195
      %p199 = scmp.eq.s32.totalorder %s24, 0
      %p200 = por %p198, %p199
      %p201 = scmp.ne.s32.totalorder %s193, %s195
      %p202 = scmp.eq.s32.totalorder %s29, 5
      %p203 = por %p201, %p202
      %p204 = scmp.ne.s32.totalorder %s195, %s196
      %p205 = scmp.eq.s32.totalorder %s29, 0
      %p206 = por %p204, %p205
      %p207 = scmp.ne.s32.totalorder %s195, %s196
      %p208 = scmp.eq.s32.totalorder %s30, 5
      %p209 = por %p207, %p208
      %p211 = scmp.ne.s32.totalorder %s196, %s210
      %p212 = scmp.eq.s32.totalorder %s30, 0
      %p213 = por %p211, %p212
      %s214 = smul.u32 %s31, 3
      %s215 = sadd.s32 %s214, %s32
      %s216 = smul.u32 %s43, 3
      %s217 = sadd.s32 %s216, %s39
      %s218 = ssub.s32 %s215, %s217
      %p219 = scmp.eq.s32.totalorder %s218, 0
      %s221 = sadd.s32 %s220, 1
      %s222 = scalar_select %p219, %s220, %s221
      %p225 = pneg %p219
      %p226 = scmp.eq.s32.totalorder %s24, 5
      %p227 = por %p225, %p226
      %p228 = scmp.ne.s32.totalorder %s220, %s223
      %p229 = scmp.eq.s32.totalorder %s24, 0
      %p230 = por %p228, %p229
      %p231 = scmp.ne.s32.totalorder %s220, %s223
      %p232 = scmp.eq.s32.totalorder %s29, 5
      %p233 = por %p231, %p232
      %p234 = scmp.ne.s32.totalorder %s223, %s224
      %p235 = scmp.eq.s32.totalorder %s29, 0
      %p236 = por %p234, %p235
      %p237 = scmp.ne.s32.totalorder %s223, %s224
      %p238 = scmp.eq.s32.totalorder %s30, 5
      %p239 = por %p237, %p238
      %p241 = scmp.ne.s32.totalorder %s224, %s240
      %p242 = scmp.eq.s32.totalorder %s30, 0
      %p243 = por %p241, %p242
      %p244 = scmp.le.s32.totalorder 1, %s24
      %p245 = scmp.lt.s32.totalorder %s24, 7
      %p246 = pnand %p244, %p245
      %p247 = pneg %p246
      // Predicated region
      $region9: #{forward.12} parent=5 // pred_check
        _
      $region10: #{forward.12} parent=5 // pred_check_branch
        %249 = sbr.rel (%p246) target = $region12
      $region11: #{forward.12} parent=5 // pred_region
        %s250 = ssub.s32 %s24, 1
        // Predicated region
        $region13: #{forward.12} parent=11 // pred_check
          %p251 = pneg %p143
        $region14: #{forward.12} parent=11 // pred_check_branch
          %253 = sbr.rel (%p251) target = $region16
        $region15: #{forward.12} parent=11 // pred_region
          %s255 = ssub.s32 1024, 1024
          %256 = vsyncadd [#allocation9], %s255
          %s257 = sshll.u32 [#allocation8], 4
          %s258 = int_to_ptr.vmem [resolvable:$true] %s257
          %263 = dma.hbm_to_vmem [thread:$0]  %s3, 1024, %s258, [#allocation9], 64, 64, 4
        $region16: #{forward.12} parent=11 // pred_fallthru
          _
        // Predicated region
        $region17: #{forward.12} parent=11 // pred_check
          %p264 = pneg %p164
        $region18: #{forward.12} parent=11 // pred_check_branch
          %266 = sbr.rel (%p264) target = $region20
        $region19: #{forward.12} parent=11 // pred_region
          %s268 = ssub.s32 16, 16
          %269 = vsyncadd [#allocation9], %s268
          %s271 = sshll.u32 [#allocation10], 4
          %s272 = int_to_ptr.vmem [resolvable:$true] %s271
          %274 = dma.hbm_to_vmem [thread:$0]  %s4, 16, %s272, [#allocation9]
        $region20: #{forward.12} parent=11 // pred_fallthru
          _
        // Predicated region
        $region21: #{forward.12} parent=11 // pred_check
          %p275 = pneg %p185
        $region22: #{forward.12} parent=11 // pred_check_branch
          %277 = sbr.rel (%p275) target = $region24
        $region23: #{forward.12} parent=11 // pred_region
          %s279 = ssub.s32 1024, 1024
          %280 = vsyncadd [#allocation12], %s279
          %s281 = sshll.u32 [#allocation11], 4
          %s282 = int_to_ptr.vmem [resolvable:$true] %s281
          %287 = dma.hbm_to_vmem [thread:$0]  %s5, 1024, %s282, [#allocation12], 64, 64, 4
        $region24: #{forward.12} parent=11 // pred_fallthru
          _
        // Predicated region
        $region25: #{forward.12} parent=11 // pred_check
          %p288 = pneg %p206
        $region26: #{forward.12} parent=11 // pred_check_branch
          %290 = sbr.rel (%p288) target = $region28
        $region27: #{forward.12} parent=11 // pred_region
          %s292 = ssub.s32 16, 16
          %293 = vsyncadd [#allocation12], %s292
          %s295 = sshll.u32 [#allocation13], 4
          %s296 = int_to_ptr.vmem [resolvable:$true] %s295
          %298 = dma.hbm_to_vmem [thread:$0]  %s6, 16, %s296, [#allocation12]
        $region28: #{forward.12} parent=11 // pred_fallthru
          _
      $region12: #{forward.12} parent=5 // pred_fallthru
        _
      %p299 = scmp.lt.s32.totalorder %s24, 6
      // Predicated region
      $region29: #{forward.12} parent=5 // pred_check
        %p300 = pneg %p299
      $region30: #{forward.12} parent=5 // pred_check_branch
        %302 = sbr.rel (%p300) target = $region32
      $region31: #{forward.12} parent=5 // pred_region
        // Predicated region
        $region33: #{forward.12} parent=31 // pred_check
          %p303 = pneg %p60
        $region34: #{forward.12} parent=31 // pred_check_branch
          %305 = sbr.rel (%p303) target = $region36
        $region35: #{forward.12} parent=31 // pred_region
          %s306 = sand.u32 %s50, 1
          %s307 = scalar_lea.sflag [#allocation3], %s306
          %s308 = sand.u32 %s50, 1
          %s309 = smul.addr %s308, 128
          %s310 = scalar_lea.vmem [#allocation2], %s309
          %s311 = smul.u32 %s31, 3
          %s312 = sadd.s32 %s311, %s32
          %s313 = smul.u32 16, %s312
          %s315 = ssub.s32 2048, 2048
          %316 = vsyncadd %s307, %s315
          %s317 = smul.addr %s313, 128
          %s318 = scalar_lea.hbm %s0, %s317
          %s319 = sshll.u32 %s310, 4
          %s320 = int_to_ptr.vmem [resolvable:$true] %s319
          %325 = dma.hbm_to_vmem [thread:$0]  %s318, 2048, %s320, %s307, 128, 128, 8
        $region36: #{forward.12} parent=31 // pred_fallthru
          _
        // Predicated region
        $region37: #{forward.12} parent=31 // pred_check
          %p326 = pneg %p90
        $region38: #{forward.12} parent=31 // pred_check_branch
          %328 = sbr.rel (%p326) target = $region40
        $region39: #{forward.12} parent=31 // pred_region
          %s329 = sand.u32 %s24, 1
          %s330 = scalar_lea.sflag [#allocation6], %s329
          %s331 = sand.u32 %s80, 1
          %s332 = smul.addr %s331, 8
          %s333 = scalar_lea.vmem [#allocation5], %s332
          %s334 = smul.u32 %s31, 3
          %s335 = sadd.s32 %s334, %s32
          %s337 = ssub.s32 128, 128
          %338 = vsyncadd %s330, %s337
          %s339 = smul.addr %s335, 128
          %s340 = scalar_lea.hbm %s1, %s339
          %s342 = sshll.u32 %s333, 4
          %s343 = int_to_ptr.vmem [resolvable:$true] %s342
          %345 = dma.hbm_to_vmem [thread:$0]  %s340, 128, %s343, %s330
        $region40: #{forward.12} parent=31 // pred_fallthru
          _
        // Predicated region
        $region41: #{forward.12} parent=31 // pred_check
          %p346 = pneg %p116
        $region42: #{forward.12} parent=31 // pred_check_branch
          %348 = sbr.rel (%p346) target = $region44
        $region43: #{forward.12} parent=31 // pred_region
          %s349 = sand.u32 %s24, 1
          %s350 = scalar_lea.sflag [#allocation6], %s349
          %s351 = sand.u32 %s106, 1
          %s352 = smul.addr %s351, 12
          %s353 = scalar_lea.vmem [#allocation7], %s352
          %s354 = smul.u32 3, %s31
          %s356 = ssub.s32 192, 192
          %357 = vsyncadd %s350, %s356
          %s358 = smul.addr %s354, 64
          %s359 = scalar_lea.hbm %s2, %s358
          %s360 = sshll.u32 %s353, 4
          %s361 = int_to_ptr.vmem [resolvable:$true] %s360
          %366 = dma.hbm_to_vmem [thread:$0]  %s359, 192, %s361, %s350, 64, 64, 4
        $region44: #{forward.12} parent=31 // pred_fallthru
          _
      $region32: #{forward.12} parent=5 // pred_fallthru
        _
      %p367 = scmp.le.s32.totalorder 1, %s24
      %p368 = scmp.lt.s32.totalorder %s24, 7
      %p369 = pnand %p367, %p368
      %p370 = pneg %p369
      // Predicated region
      $region45: #{forward.12} parent=5 // pred_check
        _
      $region46: #{forward.12} parent=5 // pred_check_branch
        %372 = sbr.rel (%p369) target = $region48
      $region47: #{forward.12} parent=5 // pred_region
        %s373 = ssub.s32 %s24, 1
        %s374 = sand.u32 %s53, 1
        %s375 = scalar_lea.sflag [#allocation3], %s374
        %s376 = sand.u32 %s53, 1
        %s377 = smul.addr %s376, 128
        %s378 = scalar_lea.vmem [#allocation2], %s377
        // Predicated region
        $region49: #{forward.12} parent=47 // pred_check
          %p379 = pneg %p66
        $region50: #{forward.12} parent=47 // pred_check_branch
          %381 = sbr.rel (%p379) target = $region52
        $region51: #{forward.12} parent=47 // pred_region
          %382 = dma.done %s375, 2048
        $region52: #{forward.12} parent=47 // pred_fallthru
          _
        %s383 = sand.u32 %s29, 1
        %s384 = scalar_lea.sflag [#allocation6], %s383
        %s385 = sand.u32 %s83, 1
        %s386 = smul.addr %s385, 8
        %s387 = scalar_lea.vmem [#allocation5], %s386
        // Predicated region
        $region53: #{forward.12} parent=47 // pred_check
          %p388 = pneg %p96
        $region54: #{forward.12} parent=47 // pred_check_branch
          %390 = sbr.rel (%p388) target = $region56
        $region55: #{forward.12} parent=47 // pred_region
          %391 = dma.done %s384, 128
        $region56: #{forward.12} parent=47 // pred_fallthru
          _
        %s392 = sand.u32 %s29, 1
        %s393 = scalar_lea.sflag [#allocation6], %s392
        %s394 = sand.u32 %s109, 1
        %s395 = smul.addr %s394, 12
        %s396 = scalar_lea.vmem [#allocation7], %s395
        // Predicated region
        $region57: #{forward.12} parent=47 // pred_check
          %p397 = pneg %p122
        $region58: #{forward.12} parent=47 // pred_check_branch
          %399 = sbr.rel (%p397) target = $region60
        $region59: #{forward.12} parent=47 // pred_region
          %400 = dma.done %s393, 192
        $region60: #{forward.12} parent=47 // pred_fallthru
          _
        // Predicated region
        $region61: #{forward.12} parent=47 // pred_check
          %p401 = pneg %p143
        $region62: #{forward.12} parent=47 // pred_check_branch
          %403 = sbr.rel (%p401) target = $region64
        $region63: #{forward.12} parent=47 // pred_region
          %404 = dma.done [#allocation9], 1024
        $region64: #{forward.12} parent=47 // pred_fallthru
          _
        // Predicated region
        $region65: #{forward.12} parent=47 // pred_check
          %p405 = pneg %p164
        $region66: #{forward.12} parent=47 // pred_check_branch
          %407 = sbr.rel (%p405) target = $region68
        $region67: #{forward.12} parent=47 // pred_region
          %408 = dma.done [#allocation9], 16
        $region68: #{forward.12} parent=47 // pred_fallthru
          _
        // Predicated region
        $region69: #{forward.12} parent=47 // pred_check
          %p409 = pneg %p185
        $region70: #{forward.12} parent=47 // pred_check_branch
          %411 = sbr.rel (%p409) target = $region72
        $region71: #{forward.12} parent=47 // pred_region
          %412 = dma.done [#allocation12], 1024
        $region72: #{forward.12} parent=47 // pred_fallthru
          _
        // Predicated region
        $region73: #{forward.12} parent=47 // pred_check
          %p413 = pneg %p206
        $region74: #{forward.12} parent=47 // pred_check_branch
          %415 = sbr.rel (%p413) target = $region76
        $region75: #{forward.12} parent=47 // pred_region
          %416 = dma.done [#allocation12], 16
        $region76: #{forward.12} parent=47 // pred_fallthru
          _
        %s417 = sand.u32 %s53, 1
        %s418 = scalar_lea.sflag [#allocation3], %s417
        %s419 = sand.u32 %s53, 1
        %s420 = smul.addr %s419, 128
        %s421 = scalar_lea.vmem [#allocation2], %s420
        %p422 = pneg %p66
        %p423 = pneg %p63
        %s424 = sand.u32 %s29, 1
        %s425 = scalar_lea.sflag [#allocation6], %s424
        %s426 = sand.u32 %s83, 1
        %s427 = smul.addr %s426, 8
        %s428 = scalar_lea.vmem [#allocation5], %s427
        %p429 = pneg %p96
        %p430 = pneg %p93
        %s431 = sand.u32 %s29, 1
        %s432 = scalar_lea.sflag [#allocation6], %s431
        %s433 = sand.u32 %s109, 1
        %s434 = smul.addr %s433, 12
        %s435 = scalar_lea.vmem [#allocation7], %s434
        %p436 = pneg %p122
        %p437 = pneg %p119
        %p438 = pneg %p143
        %p439 = pneg %p140
        %p440 = pneg %p164
        %p441 = pneg %p161
        %p442 = pneg %p185
        %p443 = pneg %p182
        %p444 = pneg %p206
        %p445 = pneg %p203
        %p446 = pneg %p236
        %p447 = pneg %p233
        %s448 = sand.u32 %s223, 1
        %s449 = scalar_lea.sflag [#allocation4], %s448
        %s450 = sand.u32 %s223, 1
        %s451 = smul.addr %s450, 8
        %s452 = scalar_lea.vmem [#allocation14], %s451
        %s453 = smul.u32 %s33, 3
        %s454 = sadd.s32 %s453, %s34
        %s455 = smul.u32 16, %s454
        %s456 = smul.u32 %s33, 3
        %s457 = sadd.s32 %s456, %s34
        %s458 = smul.u32 3, %s33
        %s459 = smul.u32 %s33, 3
        %s460 = sadd.s32 %s459, %s34
        %v462 = vlaneseq
        %v463 = vand.u32 %v462, 127
        %v464 = vld [vmem:[%s378] sm:$0xff]
        %v465 = vld [vmem:[%s378 + $0x8] sm:$0xff]
        %v466 = vld [vmem:[%s378 + $0x10] sm:$0xff]
        %v467 = vld [vmem:[%s378 + $0x18] sm:$0xff]
        %v468 = vld [vmem:[%s378 + $0x20] sm:$0xff]
        %v469 = vld [vmem:[%s378 + $0x28] sm:$0xff]
        %v470 = vld [vmem:[%s378 + $0x30] sm:$0xff]
        %v471 = vld [vmem:[%s378 + $0x38] sm:$0xff]
        %v472 = vld [vmem:[%s378 + $0x40] sm:$0xff]
        %v473 = vld [vmem:[%s378 + $0x48] sm:$0xff]
        %v474 = vld [vmem:[%s378 + $0x50] sm:$0xff]
        %v475 = vld [vmem:[%s378 + $0x58] sm:$0xff]
        %v476 = vld [vmem:[%s378 + $0x60] sm:$0xff]
        %v477 = vld [vmem:[%s378 + $0x68] sm:$0xff]
        %v478 = vld [vmem:[%s378 + $0x70] sm:$0xff]
        %v479 = vld [vmem:[%s378 + $0x78] sm:$0xff]
        %480 = vset.pattern.permute.xlu0 0
        %481 = vperm.xlu0 %480, %v464
        %v482 = vpop.permute.xlu0 %481
        %483 = vset.pattern.permute.xlu0 0
        %484 = vperm.xlu0 %483, %v465
        %v485 = vpop.permute.xlu0 %484
        %486 = vset.pattern.permute.xlu0 0
        %487 = vperm.xlu0 %486, %v466
        %v488 = vpop.permute.xlu0 %487
        %489 = vset.pattern.permute.xlu0 0
        %490 = vperm.xlu0 %489, %v467
        %v491 = vpop.permute.xlu0 %490
        %492 = vset.pattern.permute.xlu0 0
        %493 = vperm.xlu0 %492, %v468
        %v494 = vpop.permute.xlu0 %493
        %495 = vset.pattern.permute.xlu0 0
        %496 = vperm.xlu0 %495, %v469
        %v497 = vpop.permute.xlu0 %496
        %498 = vset.pattern.permute.xlu0 0
        %499 = vperm.xlu0 %498, %v470
        %v500 = vpop.permute.xlu0 %499
        %501 = vset.pattern.permute.xlu0 0
        %502 = vperm.xlu0 %501, %v471
        %v503 = vpop.permute.xlu0 %502
        %504 = vset.pattern.permute.xlu0 0
        %505 = vperm.xlu0 %504, %v472
        %v506 = vpop.permute.xlu0 %505
        %507 = vset.pattern.permute.xlu0 0
        %508 = vperm.xlu0 %507, %v473
        %v509 = vpop.permute.xlu0 %508
        %510 = vset.pattern.permute.xlu0 0
        %511 = vperm.xlu0 %510, %v474
        %v512 = vpop.permute.xlu0 %511
        %513 = vset.pattern.permute.xlu0 0
        %514 = vperm.xlu0 %513, %v475
        %v515 = vpop.permute.xlu0 %514
        %516 = vset.pattern.permute.xlu0 0
        %517 = vperm.xlu0 %516, %v476
        %v518 = vpop.permute.xlu0 %517
        %519 = vset.pattern.permute.xlu0 0
        %520 = vperm.xlu0 %519, %v477
        %v521 = vpop.permute.xlu0 %520
        %522 = vset.pattern.permute.xlu0 0
        %523 = vperm.xlu0 %522, %v478
        %v524 = vpop.permute.xlu0 %523
        %525 = vset.pattern.permute.xlu0 0
        %526 = vperm.xlu0 %525, %v479
        %v527 = vpop.permute.xlu0 %526
        %vm528 = vcmp.eq.s32.totalorder %v482, %v463
        %vm529 = vcmp.eq.s32.totalorder %v485, %v463
        %vm530 = vcmp.eq.s32.totalorder %v488, %v463
        %vm531 = vcmp.eq.s32.totalorder %v491, %v463
        %vm532 = vcmp.eq.s32.totalorder %v494, %v463
        %vm533 = vcmp.eq.s32.totalorder %v497, %v463
        %vm534 = vcmp.eq.s32.totalorder %v500, %v463
        %vm535 = vcmp.eq.s32.totalorder %v503, %v463
        %vm536 = vcmp.eq.s32.totalorder %v506, %v463
        %vm537 = vcmp.eq.s32.totalorder %v509, %v463
        %vm538 = vcmp.eq.s32.totalorder %v512, %v463
        %vm539 = vcmp.eq.s32.totalorder %v515, %v463
        %vm540 = vcmp.eq.s32.totalorder %v518, %v463
        %vm541 = vcmp.eq.s32.totalorder %v521, %v463
        %vm542 = vcmp.eq.s32.totalorder %v524, %v463
        %vm543 = vcmp.eq.s32.totalorder %v527, %v463
        %v544 = vsel %vm528, 1, 0
        %v545 = vsel %vm529, 1, 0
        %v546 = vsel %vm530, 1, 0
        %v547 = vsel %vm531, 1, 0
        %v548 = vsel %vm532, 1, 0
        %v549 = vsel %vm533, 1, 0
        %v550 = vsel %vm534, 1, 0
        %v551 = vsel %vm535, 1, 0
        %v552 = vsel %vm536, 1, 0
        %v553 = vsel %vm537, 1, 0
        %v554 = vsel %vm538, 1, 0
        %v555 = vsel %vm539, 1, 0
        %v556 = vsel %vm540, 1, 0
        %v557 = vsel %vm541, 1, 0
        %v558 = vsel %vm542, 1, 0
        %v559 = vsel %vm543, 1, 0
        %v560 = vcvt.s32.f32 %v544
        %v561 = vcvt.s32.f32 %v545
        %v562 = vcvt.s32.f32 %v546
        %v563 = vcvt.s32.f32 %v547
        %v564 = vcvt.s32.f32 %v548
        %v565 = vcvt.s32.f32 %v549
        %v566 = vcvt.s32.f32 %v550
        %v567 = vcvt.s32.f32 %v551
        %v568 = vcvt.s32.f32 %v552
        %v569 = vcvt.s32.f32 %v553
        %v570 = vcvt.s32.f32 %v554
        %v571 = vcvt.s32.f32 %v555
        %v572 = vcvt.s32.f32 %v556
        %v573 = vcvt.s32.f32 %v557
        %v574 = vcvt.s32.f32 %v558
        %v575 = vcvt.s32.f32 %v559
        %v576 = vpack.c.bf16 %v561, %v560
        %v577 = vpack.c.bf16 %v563, %v562
        %v578 = vpack.c.bf16 %v565, %v564
        %v579 = vpack.c.bf16 %v567, %v566
        %v580 = vpack.c.bf16 %v569, %v568
        %v581 = vpack.c.bf16 %v571, %v570
        %v582 = vpack.c.bf16 %v573, %v572
        %v583 = vpack.c.bf16 %v575, %v574
        %v584 = vld [vmem:[%s396] sm:$0xf]
        %v585 = vld [vmem:[%s396 + $0x4] sm:$0xf]
        %v586 = vld [vmem:[%s396 + $0x8] sm:$0xf]
        %v590 = vunpack.c.l.b16 %v584
        %v591 = vunpack.c.l.b16 %v585
        %v592 = vunpack.c.l.b16 %v586
        %v593 = vpack.c.b16 %v591, %v590
        %v594 = vpack.c.b16 %v592, %v592
        %vm596 = vcmask 195584
        %v598 = vsel %vm596, %v576, 0
        %v601 = vsel %vm596, %v577, 0
        %v604 = vsel %vm596, %v578, 0
        %v607 = vsel %vm596, %v579, 0
        %v610 = vsel %vm596, %v580, 0
        %v613 = vsel %vm596, %v581, 0
        %v616 = vsel %vm596, %v582, 0
        %v619 = vsel %vm596, %v583, 0
        %vm621 = vcmask 1043456
        %v623 = vsel %vm621, %v594, 0
        %625 = vmatprep.subr.bf16.mxu0 0
        %626 = vmatpush1.bf16.msra.mxu0 %v593
        %627 = vmatprep.subr.bf16.mxu0 0
        %628 = vmatpush1.bf16.msra.mxu0 %v623
        %629 = vmatprep.subr.bf16.mxu0 0
        %630 = vmatpush1.bf16.msra.mxu0 0
        %631 = vmatprep.subr.bf16.mxu0 0
        %632 = vmatpush1.bf16.msra.mxu0 0
        %633 = vmatprep.subr.bf16.mxu0 0
        %634 = vmatpush1.bf16.msra.mxu0 0
        %635 = vmatprep.subr.bf16.mxu0 0
        %636 = vmatpush1.bf16.msra.mxu0 0
        %637 = vmatprep.subr.bf16.mxu0 0
        %638 = vmatpush1.bf16.msra.mxu0 0
        %639 = vmatprep.subr.bf16.mxu0 0
        %640 = vmatpush1.bf16.msra.mxu0 0
        %641 = vmatprep.subr.bf16.mxu0 0
        %642 = vmatpush1.bf16.msra.mxu0 0
        %643 = vmatprep.subr.bf16.mxu0 0
        %644 = vmatpush1.bf16.msra.mxu0 0
        %645 = vmatprep.subr.bf16.mxu0 0
        %646 = vmatpush1.bf16.msra.mxu0 0
        %647 = vmatprep.subr.bf16.mxu0 0
        %648 = vmatpush1.bf16.msra.mxu0 0
        %649 = vmatprep.subr.bf16.mxu0 0
        %650 = vmatpush1.bf16.msra.mxu0 0
        %651 = vmatprep.subr.bf16.mxu0 0
        %652 = vmatpush1.bf16.msra.mxu0 0
        %653 = vmatprep.subr.bf16.mxu0 0
        %654 = vmatpush1.bf16.msra.mxu0 0
        %655 = vmatprep.subr.bf16.mxu0 0
        %656 = vmatpush1.bf16.msra.mxu0 0
        %657 = vmatprep.mubr.bf16.mxu0 0
        %658 = vmatmul.mubr.bf16.gmra.mrb[0].mxu0 %v598
        %v659 = vpop.f32.mrb[0].mxu0
        %v660 = vadd.f32 0.0, %v659
        %v661 = vpop.f32.mrb[0].mxu0
        %v662 = vpop.f32.mrb[0].mxu0
        %v663 = vadd.f32 0.0, %v662
        %v664 = vpop.f32.mrb[0].mxu0
        %665 = vmatprep.mubr.bf16.mxu0 0
        %666 = vmatmul.mubr.bf16.gmra.mrb[0].mxu0 %v601
        %v667 = vpop.f32.mrb[0].mxu0
        %v668 = vadd.f32 0.0, %v667
        %v669 = vpop.f32.mrb[0].mxu0
        %v670 = vpop.f32.mrb[0].mxu0
        %v671 = vadd.f32 0.0, %v670
        %v672 = vpop.f32.mrb[0].mxu0
        %673 = vmatprep.mubr.bf16.mxu0 0
        %674 = vmatmul.mubr.bf16.gmra.mrb[0].mxu0 %v604
        %v675 = vpop.f32.mrb[0].mxu0
        %v676 = vadd.f32 0.0, %v675
        %v677 = vpop.f32.mrb[0].mxu0
        %v678 = vpop.f32.mrb[0].mxu0
        %v679 = vadd.f32 0.0, %v678
        %v680 = vpop.f32.mrb[0].mxu0
        %681 = vmatprep.mubr.bf16.mxu0 0
        %682 = vmatmul.mubr.bf16.gmra.mrb[0].mxu0 %v607
        %v683 = vpop.f32.mrb[0].mxu0
        %v684 = vadd.f32 0.0, %v683
        %v685 = vpop.f32.mrb[0].mxu0
        %v686 = vpop.f32.mrb[0].mxu0
        %v687 = vadd.f32 0.0, %v686
        %v688 = vpop.f32.mrb[0].mxu0
        %689 = vmatprep.mubr.bf16.mxu0 0
        %690 = vmatmul.mubr.bf16.gmra.mrb[0].mxu0 %v610
        %v691 = vpop.f32.mrb[0].mxu0
        %v692 = vadd.f32 0.0, %v691
        %v693 = vpop.f32.mrb[0].mxu0
        %v694 = vpop.f32.mrb[0].mxu0
        %v695 = vadd.f32 0.0, %v694
        %v696 = vpop.f32.mrb[0].mxu0
        %697 = vmatprep.mubr.bf16.mxu0 0
        %698 = vmatmul.mubr.bf16.gmra.mrb[0].mxu0 %v613
        %v699 = vpop.f32.mrb[0].mxu0
        %v700 = vadd.f32 0.0, %v699
        %v701 = vpop.f32.mrb[0].mxu0
        %v702 = vpop.f32.mrb[0].mxu0
        %v703 = vadd.f32 0.0, %v702
        %v704 = vpop.f32.mrb[0].mxu0
        %705 = vmatprep.mubr.bf16.mxu0 0
        %706 = vmatmul.mubr.bf16.gmra.mrb[0].mxu0 %v616
        %v707 = vpop.f32.mrb[0].mxu0
        %v708 = vadd.f32 0.0, %v707
        %v709 = vpop.f32.mrb[0].mxu0
        %v710 = vpop.f32.mrb[0].mxu0
        %v711 = vadd.f32 0.0, %v710
        %v712 = vpop.f32.mrb[0].mxu0
        %713 = vmatprep.mubr.bf16.mxu0 0
        %714 = vmatmul.mubr.bf16.gmra.mrb[0].mxu0 %v619
        %v715 = vpop.f32.mrb[0].mxu0
        %v716 = vadd.f32 0.0, %v715
        %v717 = vpop.f32.mrb[0].mxu0
        %v718 = vpop.f32.mrb[0].mxu0
        %v719 = vadd.f32 0.0, %v718
        %v720 = vpop.f32.mrb[0].mxu0
        %721 = vdwg.mxu0
        %v722 = vld [vmem:[%s387] sm:$0xff]
        %v724 = vcombine.high %v722, %v722
        %v726 = vunpack.c.l.s4 1966171168
        %v727 = vunpack.c.0.s8 %v726
        %v728 = vlaneseq
        %v729 = vshrl.u32 %v728, 7
        %v730 = vsub.s32 %v727, %v729
        %v731 = vrot.slane %v722, %v730
        %v733 = vunpack.c.l.s4 1966171168
        %v734 = vunpack.c.0.s8 %v733
        %v735 = vlaneseq
        %v736 = vshrl.u32 %v735, 7
        %v737 = vsub.s32 %v734, %v736
        %v738 = vrot.slane %v724, %v737
        %v739 = vcombine.high %v731, %v731
        %v740 = vcombine.high %v738, %v738
        %v742 = vunpack.c.l.s4 1966171168
        %v743 = vunpack.c.0.s8 %v742
        %v744 = vlaneseq
        %v745 = vshrl.u32 %v744, 7
        %v746 = vsub.s32 %v743, %v745
        %v747 = vrot.slane %v731, %v746
        %v749 = vunpack.c.l.s4 1966171168
        %v750 = vunpack.c.0.s8 %v749
        %v751 = vlaneseq
        %v752 = vshrl.u32 %v751, 7
        %v753 = vsub.s32 %v750, %v752
        %v754 = vrot.slane %v738, %v753
        %v756 = vunpack.c.l.s4 1966171168
        %v757 = vunpack.c.0.s8 %v756
        %v758 = vlaneseq
        %v759 = vshrl.u32 %v758, 7
        %v760 = vsub.s32 %v757, %v759
        %v761 = vrot.slane %v739, %v760
        %v763 = vunpack.c.l.s4 1966171168
        %v764 = vunpack.c.0.s8 %v763
        %v765 = vlaneseq
        %v766 = vshrl.u32 %v765, 7
        %v767 = vsub.s32 %v764, %v766
        %v768 = vrot.slane %v740, %v767
        %v769 = vcombine.high %v747, %v747
        %v770 = vcombine.high %v754, %v754
        %v771 = vcombine.high %v761, %v761
        %v772 = vcombine.high %v768, %v768
        %v773 = vlaneseq
        %v774 = vshrl.u32 %v773, 7
        %v775 = vsub.s32 0, %v774
        %v776 = vrot.slane %v747, %v775
        %v777 = vlaneseq
        %v778 = vshrl.u32 %v777, 7
        %v779 = vsub.s32 0, %v778
        %v780 = vrot.slane %v761, %v779
        %v781 = vlaneseq
        %v782 = vshrl.u32 %v781, 7
        %v783 = vsub.s32 0, %v782
        %v784 = vrot.slane %v769, %v783
        %v785 = vlaneseq
        %v786 = vshrl.u32 %v785, 7
        %v787 = vsub.s32 0, %v786
        %v788 = vrot.slane %v771, %v787
        %v789 = vlaneseq
        %v790 = vshrl.u32 %v789, 7
        %v791 = vsub.s32 0, %v790
        %v792 = vrot.slane %v754, %v791
        %v793 = vlaneseq
        %v794 = vshrl.u32 %v793, 7
        %v795 = vsub.s32 0, %v794
        %v796 = vrot.slane %v768, %v795
        %v797 = vlaneseq
        %v798 = vshrl.u32 %v797, 7
        %v799 = vsub.s32 0, %v798
        %v800 = vrot.slane %v770, %v799
        %v801 = vlaneseq
        %v802 = vshrl.u32 %v801, 7
        %v803 = vsub.s32 0, %v802
        %v804 = vrot.slane %v772, %v803
        %v813 = vadd.f32 %v660, %v776
        %v814 = vadd.f32 %v663, %v776
        %v815 = vadd.f32 %v668, %v780
        %v816 = vadd.f32 %v671, %v780
        %v817 = vadd.f32 %v676, %v784
        %v818 = vadd.f32 %v679, %v784
        %v819 = vadd.f32 %v684, %v788
        %v820 = vadd.f32 %v687, %v788
        %v821 = vadd.f32 %v692, %v792
        %v822 = vadd.f32 %v695, %v792
        %v823 = vadd.f32 %v700, %v796
        %v824 = vadd.f32 %v703, %v796
        %v825 = vadd.f32 %v708, %v800
        %v826 = vadd.f32 %v711, %v800
        %v827 = vadd.f32 %v716, %v804
        %v828 = vadd.f32 %v719, %v804
        %v829 = vmax.f32 %v813, 0.0
        %v830 = vmax.f32 %v814, 0.0
        %v831 = vmax.f32 %v815, 0.0
        %v832 = vmax.f32 %v816, 0.0
        %v833 = vmax.f32 %v817, 0.0
        %v834 = vmax.f32 %v818, 0.0
        %v835 = vmax.f32 %v819, 0.0
        %v836 = vmax.f32 %v820, 0.0
        %v837 = vmax.f32 %v821, 0.0
        %v838 = vmax.f32 %v822, 0.0
        %v839 = vmax.f32 %v823, 0.0
        %v840 = vmax.f32 %v824, 0.0
        %v841 = vmax.f32 %v825, 0.0
        %v842 = vmax.f32 %v826, 0.0
        %v843 = vmax.f32 %v827, 0.0
        %v844 = vmax.f32 %v828, 0.0
        %v845 = vpack.c.bf16 %v830, %v829
        %v846 = vpack.c.bf16 %v832, %v831
        %v847 = vpack.c.bf16 %v834, %v833
        %v848 = vpack.c.bf16 %v836, %v835
        %v849 = vpack.c.bf16 %v838, %v837
        %v850 = vpack.c.bf16 %v840, %v839
        %v851 = vpack.c.bf16 %v842, %v841
        %v852 = vpack.c.bf16 %v844, %v843
        %v853 = vld [vmem:[#allocation8] sm:$0xf]
        %v854 = vld [vmem:[#allocation8 + $0x4] sm:$0xf]
        %v855 = vld [vmem:[#allocation8 + $0x8] sm:$0xf]
        %v856 = vld [vmem:[#allocation8 + $0xc] sm:$0xf]
        %v857 = vld [vmem:[#allocation8 + $0x10] sm:$0xf]
        %v858 = vld [vmem:[#allocation8 + $0x14] sm:$0xf]
        %v859 = vld [vmem:[#allocation8 + $0x18] sm:$0xf]
        %v860 = vld [vmem:[#allocation8 + $0x1c] sm:$0xf]
        %v861 = vld [vmem:[#allocation8 + $0x20] sm:$0xf]
        %v862 = vld [vmem:[#allocation8 + $0x24] sm:$0xf]
        %v863 = vld [vmem:[#allocation8 + $0x28] sm:$0xf]
        %v864 = vld [vmem:[#allocation8 + $0x2c] sm:$0xf]
        %v865 = vld [vmem:[#allocation8 + $0x30] sm:$0xf]
        %v866 = vld [vmem:[#allocation8 + $0x34] sm:$0xf]
        %v867 = vld [vmem:[#allocation8 + $0x38] sm:$0xf]
        %v868 = vld [vmem:[#allocation8 + $0x3c] sm:$0xf]
        %v869 = vld [vmem:[#allocation10] sm:$0x1]
        %v871 = vlaneseq
        %v872 = vshrl.u32 %v871, 7
        %v873 = vsub.s32 0, %v872
        %v874 = vrot.slane %v869, %v873
        %v892 = vunpack.c.l.b16 %v853
        %v893 = vunpack.c.l.b16 %v854
        %v894 = vunpack.c.l.b16 %v855
        %v895 = vunpack.c.l.b16 %v856
        %v896 = vunpack.c.l.b16 %v857
        %v897 = vunpack.c.l.b16 %v858
        %v898 = vunpack.c.l.b16 %v859
        %v899 = vunpack.c.l.b16 %v860
        %v900 = vunpack.c.l.b16 %v861
        %v901 = vunpack.c.l.b16 %v862
        %v902 = vunpack.c.l.b16 %v863
        %v903 = vunpack.c.l.b16 %v864
        %v904 = vunpack.c.l.b16 %v865
        %v905 = vunpack.c.l.b16 %v866
        %v906 = vunpack.c.l.b16 %v867
        %v907 = vunpack.c.l.b16 %v868
        %v908 = vpack.c.b16 %v893, %v892
        %v909 = vpack.c.b16 %v895, %v894
        %v910 = vpack.c.b16 %v897, %v896
        %v911 = vpack.c.b16 %v899, %v898
        %v912 = vpack.c.b16 %v901, %v900
        %v913 = vpack.c.b16 %v903, %v902
        %v914 = vpack.c.b16 %v905, %v904
        %v915 = vpack.c.b16 %v907, %v906
        %924 = vmatprep.subr.bf16.mxu0 0
        %925 = vmatpush1.bf16.msra.mxu0 %v908
        %926 = vmatprep.subr.bf16.mxu0 0
        %927 = vmatpush1.bf16.msra.mxu0 %v909
        %928 = vmatprep.subr.bf16.mxu0 0
        %929 = vmatpush1.bf16.msra.mxu0 %v910
        %930 = vmatprep.subr.bf16.mxu0 0
        %931 = vmatpush1.bf16.msra.mxu0 %v911
        %932 = vmatprep.subr.bf16.mxu0 0
        %933 = vmatpush1.bf16.msra.mxu0 %v912
        %934 = vmatprep.subr.bf16.mxu0 0
        %935 = vmatpush1.bf16.msra.mxu0 %v913
        %936 = vmatprep.subr.bf16.mxu0 0
        %937 = vmatpush1.bf16.msra.mxu0 %v914
        %938 = vmatprep.subr.bf16.mxu0 0
        %939 = vmatpush1.bf16.msra.mxu0 %v915
        %940 = vmatprep.subr.bf16.mxu0 0
        %941 = vmatpush1.bf16.msra.mxu0 0
        %942 = vmatprep.subr.bf16.mxu0 0
        %943 = vmatpush1.bf16.msra.mxu0 0
        %944 = vmatprep.subr.bf16.mxu0 0
        %945 = vmatpush1.bf16.msra.mxu0 0
        %946 = vmatprep.subr.bf16.mxu0 0
        %947 = vmatpush1.bf16.msra.mxu0 0
        %948 = vmatprep.subr.bf16.mxu0 0
        %949 = vmatpush1.bf16.msra.mxu0 0
        %950 = vmatprep.subr.bf16.mxu0 0
        %951 = vmatpush1.bf16.msra.mxu0 0
        %952 = vmatprep.subr.bf16.mxu0 0
        %953 = vmatpush1.bf16.msra.mxu0 0
        %954 = vmatprep.subr.bf16.mxu0 0
        %955 = vmatpush1.bf16.msra.mxu0 0
        %956 = vmatprep.mubr.bf16.mxu0 0
        %957 = vmatmul.mubr.bf16.gmra.mrb[0].mxu0 %v845
        %v958 = vpop.f32.mrb[0].mxu0
        %v959 = vadd.f32 %v874, %v958
        %v960 = vpop.f32.mrb[0].mxu0
        %v961 = vpop.f32.mrb[0].mxu0
        %v962 = vadd.f32 %v874, %v961
        %v963 = vpop.f32.mrb[0].mxu0
        %964 = vmatprep.mubr.bf16.mxu0 0
        %965 = vmatmul.mubr.bf16.gmra.mrb[0].mxu0 %v846
        %v966 = vpop.f32.mrb[0].mxu0
        %v967 = vadd.f32 %v874, %v966
        %v968 = vpop.f32.mrb[0].mxu0
        %v969 = vpop.f32.mrb[0].mxu0
        %v970 = vadd.f32 %v874, %v969
        %v971 = vpop.f32.mrb[0].mxu0
        %972 = vmatprep.mubr.bf16.mxu0 0
        %973 = vmatmul.mubr.bf16.gmra.mrb[0].mxu0 %v847
        %v974 = vpop.f32.mrb[0].mxu0
        %v975 = vadd.f32 %v874, %v974
        %v976 = vpop.f32.mrb[0].mxu0
        %v977 = vpop.f32.mrb[0].mxu0
        %v978 = vadd.f32 %v874, %v977
        %v979 = vpop.f32.mrb[0].mxu0
        %980 = vmatprep.mubr.bf16.mxu0 0
        %981 = vmatmul.mubr.bf16.gmra.mrb[0].mxu0 %v848
        %v982 = vpop.f32.mrb[0].mxu0
        %v983 = vadd.f32 %v874, %v982
        %v984 = vpop.f32.mrb[0].mxu0
        %v985 = vpop.f32.mrb[0].mxu0
        %v986 = vadd.f32 %v874, %v985
        %v987 = vpop.f32.mrb[0].mxu0
        %988 = vmatprep.mubr.bf16.mxu0 0
        %989 = vmatmul.mubr.bf16.gmra.mrb[0].mxu0 %v849
        %v990 = vpop.f32.mrb[0].mxu0
        %v991 = vadd.f32 %v874, %v990
        %v992 = vpop.f32.mrb[0].mxu0
        %v993 = vpop.f32.mrb[0].mxu0
        %v994 = vadd.f32 %v874, %v993
        %v995 = vpop.f32.mrb[0].mxu0
        %996 = vmatprep.mubr.bf16.mxu0 0
        %997 = vmatmul.mubr.bf16.gmra.mrb[0].mxu0 %v850
        %v998 = vpop.f32.mrb[0].mxu0
        %v999 = vadd.f32 %v874, %v998
        %v1000 = vpop.f32.mrb[0].mxu0
        %v1001 = vpop.f32.mrb[0].mxu0
        %v1002 = vadd.f32 %v874, %v1001
        %v1003 = vpop.f32.mrb[0].mxu0
        %1004 = vmatprep.mubr.bf16.mxu0 0
        %1005 = vmatmul.mubr.bf16.gmra.mrb[0].mxu0 %v851
        %v1006 = vpop.f32.mrb[0].mxu0
        %v1007 = vadd.f32 %v874, %v1006
        %v1008 = vpop.f32.mrb[0].mxu0
        %v1009 = vpop.f32.mrb[0].mxu0
        %v1010 = vadd.f32 %v874, %v1009
        %v1011 = vpop.f32.mrb[0].mxu0
        %1012 = vmatprep.mubr.bf16.mxu0 0
        %1013 = vmatmul.mubr.bf16.gmra.mrb[0].mxu0 %v852
        %v1014 = vpop.f32.mrb[0].mxu0
        %v1015 = vadd.f32 %v874, %v1014
        %v1016 = vpop.f32.mrb[0].mxu0
        %v1017 = vpop.f32.mrb[0].mxu0
        %v1018 = vadd.f32 %v874, %v1017
        %v1019 = vpop.f32.mrb[0].mxu0
        %1020 = vdwg.mxu0
        %v1021 = vmax.f32 %v959, 0.0
        %v1022 = vmax.f32 %v962, 0.0
        %v1023 = vmax.f32 %v967, 0.0
        %v1024 = vmax.f32 %v970, 0.0
        %v1025 = vmax.f32 %v975, 0.0
        %v1026 = vmax.f32 %v978, 0.0
        %v1027 = vmax.f32 %v983, 0.0
        %v1028 = vmax.f32 %v986, 0.0
        %v1029 = vmax.f32 %v991, 0.0
        %v1030 = vmax.f32 %v994, 0.0
        %v1031 = vmax.f32 %v999, 0.0
        %v1032 = vmax.f32 %v1002, 0.0
        %v1033 = vmax.f32 %v1007, 0.0
        %v1034 = vmax.f32 %v1010, 0.0
        %v1035 = vmax.f32 %v1015, 0.0
        %v1036 = vmax.f32 %v1018, 0.0
        %v1037 = vadd.f32 %v1021, %v1022
        %v1038 = vrot.slane %v1037, 4
        %v1039 = vadd.f32 %v1037, %v1038
        %v1040 = vrot.slane %v1039, 2
        %v1041 = vadd.f32 %v1039, %v1040
        %v1042 = vrot.slane %v1041, 1
        %v1043 = vadd.f32 %v1041, %v1042
        %v1044 = vadd.f32 %v1023, %v1024
        %v1045 = vrot.slane %v1044, 4
        %v1046 = vadd.f32 %v1044, %v1045
        %v1047 = vrot.slane %v1046, 2
        %v1048 = vadd.f32 %v1046, %v1047
        %v1049 = vrot.slane %v1048, 1
        %v1050 = vadd.f32 %v1048, %v1049
        %v1051 = vadd.f32 %v1025, %v1026
        %v1052 = vrot.slane %v1051, 4
        %v1053 = vadd.f32 %v1051, %v1052
        %v1054 = vrot.slane %v1053, 2
        %v1055 = vadd.f32 %v1053, %v1054
        %v1056 = vrot.slane %v1055, 1
        %v1057 = vadd.f32 %v1055, %v1056
        %v1058 = vadd.f32 %v1027, %v1028
        %v1059 = vrot.slane %v1058, 4
        %v1060 = vadd.f32 %v1058, %v1059
        %v1061 = vrot.slane %v1060, 2
        %v1062 = vadd.f32 %v1060, %v1061
        %v1063 = vrot.slane %v1062, 1
        %v1064 = vadd.f32 %v1062, %v1063
        %v1065 = vadd.f32 %v1029, %v1030
        %v1066 = vrot.slane %v1065, 4
        %v1067 = vadd.f32 %v1065, %v1066
        %v1068 = vrot.slane %v1067, 2
        %v1069 = vadd.f32 %v1067, %v1068
        %v1070 = vrot.slane %v1069, 1
        %v1071 = vadd.f32 %v1069, %v1070
        %v1072 = vadd.f32 %v1031, %v1032
        %v1073 = vrot.slane %v1072, 4
        %v1074 = vadd.f32 %v1072, %v1073
        %v1075 = vrot.slane %v1074, 2
        %v1076 = vadd.f32 %v1074, %v1075
        %v1077 = vrot.slane %v1076, 1
        %v1078 = vadd.f32 %v1076, %v1077
        %v1079 = vadd.f32 %v1033, %v1034
        %v1080 = vrot.slane %v1079, 4
        %v1081 = vadd.f32 %v1079, %v1080
        %v1082 = vrot.slane %v1081, 2
        %v1083 = vadd.f32 %v1081, %v1082
        %v1084 = vrot.slane %v1083, 1
        %v1085 = vadd.f32 %v1083, %v1084
        %v1086 = vadd.f32 %v1035, %v1036
        %v1087 = vrot.slane %v1086, 4
        %v1088 = vadd.f32 %v1086, %v1087
        %v1089 = vrot.slane %v1088, 2
        %v1090 = vadd.f32 %v1088, %v1089
        %v1091 = vrot.slane %v1090, 1
        %v1092 = vadd.f32 %v1090, %v1091
        %v1093 = vrcp.pop 16.0
        %v1094 = vmul.f32 %v1043, %v1093
        %v1095 = vmul.f32 %v1050, %v1093
        %v1096 = vmul.f32 %v1057, %v1093
        %v1097 = vmul.f32 %v1064, %v1093
        %v1098 = vmul.f32 %v1071, %v1093
        %v1099 = vmul.f32 %v1078, %v1093
        %v1100 = vmul.f32 %v1085, %v1093
        %v1101 = vmul.f32 %v1092, %v1093
        %v1102 = vpack.c.bf16 %v1094, %v1094
        %v1103 = vpack.c.bf16 %v1095, %v1095
        %v1104 = vpack.c.bf16 %v1096, %v1096
        %v1105 = vpack.c.bf16 %v1097, %v1097
        %v1106 = vpack.c.bf16 %v1098, %v1098
        %v1107 = vpack.c.bf16 %v1099, %v1099
        %v1108 = vpack.c.bf16 %v1100, %v1100
        %v1109 = vpack.c.bf16 %v1101, %v1101
        %v1110 = vld [vmem:[#allocation11] sm:$0xf]
        %v1111 = vld [vmem:[#allocation11 + $0x4] sm:$0xf]
        %v1112 = vld [vmem:[#allocation11 + $0x8] sm:$0xf]
        %v1113 = vld [vmem:[#allocation11 + $0xc] sm:$0xf]
        %v1114 = vld [vmem:[#allocation11 + $0x10] sm:$0xf]
        %v1115 = vld [vmem:[#allocation11 + $0x14] sm:$0xf]
        %v1116 = vld [vmem:[#allocation11 + $0x18] sm:$0xf]
        %v1117 = vld [vmem:[#allocation11 + $0x1c] sm:$0xf]
        %v1118 = vld [vmem:[#allocation11 + $0x20] sm:$0xf]
        %v1119 = vld [vmem:[#allocation11 + $0x24] sm:$0xf]
        %v1120 = vld [vmem:[#allocation11 + $0x28] sm:$0xf]
        %v1121 = vld [vmem:[#allocation11 + $0x2c] sm:$0xf]
        %v1122 = vld [vmem:[#allocation11 + $0x30] sm:$0xf]
        %v1123 = vld [vmem:[#allocation11 + $0x34] sm:$0xf]
        %v1124 = vld [vmem:[#allocation11 + $0x38] sm:$0xf]
        %v1125 = vld [vmem:[#allocation11 + $0x3c] sm:$0xf]
        %v1126 = vld [vmem:[#allocation13] sm:$0x1]
        %v1128 = vlaneseq
        %v1129 = vshrl.u32 %v1128, 7
        %v1130 = vsub.s32 0, %v1129
        %v1131 = vrot.slane %v1126, %v1130
        %v1141 = vunpack.c.l.b16 %v1102
        %v1142 = vunpack.c.l.b16 %v1103
        %v1143 = vunpack.c.l.b16 %v1104
        %v1144 = vunpack.c.l.b16 %v1105
        %v1145 = vunpack.c.l.b16 %v1106
        %v1146 = vunpack.c.l.b16 %v1107
        %v1147 = vunpack.c.l.b16 %v1108
        %v1148 = vunpack.c.l.b16 %v1109
        %vm1149 = vcmask 1041409
        %v1150 = vsel %vm1149, %v1142, %v1141
        %vm1151 = vcmask 1042434
        %v1152 = vsel %vm1151, %v1143, %v1150
        %vm1153 = vcmask 1043459
        %v1154 = vsel %vm1153, %v1144, %v1152
        %vm1155 = vcmask 1044484
        %v1156 = vsel %vm1155, %v1145, %v1154
        %vm1157 = vcmask 1045509
        %v1158 = vsel %vm1157, %v1146, %v1156
        %vm1159 = vcmask 1046534
        %v1160 = vsel %vm1159, %v1147, %v1158
        %vm1161 = vcmask 1047559
        %v1162 = vsel %vm1161, %v1148, %v1160
        %v1163 = vpack.c.b16 %v1162, %v1162
        %v1181 = vunpack.c.l.b16 %v1110
        %v1182 = vunpack.c.l.b16 %v1111
        %v1183 = vunpack.c.l.b16 %v1112
        %v1184 = vunpack.c.l.b16 %v1113
        %v1185 = vunpack.c.l.b16 %v1114
        %v1186 = vunpack.c.l.b16 %v1115
        %v1187 = vunpack.c.l.b16 %v1116
        %v1188 = vunpack.c.l.b16 %v1117
        %v1189 = vunpack.c.l.b16 %v1118
        %v1190 = vunpack.c.l.b16 %v1119
        %v1191 = vunpack.c.l.b16 %v1120
        %v1192 = vunpack.c.l.b16 %v1121
        %v1193 = vunpack.c.l.b16 %v1122
        %v1194 = vunpack.c.l.b16 %v1123
        %v1195 = vunpack.c.l.b16 %v1124
        %v1196 = vunpack.c.l.b16 %v1125
        %v1197 = vpack.c.b16 %v1182, %v1181
        %v1198 = vpack.c.b16 %v1184, %v1183
        %v1199 = vpack.c.b16 %v1186, %v1185
        %v1200 = vpack.c.b16 %v1188, %v1187
        %v1201 = vpack.c.b16 %v1190, %v1189
        %v1202 = vpack.c.b16 %v1192, %v1191
        %v1203 = vpack.c.b16 %v1194, %v1193
        %v1204 = vpack.c.b16 %v1196, %v1195
        %1213 = vmatprep.subr.bf16.mxu0 0
        %1214 = vmatpush1.bf16.msra.mxu0 %v1197
        %1215 = vmatprep.subr.bf16.mxu0 0
        %1216 = vmatpush1.bf16.msra.mxu0 %v1198
        %1217 = vmatprep.subr.bf16.mxu0 0
        %1218 = vmatpush1.bf16.msra.mxu0 %v1199
        %1219 = vmatprep.subr.bf16.mxu0 0
        %1220 = vmatpush1.bf16.msra.mxu0 %v1200
        %1221 = vmatprep.subr.bf16.mxu0 0
        %1222 = vmatpush1.bf16.msra.mxu0 %v1201
        %1223 = vmatprep.subr.bf16.mxu0 0
        %1224 = vmatpush1.bf16.msra.mxu0 %v1202
        %1225 = vmatprep.subr.bf16.mxu0 0
        %1226 = vmatpush1.bf16.msra.mxu0 %v1203
        %1227 = vmatprep.subr.bf16.mxu0 0
        %1228 = vmatpush1.bf16.msra.mxu0 %v1204
        %1229 = vmatprep.subr.bf16.mxu0 0
        %1230 = vmatpush1.bf16.msra.mxu0 0
        %1231 = vmatprep.subr.bf16.mxu0 0
        %1232 = vmatpush1.bf16.msra.mxu0 0
        %1233 = vmatprep.subr.bf16.mxu0 0
        %1234 = vmatpush1.bf16.msra.mxu0 0
        %1235 = vmatprep.subr.bf16.mxu0 0
        %1236 = vmatpush1.bf16.msra.mxu0 0
        %1237 = vmatprep.subr.bf16.mxu0 0
        %1238 = vmatpush1.bf16.msra.mxu0 0
        %1239 = vmatprep.subr.bf16.mxu0 0
        %1240 = vmatpush1.bf16.msra.mxu0 0
        %1241 = vmatprep.subr.bf16.mxu0 0
        %1242 = vmatpush1.bf16.msra.mxu0 0
        %1243 = vmatprep.subr.bf16.mxu0 0
        %1244 = vmatpush1.bf16.msra.mxu0 0
        %1245 = vmatprep.mubr.bf16.mxu0 0
        %1246 = vmatmul.mubr.bf16.gmra.mrb[0].mxu0 %v1163
        %v1247 = vpop.f32.mrb[0].mxu0
        %v1248 = vadd.f32 %v1131, %v1247
        %v1249 = vpop.f32.mrb[0].mxu0
        %v1250 = vpop.f32.mrb[0].mxu0
        %v1251 = vpop.f32.mrb[0].mxu0
        %1252 = vdwg.mxu0
        %1253 = vst [vmem:[%s452] sm:$0xff] %v1248
        %s1254 = sand.u32 %s223, 1
        %s1255 = scalar_lea.sflag [#allocation4], %s1254
        %s1256 = sand.u32 %s223, 1
        %s1257 = smul.addr %s1256, 8
        %s1258 = scalar_lea.vmem [#allocation14], %s1257
        // Predicated region
        $region77: #{forward.12} parent=47 // pred_check
          %p1259 = pneg %p233
        $region78: #{forward.12} parent=47 // pred_check_branch
          %1261 = sbr.rel (%p1259) target = $region80
        $region79: #{forward.12} parent=47 // pred_region
          %s1262 = smul.u32 %s33, 3
          %s1263 = sadd.s32 %s1262, %s34
          %s1265 = ssub.s32 128, 128
          %1266 = vsyncadd %s1255, %s1265
          %s1267 = smul.addr %s1263, 128
          %s1268 = scalar_lea.hbm %s7, %s1267
          %s1270 = sshll.u32 %s1258, 4
          %s1271 = int_to_ptr.vmem [resolvable:$true] %s1270
          %1273 = dma.vmem_to_hbm [thread:$0]  %s1271, 128, %s1268, %s1255
        $region80: #{forward.12} parent=47 // pred_fallthru
          _
      $region48: #{forward.12} parent=5 // pred_fallthru
        _
      %p1274 = scmp.le.s32.totalorder 2, %s24
      // Predicated region
      $region81: #{forward.12} parent=5 // pred_check
        %p1275 = pneg %p1274
      $region82: #{forward.12} parent=5 // pred_check_branch
        %1277 = sbr.rel (%p1275) target = $region84
      $region83: #{forward.12} parent=5 // pred_region
        %s1278 = ssub.s32 %s24, 2
        // Predicated region
        $region85: #{forward.12} parent=83 // pred_check
          %p1279 = pneg %p239
        $region86: #{forward.12} parent=83 // pred_check_branch
          %1281 = sbr.rel (%p1279) target = $region88
        $region87: #{forward.12} parent=83 // pred_region
          %s1282 = sand.u32 %s224, 1
          %s1283 = scalar_lea.sflag [#allocation4], %s1282
          %s1284 = sand.u32 %s224, 1
          %s1285 = smul.addr %s1284, 8
          %s1286 = scalar_lea.vmem [#allocation14], %s1285
          %1287 = dma.done %s1283, 128
        $region88: #{forward.12} parent=83 // pred_fallthru
          _
      $region84: #{forward.12} parent=5 // pred_fallthru
        _
    $region6: #{forward.12} parent=1 // loop_footer
      %s28 = sadd.s32 1, %s24
    $region7: #{forward.12} parent=1 // loop_footer_branch
      %23 = sbr.rel target = $region3
    $region8: #{forward.12} parent=1 // loop_exit
      _
    %1288 = vsyncpa [#allocation3], 1
    %s1289 = scalar_lea.sflag [#allocation3], 1
    %1290 = vsyncpa %s1289, 1
    %1291 = vsyncpa [#allocation6], 1
    %s1292 = scalar_lea.sflag [#allocation6], 1
    %1293 = vsyncpa %s1292, 1
    %1294 = vsyncpa [#allocation9], 1
    %1295 = vsyncpa [#allocation12], 1
    %1296 = vsyncpa [#allocation4], 1
    %s1297 = scalar_lea.sflag [#allocation4], 1
    %1298 = vsyncpa %s1297, 1

// kernel: forward.16
$region0: #{forward.16}
  #allocation0 [shape = 'u32[]', space=smem, size = 0x4, offset = 0x4, fixed_abs, tag = 'smem constant byte address 0x4 - core index']
  #allocation1 [shape = 'u32[144,128]{1,0:T(1,128)}', space=vmem, size = 0x12000, scoped, tag = 'internal scratch']
  %s0 = inlined_call_operand.vmem [shape: f32[48,67], index: 0, kind: input, shape index: {}]
  %s1 = inlined_call_operand.vmem [shape: f32[2,1,24], index: 1, kind: input, shape index: {}]
  %s2 = inlined_call_operand.vmem [shape: f32[2,24,24], index: 2, kind: output, shape index: {}]
  %s3 = sld [smem:[#allocation0]]
  $region41: #{forward.16} parent=0
    _
  %s5 = ssub.s32 1, %s3
  %s6 = scalar_select 0, %s5, %s3
  loop: start=0, step=1, limit=4
  $region2: #{forward.16} parent=0 // loop_pre_header
    _
  $region3: #{forward.16} parent=0 // loop_header
    %s8 = sphi 0, %s12
    %p9 = scmp.ge.s32.totalorder %s8, 4
    %s18 = sphi 0, %s20
    %s21 = sphi 0, %s18
    %s22 = sphi 0, %s21
    %s38 = sphi 0, %s22
    %s44 = sphi 0, %s46
    %s47 = sphi 0, %s44
    %s48 = sphi 0, %s47
    %s64 = sphi 0, %s48
    %s70 = sphi 0, %s72
    %s73 = sphi 0, %s70
    %s74 = sphi 0, %s73
    %s90 = sphi 0, %s74
  $region4: #{forward.16} parent=0 // loop_header_branch
    %11 = sbr.rel (%p9) target = $region8
  $region5: #{forward.16} parent=0 // loop_body
    %s13 = ssub.s32 %s8, 1
    %s14 = ssub.s32 %s8, 2
    %s15 = sadd.s32 %s8, 1
    %s16 = ssub.s32 %s8, %s15
    %p17 = scmp.eq.s32.totalorder %s16, 0
    %s19 = sadd.s32 %s18, 1
    %s20 = scalar_select %p17, %s18, %s19
    %p23 = pneg %p17
    %p24 = scmp.eq.s32.totalorder %s8, 1
    %p25 = por %p23, %p24
    %p26 = scmp.ne.s32.totalorder %s18, %s21
    %p27 = scmp.eq.s32.totalorder %s8, 0
    %p28 = por %p26, %p27
    %p29 = scmp.ne.s32.totalorder %s18, %s21
    %p30 = scmp.eq.s32.totalorder %s13, 1
    %p31 = por %p29, %p30
    %p32 = scmp.ne.s32.totalorder %s21, %s22
    %p33 = scmp.eq.s32.totalorder %s13, 0
    %p34 = por %p32, %p33
    %p35 = scmp.ne.s32.totalorder %s21, %s22
    %p36 = scmp.eq.s32.totalorder %s14, 1
    %p37 = por %p35, %p36
    %p39 = scmp.ne.s32.totalorder %s22, %s38
    %p40 = scmp.eq.s32.totalorder %s14, 0
    %p41 = por %p39, %p40
    %s42 = ssub.s32 %s8, %s15
    %p43 = scmp.eq.s32.totalorder %s42, 0
    %s45 = sadd.s32 %s44, 1
    %s46 = scalar_select %p43, %s44, %s45
    %p49 = pneg %p43
    %p50 = scmp.eq.s32.totalorder %s8, 1
    %p51 = por %p49, %p50
    %p52 = scmp.ne.s32.totalorder %s44, %s47
    %p53 = scmp.eq.s32.totalorder %s8, 0
    %p54 = por %p52, %p53
    %p55 = scmp.ne.s32.totalorder %s44, %s47
    %p56 = scmp.eq.s32.totalorder %s13, 1
    %p57 = por %p55, %p56
    %p58 = scmp.ne.s32.totalorder %s47, %s48
    %p59 = scmp.eq.s32.totalorder %s13, 0
    %p60 = por %p58, %p59
    %p61 = scmp.ne.s32.totalorder %s47, %s48
    %p62 = scmp.eq.s32.totalorder %s14, 1
    %p63 = por %p61, %p62
    %p65 = scmp.ne.s32.totalorder %s48, %s64
    %p66 = scmp.eq.s32.totalorder %s14, 0
    %p67 = por %p65, %p66
    %s68 = ssub.s32 %s8, %s15
    %p69 = scmp.eq.s32.totalorder %s68, 0
    %s71 = sadd.s32 %s70, 1
    %s72 = scalar_select %p69, %s70, %s71
    %p75 = pneg %p69
    %p76 = scmp.eq.s32.totalorder %s8, 1
    %p77 = por %p75, %p76
    %p78 = scmp.ne.s32.totalorder %s70, %s73
    %p79 = scmp.eq.s32.totalorder %s8, 0
    %p80 = por %p78, %p79
    %p81 = scmp.ne.s32.totalorder %s70, %s73
    %p82 = scmp.eq.s32.totalorder %s13, 1
    %p83 = por %p81, %p82
    %p84 = scmp.ne.s32.totalorder %s73, %s74
    %p85 = scmp.eq.s32.totalorder %s13, 0
    %p86 = por %p84, %p85
    %p87 = scmp.ne.s32.totalorder %s73, %s74
    %p88 = scmp.eq.s32.totalorder %s14, 1
    %p89 = por %p87, %p88
    %p91 = scmp.ne.s32.totalorder %s74, %s90
    %p92 = scmp.eq.s32.totalorder %s14, 0
    %p93 = por %p91, %p92
    %p94 = scmp.le.s32.totalorder 1, %s8
    %p95 = scmp.lt.s32.totalorder %s8, 3
    %p96 = pnand %p94, %p95
    %p97 = pneg %p96
    // Predicated region
    $region9: #{forward.16} parent=5 // pred_check
      _
    $region10: #{forward.16} parent=5 // pred_check_branch
      %99 = sbr.rel (%p96) target = $region12
    $region11: #{forward.16} parent=5 // pred_region
      %s100 = ssub.s32 %s8, 1
    $region12: #{forward.16} parent=5 // pred_fallthru
      _
    %p101 = scmp.lt.s32.totalorder %s8, 2
    // Predicated region
    $region13: #{forward.16} parent=5 // pred_check
      %p102 = pneg %p101
    $region14: #{forward.16} parent=5 // pred_check_branch
      %104 = sbr.rel (%p102) target = $region16
    $region15: #{forward.16} parent=5 // pred_region
      // Predicated region
      $region17: #{forward.16} parent=15 // pred_check
        %p105 = pneg %p28
      $region18: #{forward.16} parent=15 // pred_check_branch
        %107 = sbr.rel (%p105) target = $region20
      $region19: #{forward.16} parent=15 // pred_region
        %s108 = smul.u32 3, %s8
        %p109 = scmp.lt.s32.totalorder %s108, 5
        %s110 = scalar_select %p109, %s108, 5
        %s111 = smul.addr %s110, 8
        %s112 = scalar_lea.vmem %s0, %s111
        %s113 = smul.u32 3, %s8
      $region20: #{forward.16} parent=15 // pred_fallthru
        _
      // Predicated region
      $region21: #{forward.16} parent=15 // pred_check
        %p114 = pneg %p54
      $region22: #{forward.16} parent=15 // pred_check_branch
        %116 = sbr.rel (%p114) target = $region24
      $region23: #{forward.16} parent=15 // pred_region
        %p117 = scmp.lt.s32.totalorder %s8, 1
        %s118 = scalar_select %p117, %s8, 1
        %s119 = scalar_lea.vmem %s1, %s118
      $region24: #{forward.16} parent=15 // pred_fallthru
        _
    $region16: #{forward.16} parent=5 // pred_fallthru
      _
    %p120 = scmp.le.s32.totalorder 1, %s8
    %p121 = scmp.lt.s32.totalorder %s8, 3
    %p122 = pnand %p120, %p121
    %p123 = pneg %p122
    // Predicated region
    $region25: #{forward.16} parent=5 // pred_check
      _
    $region26: #{forward.16} parent=5 // pred_check_branch
      %125 = sbr.rel (%p122) target = $region28
    $region27: #{forward.16} parent=5 // pred_region
      %s126 = ssub.s32 %s8, 1
      %s127 = smul.u32 3, %s13
      %p128 = scmp.lt.s32.totalorder %s127, 5
      %s129 = scalar_select %p128, %s127, 5
      %s130 = smul.addr %s129, 8
      %s131 = scalar_lea.vmem %s0, %s130
      %p132 = pneg %p34
      %p133 = pneg %p31
      %p134 = scmp.lt.s32.totalorder %s13, 1
      %s135 = scalar_select %p134, %s13, 1
      %s136 = scalar_lea.vmem %s1, %s135
      %p137 = pneg %p60
      %p138 = pneg %p57
      %p139 = pneg %p86
      %p140 = pneg %p83
      %p141 = scmp.lt.s32.totalorder %s13, 1
      %s142 = scalar_select %p141, %s13, 1
      %s143 = smul.addr %s142, 3
      %s144 = smul.addr %s143, 8
      %s145 = scalar_lea.vmem %s2, %s144
      %s146 = smul.u32 3, %s13
      %p147 = scmp.lt.s32.totalorder %s146, 5
      %s148 = scalar_select %p147, %s146, 5
      %s149 = smul.addr %s148, 8
      %s150 = scalar_lea.vmem %s0, %s149
      %s151 = smul.u32 3, %s13
      %p152 = scmp.lt.s32.totalorder %s13, 1
      %s153 = scalar_select %p152, %s13, 1
      %s154 = scalar_lea.vmem %s1, %s153
      %p155 = scmp.lt.s32.totalorder %s13, 1
      %s156 = scalar_select %p155, %s13, 1
      %s157 = smul.addr %s156, 3
      %s158 = smul.addr %s157, 8
      %s159 = scalar_lea.vmem %s2, %s158
      %v161 = vld [vmem:[%s150] sm:$0xff]
      %v162 = vld [vmem:[%s150 + $0x8] sm:$0xff]
      %v163 = vld [vmem:[%s150 + $0x10] sm:$0xff]
      %v164 = vpack.c.bf16 %v162, %v161
      %v165 = vpack.c.bf16 %v163, %v163
      %vm166 = vcmask 547840
      %v168 = vsel %vm166, %v164, 0
      %v171 = vsel %vm166, %v165, 0
      %173 = vmatprep.subr.bf16.mxu0 0
      %174 = vmatpush1.bf16.xpose.msra.mxu0 %v168
      %175 = vmatprep.subr.bf16.mxu0 0
      %176 = vmatpush1.bf16.xpose.msra.mxu0 %v171
      %177 = vmatprep.subr.bf16.mxu0 0
      %178 = vmatpush1.bf16.xpose.msra.mxu0 0
      %179 = vmatprep.subr.bf16.mxu0 0
      %180 = vmatpush1.bf16.xpose.msra.mxu0 0
      %181 = vmatprep.subr.bf16.mxu0 0
      %182 = vmatpush1.bf16.xpose.msra.mxu0 0
      %183 = vmatprep.subr.bf16.mxu0 0
      %184 = vmatpush1.bf16.xpose.msra.mxu0 0
      %185 = vmatprep.subr.bf16.mxu0 0
      %186 = vmatpush1.bf16.xpose.msra.mxu0 0
      %187 = vmatprep.subr.bf16.mxu0 0
      %188 = vmatpush1.bf16.xpose.msra.mxu0 0
      %189 = vmatprep.subr.bf16.mxu0 0
      %190 = vmatpush1.bf16.xpose.msra.mxu0 0
      %191 = vmatprep.subr.bf16.mxu0 0
      %192 = vmatpush1.bf16.xpose.msra.mxu0 0
      %193 = vmatprep.subr.bf16.mxu0 0
      %194 = vmatpush1.bf16.xpose.msra.mxu0 0
      %195 = vmatprep.subr.bf16.mxu0 0
      %196 = vmatpush1.bf16.xpose.msra.mxu0 0
      %197 = vmatprep.subr.bf16.mxu0 0
      %198 = vmatpush1.bf16.xpose.msra.mxu0 0
      %199 = vmatprep.subr.bf16.mxu0 0
      %200 = vmatpush1.bf16.xpose.msra.mxu0 0
      %201 = vmatprep.subr.bf16.mxu0 0
      %202 = vmatpush1.bf16.xpose.msra.mxu0 0
      %203 = vmatprep.subr.bf16.mxu0 0
      %204 = vmatpush1.bf16.xpose.msra.mxu0 0
      %205 = vmatprep.mubr.bf16.mxu0 0
      %206 = vmatmul.mubr.bf16.gmra.mrb[0].mxu0 %v168
      %v207 = vpop.f32.mrb[0].mxu0
      %v208 = vadd.f32 0.0, %v207
      %v209 = vpop.f32.mrb[0].mxu0
      %v210 = vpop.f32.mrb[0].mxu0
      %v211 = vadd.f32 0.0, %v210
      %v212 = vpop.f32.mrb[0].mxu0
      %213 = vmatprep.mubr.bf16.mxu0 0
      %214 = vmatmul.mubr.bf16.gmra.mrb[0].mxu0 %v171
      %v215 = vpop.f32.mrb[0].mxu0
      %v216 = vadd.f32 0.0, %v215
      %v217 = vpop.f32.mrb[0].mxu0
      %v218 = vpop.f32.mrb[0].mxu0
      %v219 = vpop.f32.mrb[0].mxu0
      %220 = vdwg.mxu0
      %v221 = vld [vmem:[%s154] sm:$0x1]
      %v222 = vmul.f32 %v208, 2.0
      %v223 = vmul.f32 %v211, 2.0
      %v224 = vmul.f32 %v216, 2.0
      %v226 = vlaneseq
      %v227 = vshrl.u32 %v226, 7
      %v228 = vsub.s32 0, %v227
      %v229 = vrot.slane %v221, %v228
      %v231 = vsub.f32 %v229, %v222
      %v232 = vsub.f32 %v229, %v223
      %v233 = vsub.f32 %v229, %v224
      %vm234 = vcmask 195584
      %235 = vst.msk [vmem:[%s159] sm:$0xff] %vm234, %v231
      %236 = vst.msk [vmem:[%s159 + $0x8] sm:$0xff] %vm234, %v232
      %237 = vst.msk [vmem:[%s159 + $0x10] sm:$0xff] %vm234, %v233
      %p238 = scmp.lt.s32.totalorder %s13, 1
      %s239 = scalar_select %p238, %s13, 1
      %s240 = smul.addr %s239, 3
      %s241 = smul.addr %s240, 8
      %s242 = scalar_lea.vmem %s2, %s241
      // Predicated region
      $region29: #{forward.16} parent=27 // pred_check
        %p243 = pneg %p83
      $region30: #{forward.16} parent=27 // pred_check_branch
        %245 = sbr.rel (%p243) target = $region32
      $region31: #{forward.16} parent=27 // pred_region
        _
      $region32: #{forward.16} parent=27 // pred_fallthru
        _
    $region28: #{forward.16} parent=5 // pred_fallthru
      _
    %p246 = scmp.le.s32.totalorder 2, %s8
    // Predicated region
    $region33: #{forward.16} parent=5 // pred_check
      %p247 = pneg %p246
    $region34: #{forward.16} parent=5 // pred_check_branch
      %249 = sbr.rel (%p247) target = $region36
    $region35: #{forward.16} parent=5 // pred_region
      %s250 = ssub.s32 %s8, 2
      // Predicated region
      $region37: #{forward.16} parent=35 // pred_check
        %p251 = pneg %p89
      $region38: #{forward.16} parent=35 // pred_check_branch
        %253 = sbr.rel (%p251) target = $region40
      $region39: #{forward.16} parent=35 // pred_region
        %p254 = scmp.lt.s32.totalorder %s14, 1
        %s255 = scalar_select %p254, %s14, 1
        %s256 = smul.addr %s255, 3
        %s257 = smul.addr %s256, 8
        %s258 = scalar_lea.vmem %s2, %s257
      $region40: #{forward.16} parent=35 // pred_fallthru
        _
    $region36: #{forward.16} parent=5 // pred_fallthru
      _
  $region6: #{forward.16} parent=0 // loop_footer
    %s12 = sadd.s32 1, %s8
  $region7: #{forward.16} parent=0 // loop_footer_branch
    %7 = sbr.rel target = $region3
  $region8: #{forward.16} parent=0 // loop_exit
    _

// kernel: forward.17
$region0: #{forward.17}
  #allocation0 [shape = 'u32[]', space=smem, size = 0x4, offset = 0x4, fixed_abs, tag = 'smem constant byte address 0x4 - core index']
  #allocation1 [shape = 'u32[144,128]{1,0:T(1,128)}', space=vmem, size = 0x12000, scoped, tag = 'internal scratch']
  %s0 = inlined_call_operand.vmem [shape: f32[48,67], index: 0, kind: input, shape index: {}]
  %s1 = inlined_call_operand.vmem [shape: bf16[67,128], index: 1, kind: input, shape index: {}]
  %s2 = inlined_call_operand.vmem [shape: bf16[67,128], index: 2, kind: input, shape index: {}]
  %s3 = inlined_call_operand.vmem [shape: f32[1,128], index: 3, kind: input, shape index: {}]
  %s4 = inlined_call_operand.hbm [shape: f32[48,128], index: 4, kind: output, shape index: {0}]
  %s5 = inlined_call_operand.hbm [shape: bf16[48,128], index: 5, kind: output, shape index: {1}]
  %6 = xla_tuple %s4, %s5
  %s7 = sld [smem:[#allocation0]]
  $region57: #{forward.17} parent=0
    _
  %s9 = ssub.s32 1, %s7
  %s10 = scalar_select 0, %s9, %s7
  $region1: #{forward.17} parent=0
    #allocation2 [shape = 'u8[24576]{0}', space=vmem, size = 0x6000, scoped, tag = 'output window, operand 0']
    #allocation3 [shape = 's32[2]{0}', space=sflag, size = 0x8, scoped, tag = 'scoped memory for forward.17']
    #allocation4 [shape = 'u8[12288]{0}', space=vmem, size = 0x3000, scoped, tag = 'output window, operand 1']
    #allocation5 [shape = 's32[2]{0}', space=sflag, size = 0x8, scoped, tag = 'scoped memory for forward.17']
    %11 = vsyncpa [#allocation3], 0
    %s12 = scalar_lea.sflag [#allocation3], 1
    %13 = vsyncpa %s12, 0
    %14 = vsyncpa [#allocation5], 0
    %s15 = scalar_lea.sflag [#allocation5], 1
    %16 = vsyncpa %s15, 0
    loop: start=0, step=1, limit=4
    $region2: #{forward.17} parent=1 // loop_pre_header
      _
    $region3: #{forward.17} parent=1 // loop_header
      %s18 = sphi 0, %s22
      %p19 = scmp.ge.s32.totalorder %s18, 4
      %s28 = sphi 0, %s30
      %s31 = sphi 0, %s28
      %s32 = sphi 0, %s31
      %s48 = sphi 0, %s32
      %s52 = sphi 0, %s52
      %s54 = sphi 0, %s52
      %s55 = sphi 0, %s54
      %s69 = sphi 0, %s55
      %s73 = sphi 0, %s73
      %s75 = sphi 0, %s73
      %s76 = sphi 0, %s75
      %s90 = sphi 0, %s76
      %s94 = sphi 0, %s94
      %s96 = sphi 0, %s94
      %s97 = sphi 0, %s96
      %s111 = sphi 0, %s97
      %s117 = sphi 0, %s119
      %s120 = sphi 0, %s117
      %s121 = sphi 0, %s120
      %s137 = sphi 0, %s121
      %s143 = sphi 0, %s145
      %s146 = sphi 0, %s143
      %s147 = sphi 0, %s146
      %s163 = sphi 0, %s147
    $region4: #{forward.17} parent=1 // loop_header_branch
      %21 = sbr.rel (%p19) target = $region8
    $region5: #{forward.17} parent=1 // loop_body
      %s23 = ssub.s32 %s18, 1
      %s24 = ssub.s32 %s18, 2
      %s25 = sadd.s32 %s18, 1
      %s26 = ssub.s32 %s18, %s25
      %p27 = scmp.eq.s32.totalorder %s26, 0
      %s29 = sadd.s32 %s28, 1
      %s30 = scalar_select %p27, %s28, %s29
      %p33 = pneg %p27
      %p34 = scmp.eq.s32.totalorder %s18, 1
      %p35 = por %p33, %p34
      %p36 = scmp.ne.s32.totalorder %s28, %s31
      %p37 = scmp.eq.s32.totalorder %s18, 0
      %p38 = por %p36, %p37
      %p39 = scmp.ne.s32.totalorder %s28, %s31
      %p40 = scmp.eq.s32.totalorder %s23, 1
      %p41 = por %p39, %p40
      %p42 = scmp.ne.s32.totalorder %s31, %s32
      %p43 = scmp.eq.s32.totalorder %s23, 0
      %p44 = por %p42, %p43
      %p45 = scmp.ne.s32.totalorder %s31, %s32
      %p46 = scmp.eq.s32.totalorder %s24, 1
      %p47 = por %p45, %p46
      %p49 = scmp.ne.s32.totalorder %s32, %s48
      %p50 = scmp.eq.s32.totalorder %s24, 0
      %p51 = por %p49, %p50
      %s53 = sadd.s32 %s52, 1
      %p56 = scmp.eq.s32.totalorder %s18, 1
      %p57 = scmp.ne.s32.totalorder %s52, %s54
      %p58 = scmp.eq.s32.totalorder %s18, 0
      %p59 = por %p57, %p58
      %p60 = scmp.ne.s32.totalorder %s52, %s54
      %p61 = scmp.eq.s32.totalorder %s23, 1
      %p62 = por %p60, %p61
      %p63 = scmp.ne.s32.totalorder %s54, %s55
      %p64 = scmp.eq.s32.totalorder %s23, 0
      %p65 = por %p63, %p64
      %p66 = scmp.ne.s32.totalorder %s54, %s55
      %p67 = scmp.eq.s32.totalorder %s24, 1
      %p68 = por %p66, %p67
      %p70 = scmp.ne.s32.totalorder %s55, %s69
      %p71 = scmp.eq.s32.totalorder %s24, 0
      %p72 = por %p70, %p71
      %s74 = sadd.s32 %s73, 1
      %p77 = scmp.eq.s32.totalorder %s18, 1
      %p78 = scmp.ne.s32.totalorder %s73, %s75
      %p79 = scmp.eq.s32.totalorder %s18, 0
      %p80 = por %p78, %p79
      %p81 = scmp.ne.s32.totalorder %s73, %s75
      %p82 = scmp.eq.s32.totalorder %s23, 1
      %p83 = por %p81, %p82
      %p84 = scmp.ne.s32.totalorder %s75, %s76
      %p85 = scmp.eq.s32.totalorder %s23, 0
      %p86 = por %p84, %p85
      %p87 = scmp.ne.s32.totalorder %s75, %s76
      %p88 = scmp.eq.s32.totalorder %s24, 1
      %p89 = por %p87, %p88
      %p91 = scmp.ne.s32.totalorder %s76, %s90
      %p92 = scmp.eq.s32.totalorder %s24, 0
      %p93 = por %p91, %p92
      %s95 = sadd.s32 %s94, 1
      %p98 = scmp.eq.s32.totalorder %s18, 1
      %p99 = scmp.ne.s32.totalorder %s94, %s96
      %p100 = scmp.eq.s32.totalorder %s18, 0
      %p101 = por %p99, %p100
      %p102 = scmp.ne.s32.totalorder %s94, %s96
      %p103 = scmp.eq.s32.totalorder %s23, 1
      %p104 = por %p102, %p103
      %p105 = scmp.ne.s32.totalorder %s96, %s97
      %p106 = scmp.eq.s32.totalorder %s23, 0
      %p107 = por %p105, %p106
      %p108 = scmp.ne.s32.totalorder %s96, %s97
      %p109 = scmp.eq.s32.totalorder %s24, 1
      %p110 = por %p108, %p109
      %p112 = scmp.ne.s32.totalorder %s97, %s111
      %p113 = scmp.eq.s32.totalorder %s24, 0
      %p114 = por %p112, %p113
      %s115 = ssub.s32 %s18, %s25
      %p116 = scmp.eq.s32.totalorder %s115, 0
      %s118 = sadd.s32 %s117, 1
      %s119 = scalar_select %p116, %s117, %s118
      %p122 = pneg %p116
      %p123 = scmp.eq.s32.totalorder %s18, 1
      %p124 = por %p122, %p123
      %p125 = scmp.ne.s32.totalorder %s117, %s120
      %p126 = scmp.eq.s32.totalorder %s18, 0
      %p127 = por %p125, %p126
      %p128 = scmp.ne.s32.totalorder %s117, %s120
      %p129 = scmp.eq.s32.totalorder %s23, 1
      %p130 = por %p128, %p129
      %p131 = scmp.ne.s32.totalorder %s120, %s121
      %p132 = scmp.eq.s32.totalorder %s23, 0
      %p133 = por %p131, %p132
      %p134 = scmp.ne.s32.totalorder %s120, %s121
      %p135 = scmp.eq.s32.totalorder %s24, 1
      %p136 = por %p134, %p135
      %p138 = scmp.ne.s32.totalorder %s121, %s137
      %p139 = scmp.eq.s32.totalorder %s24, 0
      %p140 = por %p138, %p139
      %s141 = ssub.s32 %s18, %s25
      %p142 = scmp.eq.s32.totalorder %s141, 0
      %s144 = sadd.s32 %s143, 1
      %s145 = scalar_select %p142, %s143, %s144
      %p148 = pneg %p142
      %p149 = scmp.eq.s32.totalorder %s18, 1
      %p150 = por %p148, %p149
      %p151 = scmp.ne.s32.totalorder %s143, %s146
      %p152 = scmp.eq.s32.totalorder %s18, 0
      %p153 = por %p151, %p152
      %p154 = scmp.ne.s32.totalorder %s143, %s146
      %p155 = scmp.eq.s32.totalorder %s23, 1
      %p156 = por %p154, %p155
      %p157 = scmp.ne.s32.totalorder %s146, %s147
      %p158 = scmp.eq.s32.totalorder %s23, 0
      %p159 = por %p157, %p158
      %p160 = scmp.ne.s32.totalorder %s146, %s147
      %p161 = scmp.eq.s32.totalorder %s24, 1
      %p162 = por %p160, %p161
      %p164 = scmp.ne.s32.totalorder %s147, %s163
      %p165 = scmp.eq.s32.totalorder %s24, 0
      %p166 = por %p164, %p165
      %p167 = scmp.le.s32.totalorder 1, %s18
      %p168 = scmp.lt.s32.totalorder %s18, 3
      %p169 = pnand %p167, %p168
      %p170 = pneg %p169
      // Predicated region
      $region9: #{forward.17} parent=5 // pred_check
        _
      $region10: #{forward.17} parent=5 // pred_check_branch
        %172 = sbr.rel (%p169) target = $region12
      $region11: #{forward.17} parent=5 // pred_region
        %s173 = ssub.s32 %s18, 1
        // Predicated region
        $region13: #{forward.17} parent=11 // pred_check
          %p174 = pneg %p65
        $region14: #{forward.17} parent=11 // pred_check_branch
          %176 = sbr.rel (%p174) target = $region16
        $region15: #{forward.17} parent=11 // pred_region
          _
        $region16: #{forward.17} parent=11 // pred_fallthru
          _
        // Predicated region
        $region17: #{forward.17} parent=11 // pred_check
          %p177 = pneg %p86
        $region18: #{forward.17} parent=11 // pred_check_branch
          %179 = sbr.rel (%p177) target = $region20
        $region19: #{forward.17} parent=11 // pred_region
          _
        $region20: #{forward.17} parent=11 // pred_fallthru
          _
        // Predicated region
        $region21: #{forward.17} parent=11 // pred_check
          %p180 = pneg %p107
        $region22: #{forward.17} parent=11 // pred_check_branch
          %182 = sbr.rel (%p180) target = $region24
        $region23: #{forward.17} parent=11 // pred_region
          _
        $region24: #{forward.17} parent=11 // pred_fallthru
          _
      $region12: #{forward.17} parent=5 // pred_fallthru
        _
      %p183 = scmp.lt.s32.totalorder %s18, 2
      // Predicated region
      $region25: #{forward.17} parent=5 // pred_check
        %p184 = pneg %p183
      $region26: #{forward.17} parent=5 // pred_check_branch
        %186 = sbr.rel (%p184) target = $region28
      $region27: #{forward.17} parent=5 // pred_region
        // Predicated region
        $region29: #{forward.17} parent=27 // pred_check
          %p187 = pneg %p38
        $region30: #{forward.17} parent=27 // pred_check_branch
          %189 = sbr.rel (%p187) target = $region32
        $region31: #{forward.17} parent=27 // pred_region
          %s190 = smul.u32 3, %s18
          %p191 = scmp.lt.s32.totalorder %s190, 5
          %s192 = scalar_select %p191, %s190, 5
          %s193 = smul.addr %s192, 8
          %s194 = scalar_lea.vmem %s0, %s193
          %s195 = smul.u32 3, %s18
        $region32: #{forward.17} parent=27 // pred_fallthru
          _
      $region28: #{forward.17} parent=5 // pred_fallthru
        _
      %p196 = scmp.le.s32.totalorder 1, %s18
      %p197 = scmp.lt.s32.totalorder %s18, 3
      %p198 = pnand %p196, %p197
      %p199 = pneg %p198
      // Predicated region
      $region33: #{forward.17} parent=5 // pred_check
        _
      $region34: #{forward.17} parent=5 // pred_check_branch
        %201 = sbr.rel (%p198) target = $region36
      $region35: #{forward.17} parent=5 // pred_region
        %s202 = ssub.s32 %s18, 1
        %s203 = smul.u32 3, %s23
        %p204 = scmp.lt.s32.totalorder %s203, 5
        %s205 = scalar_select %p204, %s203, 5
        %s206 = smul.addr %s205, 8
        %s207 = scalar_lea.vmem %s0, %s206
        %p208 = pneg %p44
        %p209 = pneg %p41
        %p210 = pneg %p65
        %p211 = pneg %p62
        %p212 = pneg %p86
        %p213 = pneg %p83
        %p214 = pneg %p107
        %p215 = pneg %p104
        %p216 = pneg %p133
        %p217 = pneg %p130
        %s218 = sand.u32 %s120, 1
        %s219 = scalar_lea.sflag [#allocation3], %s218
        %s220 = sand.u32 %s120, 1
        %s221 = smul.addr %s220, 24
        %s222 = scalar_lea.vmem [#allocation2], %s221
        %p223 = pneg %p159
        %p224 = pneg %p156
        %s225 = sand.u32 %s146, 1
        %s226 = scalar_lea.sflag [#allocation5], %s225
        %s227 = sand.u32 %s146, 1
        %s228 = smul.addr %s227, 12
        %s229 = scalar_lea.vmem [#allocation4], %s228
        %s230 = smul.u32 3, %s23
        %p231 = scmp.lt.s32.totalorder %s230, 5
        %s232 = scalar_select %p231, %s230, 5
        %s233 = smul.addr %s232, 8
        %s234 = scalar_lea.vmem %s0, %s233
        %s235 = smul.u32 3, %s23
        %s236 = smul.u32 3, %s23
        %s237 = smul.u32 3, %s23
        %v239 = vld [vmem:[%s234] sm:$0xff]
        %v240 = vld [vmem:[%s234 + $0x8] sm:$0xff]
        %v241 = vld [vmem:[%s234 + $0x10] sm:$0xff]
        %v242 = vpack.c.bf16 %v240, %v239
        %v243 = vpack.c.bf16 %v241, %v241
        %v244 = vld [vmem:[%s1] sm:$0xf]
        %v245 = vld [vmem:[%s1 + $0x4] sm:$0xf]
        %v246 = vld [vmem:[%s1 + $0x8] sm:$0xf]
        %v247 = vld [vmem:[%s1 + $0xc] sm:$0xf]
        %v248 = vld [vmem:[%s1 + $0x10] sm:$0xf]
        %v249 = vld [vmem:[%s1 + $0x14] sm:$0xf]
        %v250 = vld [vmem:[%s1 + $0x18] sm:$0xf]
        %v251 = vld [vmem:[%s1 + $0x1c] sm:$0xf]
        %v252 = vld [vmem:[%s1 + $0x20] sm:$0x3]
        %v253 = vld [vmem:[%s3] sm:$0x1]
        %v255 = vlaneseq
        %v256 = vshrl.u32 %v255, 7
        %v257 = vsub.s32 0, %v256
        %v258 = vrot.slane %v253, %v257
        %v269 = vunpack.c.l.b16 %v244
        %v270 = vunpack.c.l.b16 %v245
        %v271 = vunpack.c.l.b16 %v246
        %v272 = vunpack.c.l.b16 %v247
        %v273 = vunpack.c.l.b16 %v248
        %v274 = vunpack.c.l.b16 %v249
        %v275 = vunpack.c.l.b16 %v250
        %v276 = vunpack.c.l.b16 %v251
        %v277 = vunpack.c.l.b16 %v252
        %v278 = vpack.c.b16 %v270, %v269
        %v279 = vpack.c.b16 %v272, %v271
        %v280 = vpack.c.b16 %v274, %v273
        %v281 = vpack.c.b16 %v276, %v275
        %v282 = vpack.c.b16 %v277, %v277
        %vm287 = vcmask 547840
        %v289 = vsel %vm287, %v242, 0
        %v292 = vsel %vm287, %v243, 0
        %vm294 = vcmask 1040384
        %vm295 = vcmask 1041408
        %v296 = vsel %vm294, 4294967295, 65535
        %v297 = vsel %vm295, %v296, 0
        %v299 = vand.u32 %v282, %v297
        %301 = vmatprep.subr.bf16.mxu0 0
        %302 = vmatpush1.bf16.msra.mxu0 %v278
        %303 = vmatprep.subr.bf16.mxu0 0
        %304 = vmatpush1.bf16.msra.mxu0 %v279
        %305 = vmatprep.subr.bf16.mxu0 0
        %306 = vmatpush1.bf16.msra.mxu0 %v280
        %307 = vmatprep.subr.bf16.mxu0 0
        %308 = vmatpush1.bf16.msra.mxu0 %v281
        %309 = vmatprep.subr.bf16.mxu0 0
        %310 = vmatpush1.bf16.msra.mxu0 %v299
        %311 = vmatprep.subr.bf16.mxu0 0
        %312 = vmatpush1.bf16.msra.mxu0 0
        %313 = vmatprep.subr.bf16.mxu0 0
        %314 = vmatpush1.bf16.msra.mxu0 0
        %315 = vmatprep.subr.bf16.mxu0 0
        %316 = vmatpush1.bf16.msra.mxu0 0
        %317 = vmatprep.subr.bf16.mxu0 0
        %318 = vmatpush1.bf16.msra.mxu0 0
        %319 = vmatprep.subr.bf16.mxu0 0
        %320 = vmatpush1.bf16.msra.mxu0 0
        %321 = vmatprep.subr.bf16.mxu0 0
        %322 = vmatpush1.bf16.msra.mxu0 0
        %323 = vmatprep.subr.bf16.mxu0 0
        %324 = vmatpush1.bf16.msra.mxu0 0
        %325 = vmatprep.subr.bf16.mxu0 0
        %326 = vmatpush1.bf16.msra.mxu0 0
        %327 = vmatprep.subr.bf16.mxu0 0
        %328 = vmatpush1.bf16.msra.mxu0 0
        %329 = vmatprep.subr.bf16.mxu0 0
        %330 = vmatpush1.bf16.msra.mxu0 0
        %331 = vmatprep.subr.bf16.mxu0 0
        %332 = vmatpush1.bf16.msra.mxu0 0
        %333 = vmatprep.mubr.bf16.mxu0 0
        %334 = vmatmul.mubr.bf16.gmra.mrb[0].mxu0 %v289
        %v335 = vpop.f32.mrb[0].mxu0
        %v336 = vadd.f32 %v258, %v335
        %v337 = vpop.f32.mrb[0].mxu0
        %v338 = vpop.f32.mrb[0].mxu0
        %v339 = vadd.f32 %v258, %v338
        %v340 = vpop.f32.mrb[0].mxu0
        %341 = vmatprep.mubr.bf16.mxu0 0
        %342 = vmatmul.mubr.bf16.gmra.mrb[0].mxu0 %v292
        %v343 = vpop.f32.mrb[0].mxu0
        %v344 = vadd.f32 %v258, %v343
        %v345 = vpop.f32.mrb[0].mxu0
        %v346 = vpop.f32.mrb[0].mxu0
        %v347 = vpop.f32.mrb[0].mxu0
        %348 = vdwg.mxu0
        %349 = vst [vmem:[%s222] sm:$0xff] %v336
        %350 = vst [vmem:[%s222 + $0x8] sm:$0xff] %v339
        %351 = vst [vmem:[%s222 + $0x10] sm:$0xff] %v344
        %v352 = vld [vmem:[%s2] sm:$0xf]
        %v353 = vld [vmem:[%s2 + $0x4] sm:$0xf]
        %v354 = vld [vmem:[%s2 + $0x8] sm:$0xf]
        %v355 = vld [vmem:[%s2 + $0xc] sm:$0xf]
        %v356 = vld [vmem:[%s2 + $0x10] sm:$0xf]
        %v357 = vld [vmem:[%s2 + $0x14] sm:$0xf]
        %v358 = vld [vmem:[%s2 + $0x18] sm:$0xf]
        %v359 = vld [vmem:[%s2 + $0x1c] sm:$0xf]
        %v360 = vld [vmem:[%s2 + $0x20] sm:$0x3]
        %v370 = vunpack.c.l.b16 %v352
        %v371 = vunpack.c.l.b16 %v353
        %v372 = vunpack.c.l.b16 %v354
        %v373 = vunpack.c.l.b16 %v355
        %v374 = vunpack.c.l.b16 %v356
        %v375 = vunpack.c.l.b16 %v357
        %v376 = vunpack.c.l.b16 %v358
        %v377 = vunpack.c.l.b16 %v359
        %v378 = vunpack.c.l.b16 %v360
        %v379 = vpack.c.b16 %v371, %v370
        %v380 = vpack.c.b16 %v373, %v372
        %v381 = vpack.c.b16 %v375, %v374
        %v382 = vpack.c.b16 %v377, %v376
        %v383 = vpack.c.b16 %v378, %v378
        %v389 = vand.u32 %v383, %v297
        %391 = vmatprep.subr.bf16.mxu0 0
        %392 = vmatpush1.bf16.msra.mxu0 %v379
        %393 = vmatprep.subr.bf16.mxu0 0
        %394 = vmatpush1.bf16.msra.mxu0 %v380
        %395 = vmatprep.subr.bf16.mxu0 0
        %396 = vmatpush1.bf16.msra.mxu0 %v381
        %397 = vmatprep.subr.bf16.mxu0 0
        %398 = vmatpush1.bf16.msra.mxu0 %v382
        %399 = vmatprep.subr.bf16.mxu0 0
        %400 = vmatpush1.bf16.msra.mxu0 %v389
        %401 = vmatprep.subr.bf16.mxu0 0
        %402 = vmatpush1.bf16.msra.mxu0 0
        %403 = vmatprep.subr.bf16.mxu0 0
        %404 = vmatpush1.bf16.msra.mxu0 0
        %405 = vmatprep.subr.bf16.mxu0 0
        %406 = vmatpush1.bf16.msra.mxu0 0
        %407 = vmatprep.subr.bf16.mxu0 0
        %408 = vmatpush1.bf16.msra.mxu0 0
        %409 = vmatprep.subr.bf16.mxu0 0
        %410 = vmatpush1.bf16.msra.mxu0 0
        %411 = vmatprep.subr.bf16.mxu0 0
        %412 = vmatpush1.bf16.msra.mxu0 0
        %413 = vmatprep.subr.bf16.mxu0 0
        %414 = vmatpush1.bf16.msra.mxu0 0
        %415 = vmatprep.subr.bf16.mxu0 0
        %416 = vmatpush1.bf16.msra.mxu0 0
        %417 = vmatprep.subr.bf16.mxu0 0
        %418 = vmatpush1.bf16.msra.mxu0 0
        %419 = vmatprep.subr.bf16.mxu0 0
        %420 = vmatpush1.bf16.msra.mxu0 0
        %421 = vmatprep.subr.bf16.mxu0 0
        %422 = vmatpush1.bf16.msra.mxu0 0
        %423 = vmatprep.mubr.bf16.mxu0 0
        %424 = vmatmul.mubr.bf16.gmra.mrb[0].mxu0 %v289
        %v425 = vpop.f32.mrb[0].mxu0
        %v426 = vadd.f32 0.0, %v425
        %v427 = vpop.f32.mrb[0].mxu0
        %v428 = vpop.f32.mrb[0].mxu0
        %v429 = vadd.f32 0.0, %v428
        %v430 = vpop.f32.mrb[0].mxu0
        %431 = vmatprep.mubr.bf16.mxu0 0
        %432 = vmatmul.mubr.bf16.gmra.mrb[0].mxu0 %v292
        %v433 = vpop.f32.mrb[0].mxu0
        %v434 = vadd.f32 0.0, %v433
        %v435 = vpop.f32.mrb[0].mxu0
        %v436 = vpop.f32.mrb[0].mxu0
        %v437 = vpop.f32.mrb[0].mxu0
        %438 = vdwg.mxu0
        %v439 = vpack.c.bf16 %v429, %v426
        %v440 = vpack.c.bf16 %v434, %v434
        %v443 = vunpack.c.l.b16 %v439
        %v444 = vunpack.c.h.b16 %v439
        %v445 = vunpack.c.l.b16 %v440
        %v446 = vpack.c.b16 %v443, %v443
        %v447 = vpack.c.b16 %v444, %v444
        %v448 = vpack.c.b16 %v445, %v445
        %452 = vst [vmem:[%s229] sm:$0xf] %v446
        %453 = vst [vmem:[%s229 + $0x4] sm:$0xf] %v447
        %454 = vst [vmem:[%s229 + $0x8] sm:$0xf] %v448
        %s455 = sand.u32 %s120, 1
        %s456 = scalar_lea.sflag [#allocation3], %s455
        %s457 = sand.u32 %s120, 1
        %s458 = smul.addr %s457, 24
        %s459 = scalar_lea.vmem [#allocation2], %s458
        %s460 = sand.u32 %s146, 1
        %s461 = scalar_lea.sflag [#allocation5], %s460
        %s462 = sand.u32 %s146, 1
        %s463 = smul.addr %s462, 12
        %s464 = scalar_lea.vmem [#allocation4], %s463
        // Predicated region
        $region37: #{forward.17} parent=35 // pred_check
          %p465 = pneg %p130
        $region38: #{forward.17} parent=35 // pred_check_branch
          %467 = sbr.rel (%p465) target = $region40
        $region39: #{forward.17} parent=35 // pred_region
          %s468 = smul.u32 3, %s23
          %s470 = ssub.s32 384, 384
          %471 = vsyncadd %s456, %s470
          %s472 = smul.addr %s468, 128
          %s473 = scalar_lea.hbm %s4, %s472
          %s474 = sshll.u32 %s459, 4
          %s475 = int_to_ptr.vmem [resolvable:$true] %s474
          %480 = dma.vmem_to_hbm [thread:$0]  %s475, 384, %s473, %s456, 128, 128, 8
        $region40: #{forward.17} parent=35 // pred_fallthru
          _
        // Predicated region
        $region41: #{forward.17} parent=35 // pred_check
          %p481 = pneg %p156
        $region42: #{forward.17} parent=35 // pred_check_branch
          %483 = sbr.rel (%p481) target = $region44
        $region43: #{forward.17} parent=35 // pred_region
          %s484 = smul.u32 3, %s23
          %s486 = ssub.s32 192, 192
          %487 = vsyncadd %s461, %s486
          %s488 = smul.addr %s484, 64
          %s489 = scalar_lea.hbm %s5, %s488
          %s490 = sshll.u32 %s464, 4
          %s491 = int_to_ptr.vmem [resolvable:$true] %s490
          %496 = dma.vmem_to_hbm [thread:$0]  %s491, 192, %s489, %s461, 64, 64, 4
        $region44: #{forward.17} parent=35 // pred_fallthru
          _
      $region36: #{forward.17} parent=5 // pred_fallthru
        _
      %p497 = scmp.le.s32.totalorder 2, %s18
      // Predicated region
      $region45: #{forward.17} parent=5 // pred_check
        %p498 = pneg %p497
      $region46: #{forward.17} parent=5 // pred_check_branch
        %500 = sbr.rel (%p498) target = $region48
      $region47: #{forward.17} parent=5 // pred_region
        %s501 = ssub.s32 %s18, 2
        // Predicated region
        $region49: #{forward.17} parent=47 // pred_check
          %p502 = pneg %p136
        $region50: #{forward.17} parent=47 // pred_check_branch
          %504 = sbr.rel (%p502) target = $region52
        $region51: #{forward.17} parent=47 // pred_region
          %s505 = sand.u32 %s121, 1
          %s506 = scalar_lea.sflag [#allocation3], %s505
          %s507 = sand.u32 %s121, 1
          %s508 = smul.addr %s507, 24
          %s509 = scalar_lea.vmem [#allocation2], %s508
          %510 = dma.done %s506, 384
        $region52: #{forward.17} parent=47 // pred_fallthru
          _
        // Predicated region
        $region53: #{forward.17} parent=47 // pred_check
          %p511 = pneg %p162
        $region54: #{forward.17} parent=47 // pred_check_branch
          %513 = sbr.rel (%p511) target = $region56
        $region55: #{forward.17} parent=47 // pred_region
          %s514 = sand.u32 %s147, 1
          %s515 = scalar_lea.sflag [#allocation5], %s514
          %s516 = sand.u32 %s147, 1
          %s517 = smul.addr %s516, 12
          %s518 = scalar_lea.vmem [#allocation4], %s517
          %519 = dma.done %s515, 192
        $region56: #{forward.17} parent=47 // pred_fallthru
          _
      $region48: #{forward.17} parent=5 // pred_fallthru
        _
    $region6: #{forward.17} parent=1 // loop_footer
      %s22 = sadd.s32 1, %s18
    $region7: #{forward.17} parent=1 // loop_footer_branch
      %17 = sbr.rel target = $region3
    $region8: #{forward.17} parent=1 // loop_exit
      _
    %520 = vsyncpa [#allocation3], 1
    %s521 = scalar_lea.sflag [#allocation3], 1
    %522 = vsyncpa %s521, 1
    %523 = vsyncpa [#allocation5], 1
    %s524 = scalar_lea.sflag [#allocation5], 1
    %525 = vsyncpa %s524, 1

// kernel: forward.19
$region0: #{forward.19}
  #allocation0 [shape = 'u32[]', space=smem, size = 0x4, offset = 0x4, fixed_abs, tag = 'smem constant byte address 0x4 - core index']
  #allocation1 [shape = 'u32[144,128]{1,0:T(1,128)}', space=vmem, size = 0x12000, scoped, tag = 'internal scratch']
  #allocation2 [shape = 'f32[2,131]{1,0:T(2,128)}', space=vmem, size = 0x800, scoped, tag = 'scratch operand']
  #allocation3 [shape = 'f32[1,1]{1,0:T(1,128)S(1)}', space=vmem, size = 0x200, scoped, tag = 'scoped memory for forward.19']
  %s0 = inlined_call_operand.hbm [shape: f32[48,2], index: 0, kind: input, shape index: {}]
  %s1 = inlined_call_operand.hbm [shape: f32[48,131], index: 1, kind: input, shape index: {}]
  %s2 = inlined_call_operand.hbm [shape: f32[2,2], index: 2, kind: input, shape index: {}]
  %s3 = inlined_call_operand.hbm [shape: bf16[131,256], index: 3, kind: input, shape index: {}]
  %s4 = inlined_call_operand.hbm [shape: bf16[2,256], index: 4, kind: input, shape index: {}]
  %s5 = inlined_call_operand.hbm [shape: f32[1,256], index: 5, kind: input, shape index: {}]
  %s6 = inlined_call_operand.hbm [shape: bf16[256,256], index: 6, kind: input, shape index: {}]
  %s7 = inlined_call_operand.hbm [shape: f32[1,256], index: 7, kind: input, shape index: {}]
  %s8 = inlined_call_operand.hbm [shape: bf16[256,1], index: 8, kind: input, shape index: {}]
  %s9 = inlined_call_operand.<no memory space> [shape: f32[1,1], index: 9, kind: input, shape index: {}]
  %s10 = inlined_call_operand.hbm [shape: f32[2,1], index: 10, kind: output, shape index: {}]
  %s11 = sld [smem:[#allocation0]]
  $region117: #{forward.19} parent=0
    _
  %s13 = ssub.s32 1, %s11
  %s14 = scalar_select 0, %s13, %s11
  %v15 = vstv %s9
  %16 = vst [vmem:[#allocation3] sm:$0x1] %v15
  $region1: #{forward.19} parent=0
    #allocation4 [shape = 'u8[24576]{0}', space=vmem, size = 0x6000, scoped, tag = 'input window, operand 0']
    #allocation5 [shape = 's32[2]{0}', space=sflag, size = 0x8, scoped, tag = 'scoped memory for forward.19']
    #allocation6 [shape = 's32[2]{0}', space=sflag, size = 0x8, scoped, tag = 'scoped memory for forward.19']
    #allocation7 [shape = 'u8[49152]{0}', space=vmem, size = 0xc000, scoped, tag = 'input window, operand 1']
    #allocation8 [shape = 's32[2]{0}', space=sflag, size = 0x8, scoped, tag = 'scoped memory for forward.19']
    #allocation9 [shape = 'u8[1024]{0}', space=vmem, size = 0x400, scoped, tag = 'input window, operand 2, single buffered']
    #allocation10 [shape = 'u8[69632]{0}', space=vmem, size = 0x11000, scoped, tag = 'input window, operand 3, single buffered']
    #allocation11 [shape = 's32[1]{0}', space=sflag, size = 0x4, scoped, tag = 'scoped memory for forward.19']
    #allocation12 [shape = 'u8[1024]{0}', space=vmem, size = 0x400, scoped, tag = 'input window, operand 4, single buffered']
    #allocation13 [shape = 'u8[1024]{0}', space=vmem, size = 0x400, scoped, tag = 'input window, operand 5, single buffered']
    #allocation14 [shape = 's32[1]{0}', space=sflag, size = 0x4, scoped, tag = 'scoped memory for forward.19']
    #allocation15 [shape = 'u8[131072]{0}', space=vmem, size = 0x20000, scoped, tag = 'input window, operand 6, single buffered']
    #allocation16 [shape = 'u8[1024]{0}', space=vmem, size = 0x400, scoped, tag = 'input window, operand 7, single buffered']
    #allocation17 [shape = 's32[1]{0}', space=sflag, size = 0x4, scoped, tag = 'scoped memory for forward.19']
    #allocation18 [shape = 'u8[65536]{0}', space=vmem, size = 0x10000, scoped, tag = 'input window, operand 8, single buffered']
    #allocation19 [shape = 'u8[1024]{0}', space=vmem, size = 0x400, scoped, tag = 'output window, operand 0, single buffered']
    %17 = vsyncpa [#allocation5], 0
    %s18 = scalar_lea.sflag [#allocation5], 1
    %19 = vsyncpa %s18, 0
    %20 = vsyncpa [#allocation8], 0
    %s21 = scalar_lea.sflag [#allocation8], 1
    %22 = vsyncpa %s21, 0
    %23 = vsyncpa [#allocation11], 0
    %24 = vsyncpa [#allocation14], 0
    %25 = vsyncpa [#allocation17], 0
    %26 = vsyncpa [#allocation6], 0
    loop: start=0, step=1, limit=4
    $region2: #{forward.19} parent=1 // loop_pre_header
      _
    $region3: #{forward.19} parent=1 // loop_header
      %s28 = sphi 0, %s32
      %p29 = scmp.ge.s32.totalorder %s28, 4
      %s38 = sphi 0, %s40
      %s41 = sphi 0, %s38
      %s42 = sphi 0, %s41
      %s58 = sphi 0, %s42
      %s64 = sphi 0, %s66
      %s67 = sphi 0, %s64
      %s68 = sphi 0, %s67
      %s84 = sphi 0, %s68
      %s88 = sphi 0, %s88
      %s90 = sphi 0, %s88
      %s91 = sphi 0, %s90
      %s105 = sphi 0, %s91
      %s109 = sphi 0, %s109
      %s111 = sphi 0, %s109
      %s112 = sphi 0, %s111
      %s126 = sphi 0, %s112
      %s130 = sphi 0, %s130
      %s132 = sphi 0, %s130
      %s133 = sphi 0, %s132
      %s147 = sphi 0, %s133
      %s151 = sphi 0, %s151
      %s153 = sphi 0, %s151
      %s154 = sphi 0, %s153
      %s168 = sphi 0, %s154
      %s172 = sphi 0, %s172
      %s174 = sphi 0, %s172
      %s175 = sphi 0, %s174
      %s189 = sphi 0, %s175
      %s193 = sphi 0, %s193
      %s195 = sphi 0, %s193
      %s196 = sphi 0, %s195
      %s210 = sphi 0, %s196
      %s214 = sphi 0, %s214
      %s216 = sphi 0, %s214
      %s217 = sphi 0, %s216
      %s231 = sphi 0, %s217
      %s235 = sphi 0, %s235
      %s237 = sphi 0, %s235
      %s238 = sphi 0, %s237
      %s252 = sphi 0, %s238
      %s256 = sphi 0, %s256
      %s258 = sphi 0, %s256
      %s259 = sphi 0, %s258
      %s273 = sphi 0, %s259
    $region4: #{forward.19} parent=1 // loop_header_branch
      %31 = sbr.rel (%p29) target = $region8
    $region5: #{forward.19} parent=1 // loop_body
      %s33 = ssub.s32 %s28, 1
      %s34 = ssub.s32 %s28, 2
      %s35 = sadd.s32 %s28, 1
      %s36 = ssub.s32 %s28, %s35
      %p37 = scmp.eq.s32.totalorder %s36, 0
      %s39 = sadd.s32 %s38, 1
      %s40 = scalar_select %p37, %s38, %s39
      %p43 = pneg %p37
      %p44 = scmp.eq.s32.totalorder %s28, 1
      %p45 = por %p43, %p44
      %p46 = scmp.ne.s32.totalorder %s38, %s41
      %p47 = scmp.eq.s32.totalorder %s28, 0
      %p48 = por %p46, %p47
      %p49 = scmp.ne.s32.totalorder %s38, %s41
      %p50 = scmp.eq.s32.totalorder %s33, 1
      %p51 = por %p49, %p50
      %p52 = scmp.ne.s32.totalorder %s41, %s42
      %p53 = scmp.eq.s32.totalorder %s33, 0
      %p54 = por %p52, %p53
      %p55 = scmp.ne.s32.totalorder %s41, %s42
      %p56 = scmp.eq.s32.totalorder %s34, 1
      %p57 = por %p55, %p56
      %p59 = scmp.ne.s32.totalorder %s42, %s58
      %p60 = scmp.eq.s32.totalorder %s34, 0
      %p61 = por %p59, %p60
      %s62 = ssub.s32 %s28, %s35
      %p63 = scmp.eq.s32.totalorder %s62, 0
      %s65 = sadd.s32 %s64, 1
      %s66 = scalar_select %p63, %s64, %s65
      %p69 = pneg %p63
      %p70 = scmp.eq.s32.totalorder %s28, 1
      %p71 = por %p69, %p70
      %p72 = scmp.ne.s32.totalorder %s64, %s67
      %p73 = scmp.eq.s32.totalorder %s28, 0
      %p74 = por %p72, %p73
      %p75 = scmp.ne.s32.totalorder %s64, %s67
      %p76 = scmp.eq.s32.totalorder %s33, 1
      %p77 = por %p75, %p76
      %p78 = scmp.ne.s32.totalorder %s67, %s68
      %p79 = scmp.eq.s32.totalorder %s33, 0
      %p80 = por %p78, %p79
      %p81 = scmp.ne.s32.totalorder %s67, %s68
      %p82 = scmp.eq.s32.totalorder %s34, 1
      %p83 = por %p81, %p82
      %p85 = scmp.ne.s32.totalorder %s68, %s84
      %p86 = scmp.eq.s32.totalorder %s34, 0
      %p87 = por %p85, %p86
      %s89 = sadd.s32 %s88, 1
      %p92 = scmp.eq.s32.totalorder %s28, 1
      %p93 = scmp.ne.s32.totalorder %s88, %s90
      %p94 = scmp.eq.s32.totalorder %s28, 0
      %p95 = por %p93, %p94
      %p96 = scmp.ne.s32.totalorder %s88, %s90
      %p97 = scmp.eq.s32.totalorder %s33, 1
      %p98 = por %p96, %p97
      %p99 = scmp.ne.s32.totalorder %s90, %s91
      %p100 = scmp.eq.s32.totalorder %s33, 0
      %p101 = por %p99, %p100
      %p102 = scmp.ne.s32.totalorder %s90, %s91
      %p103 = scmp.eq.s32.totalorder %s34, 1
      %p104 = por %p102, %p103
      %p106 = scmp.ne.s32.totalorder %s91, %s105
      %p107 = scmp.eq.s32.totalorder %s34, 0
      %p108 = por %p106, %p107
      %s110 = sadd.s32 %s109, 1
      %p113 = scmp.eq.s32.totalorder %s28, 1
      %p114 = scmp.ne.s32.totalorder %s109, %s111
      %p115 = scmp.eq.s32.totalorder %s28, 0
      %p116 = por %p114, %p115
      %p117 = scmp.ne.s32.totalorder %s109, %s111
      %p118 = scmp.eq.s32.totalorder %s33, 1
      %p119 = por %p117, %p118
      %p120 = scmp.ne.s32.totalorder %s111, %s112
      %p121 = scmp.eq.s32.totalorder %s33, 0
      %p122 = por %p120, %p121
      %p123 = scmp.ne.s32.totalorder %s111, %s112
      %p124 = scmp.eq.s32.totalorder %s34, 1
      %p125 = por %p123, %p124
      %p127 = scmp.ne.s32.totalorder %s112, %s126
      %p128 = scmp.eq.s32.totalorder %s34, 0
      %p129 = por %p127, %p128
      %s131 = sadd.s32 %s130, 1
      %p134 = scmp.eq.s32.totalorder %s28, 1
      %p135 = scmp.ne.s32.totalorder %s130, %s132
      %p136 = scmp.eq.s32.totalorder %s28, 0
      %p137 = por %p135, %p136
      %p138 = scmp.ne.s32.totalorder %s130, %s132
      %p139 = scmp.eq.s32.totalorder %s33, 1
      %p140 = por %p138, %p139
      %p141 = scmp.ne.s32.totalorder %s132, %s133
      %p142 = scmp.eq.s32.totalorder %s33, 0
      %p143 = por %p141, %p142
      %p144 = scmp.ne.s32.totalorder %s132, %s133
      %p145 = scmp.eq.s32.totalorder %s34, 1
      %p146 = por %p144, %p145
      %p148 = scmp.ne.s32.totalorder %s133, %s147
      %p149 = scmp.eq.s32.totalorder %s34, 0
      %p150 = por %p148, %p149
      %s152 = sadd.s32 %s151, 1
      %p155 = scmp.eq.s32.totalorder %s28, 1
      %p156 = scmp.ne.s32.totalorder %s151, %s153
      %p157 = scmp.eq.s32.totalorder %s28, 0
      %p158 = por %p156, %p157
      %p159 = scmp.ne.s32.totalorder %s151, %s153
      %p160 = scmp.eq.s32.totalorder %s33, 1
      %p161 = por %p159, %p160
      %p162 = scmp.ne.s32.totalorder %s153, %s154
      %p163 = scmp.eq.s32.totalorder %s33, 0
      %p164 = por %p162, %p163
      %p165 = scmp.ne.s32.totalorder %s153, %s154
      %p166 = scmp.eq.s32.totalorder %s34, 1
      %p167 = por %p165, %p166
      %p169 = scmp.ne.s32.totalorder %s154, %s168
      %p170 = scmp.eq.s32.totalorder %s34, 0
      %p171 = por %p169, %p170
      %s173 = sadd.s32 %s172, 1
      %p176 = scmp.eq.s32.totalorder %s28, 1
      %p177 = scmp.ne.s32.totalorder %s172, %s174
      %p178 = scmp.eq.s32.totalorder %s28, 0
      %p179 = por %p177, %p178
      %p180 = scmp.ne.s32.totalorder %s172, %s174
      %p181 = scmp.eq.s32.totalorder %s33, 1
      %p182 = por %p180, %p181
      %p183 = scmp.ne.s32.totalorder %s174, %s175
      %p184 = scmp.eq.s32.totalorder %s33, 0
      %p185 = por %p183, %p184
      %p186 = scmp.ne.s32.totalorder %s174, %s175
      %p187 = scmp.eq.s32.totalorder %s34, 1
      %p188 = por %p186, %p187
      %p190 = scmp.ne.s32.totalorder %s175, %s189
      %p191 = scmp.eq.s32.totalorder %s34, 0
      %p192 = por %p190, %p191
      %s194 = sadd.s32 %s193, 1
      %p197 = scmp.eq.s32.totalorder %s28, 1
      %p198 = scmp.ne.s32.totalorder %s193, %s195
      %p199 = scmp.eq.s32.totalorder %s28, 0
      %p200 = por %p198, %p199
      %p201 = scmp.ne.s32.totalorder %s193, %s195
      %p202 = scmp.eq.s32.totalorder %s33, 1
      %p203 = por %p201, %p202
      %p204 = scmp.ne.s32.totalorder %s195, %s196
      %p205 = scmp.eq.s32.totalorder %s33, 0
      %p206 = por %p204, %p205
      %p207 = scmp.ne.s32.totalorder %s195, %s196
      %p208 = scmp.eq.s32.totalorder %s34, 1
      %p209 = por %p207, %p208
      %p211 = scmp.ne.s32.totalorder %s196, %s210
      %p212 = scmp.eq.s32.totalorder %s34, 0
      %p213 = por %p211, %p212
      %s215 = sadd.s32 %s214, 1
      %p218 = scmp.eq.s32.totalorder %s28, 1
      %p219 = scmp.ne.s32.totalorder %s214, %s216
      %p220 = scmp.eq.s32.totalorder %s28, 0
      %p221 = por %p219, %p220
      %p222 = scmp.ne.s32.totalorder %s214, %s216
      %p223 = scmp.eq.s32.totalorder %s33, 1
      %p224 = por %p222, %p223
      %p225 = scmp.ne.s32.totalorder %s216, %s217
      %p226 = scmp.eq.s32.totalorder %s33, 0
      %p227 = por %p225, %p226
      %p228 = scmp.ne.s32.totalorder %s216, %s217
      %p229 = scmp.eq.s32.totalorder %s34, 1
      %p230 = por %p228, %p229
      %p232 = scmp.ne.s32.totalorder %s217, %s231
      %p233 = scmp.eq.s32.totalorder %s34, 0
      %p234 = por %p232, %p233
      %s236 = sadd.s32 %s235, 1
      %p239 = scmp.eq.s32.totalorder %s28, 1
      %p240 = scmp.ne.s32.totalorder %s235, %s237
      %p241 = scmp.eq.s32.totalorder %s28, 0
      %p242 = por %p240, %p241
      %p243 = scmp.ne.s32.totalorder %s235, %s237
      %p244 = scmp.eq.s32.totalorder %s33, 1
      %p245 = por %p243, %p244
      %p246 = scmp.ne.s32.totalorder %s237, %s238
      %p247 = scmp.eq.s32.totalorder %s33, 0
      %p248 = por %p246, %p247
      %p249 = scmp.ne.s32.totalorder %s237, %s238
      %p250 = scmp.eq.s32.totalorder %s34, 1
      %p251 = por %p249, %p250
      %p253 = scmp.ne.s32.totalorder %s238, %s252
      %p254 = scmp.eq.s32.totalorder %s34, 0
      %p255 = por %p253, %p254
      %s257 = sadd.s32 %s256, 1
      %p260 = scmp.eq.s32.totalorder %s28, 1
      %p261 = scmp.ne.s32.totalorder %s256, %s258
      %p262 = scmp.eq.s32.totalorder %s28, 0
      %p263 = por %p261, %p262
      %p264 = scmp.ne.s32.totalorder %s256, %s258
      %p265 = scmp.eq.s32.totalorder %s33, 1
      %p266 = por %p264, %p265
      %p267 = scmp.ne.s32.totalorder %s258, %s259
      %p268 = scmp.eq.s32.totalorder %s33, 0
      %p269 = por %p267, %p268
      %p270 = scmp.ne.s32.totalorder %s258, %s259
      %p271 = scmp.eq.s32.totalorder %s34, 1
      %p272 = por %p270, %p271
      %p274 = scmp.ne.s32.totalorder %s259, %s273
      %p275 = scmp.eq.s32.totalorder %s34, 0
      %p276 = por %p274, %p275
      %p277 = scmp.le.s32.totalorder 1, %s28
      %p278 = scmp.lt.s32.totalorder %s28, 3
      %p279 = pnand %p277, %p278
      %p280 = pneg %p279
      // Predicated region
      $region9: #{forward.19} parent=5 // pred_check
        _
      $region10: #{forward.19} parent=5 // pred_check_branch
        %282 = sbr.rel (%p279) target = $region12
      $region11: #{forward.19} parent=5 // pred_region
        %s283 = ssub.s32 %s28, 1
        // Predicated region
        $region13: #{forward.19} parent=11 // pred_check
          %p284 = pneg %p101
        $region14: #{forward.19} parent=11 // pred_check_branch
          %286 = sbr.rel (%p284) target = $region16
        $region15: #{forward.19} parent=11 // pred_region
          %s288 = ssub.s32 32, 32
          %289 = vsyncadd [#allocation8], %s288
          %s291 = sshll.u32 [#allocation9], 4
          %s292 = int_to_ptr.vmem [resolvable:$true] %s291
          %294 = dma.hbm_to_vmem [thread:$0]  %s2, 32, %s292, [#allocation8]
        $region16: #{forward.19} parent=11 // pred_fallthru
          _
        // Predicated region
        $region17: #{forward.19} parent=11 // pred_check
          %p295 = pneg %p122
        $region18: #{forward.19} parent=11 // pred_check_branch
          %297 = sbr.rel (%p295) target = $region20
        $region19: #{forward.19} parent=11 // pred_region
          %s299 = ssub.s32 2176, 2176
          %300 = vsyncadd [#allocation11], %s299
          %s301 = sshll.u32 [#allocation10], 4
          %s302 = int_to_ptr.vmem [resolvable:$true] %s301
          %307 = dma.hbm_to_vmem [thread:$0]  %s3, 2176, %s302, [#allocation11], 128, 128, 8
        $region20: #{forward.19} parent=11 // pred_fallthru
          _
        // Predicated region
        $region21: #{forward.19} parent=11 // pred_check
          %p308 = pneg %p143
        $region22: #{forward.19} parent=11 // pred_check_branch
          %310 = sbr.rel (%p308) target = $region24
        $region23: #{forward.19} parent=11 // pred_region
          %s312 = ssub.s32 32, 32
          %313 = vsyncadd [#allocation11], %s312
          %s315 = sshll.u32 [#allocation12], 4
          %s316 = int_to_ptr.vmem [resolvable:$true] %s315
          %318 = dma.hbm_to_vmem [thread:$0]  %s4, 32, %s316, [#allocation11]
        $region24: #{forward.19} parent=11 // pred_fallthru
          _
        // Predicated region
        $region25: #{forward.19} parent=11 // pred_check
          %p319 = pneg %p164
        $region26: #{forward.19} parent=11 // pred_check_branch
          %321 = sbr.rel (%p319) target = $region28
        $region27: #{forward.19} parent=11 // pred_region
          %s323 = ssub.s32 32, 32
          %324 = vsyncadd [#allocation14], %s323
          %s326 = sshll.u32 [#allocation13], 4
          %s327 = int_to_ptr.vmem [resolvable:$true] %s326
          %329 = dma.hbm_to_vmem [thread:$0]  %s5, 32, %s327, [#allocation14]
        $region28: #{forward.19} parent=11 // pred_fallthru
          _
        // Predicated region
        $region29: #{forward.19} parent=11 // pred_check
          %p330 = pneg %p185
        $region30: #{forward.19} parent=11 // pred_check_branch
          %332 = sbr.rel (%p330) target = $region32
        $region31: #{forward.19} parent=11 // pred_region
          %s334 = ssub.s32 4096, 4096
          %335 = vsyncadd [#allocation14], %s334
          %s336 = sshll.u32 [#allocation15], 4
          %s337 = int_to_ptr.vmem [resolvable:$true] %s336
          %342 = dma.hbm_to_vmem [thread:$0]  %s6, 4096, %s337, [#allocation14], 128, 128, 8
        $region32: #{forward.19} parent=11 // pred_fallthru
          _
        // Predicated region
        $region33: #{forward.19} parent=11 // pred_check
          %p343 = pneg %p206
        $region34: #{forward.19} parent=11 // pred_check_branch
          %345 = sbr.rel (%p343) target = $region36
        $region35: #{forward.19} parent=11 // pred_region
          %s347 = ssub.s32 32, 32
          %348 = vsyncadd [#allocation17], %s347
          %s350 = sshll.u32 [#allocation16], 4
          %s351 = int_to_ptr.vmem [resolvable:$true] %s350
          %353 = dma.hbm_to_vmem [thread:$0]  %s7, 32, %s351, [#allocation17]
        $region36: #{forward.19} parent=11 // pred_fallthru
          _
        // Predicated region
        $region37: #{forward.19} parent=11 // pred_check
          %p354 = pneg %p227
        $region38: #{forward.19} parent=11 // pred_check_branch
          %356 = sbr.rel (%p354) target = $region40
        $region39: #{forward.19} parent=11 // pred_region
          %s358 = ssub.s32 2048, 2048
          %359 = vsyncadd [#allocation17], %s358
          %s360 = sshll.u32 [#allocation18], 4
          %s361 = int_to_ptr.vmem [resolvable:$true] %s360
          %366 = dma.hbm_to_vmem [thread:$0]  %s8, 2048, %s361, [#allocation17], 64, 64, 4
        $region40: #{forward.19} parent=11 // pred_fallthru
          _
        // Predicated region
        $region41: #{forward.19} parent=11 // pred_check
          %p367 = pneg %p248
        $region42: #{forward.19} parent=11 // pred_check_branch
          %369 = sbr.rel (%p367) target = $region44
        $region43: #{forward.19} parent=11 // pred_region
          _
        $region44: #{forward.19} parent=11 // pred_fallthru
          _
      $region12: #{forward.19} parent=5 // pred_fallthru
        _
      %p370 = scmp.lt.s32.totalorder %s28, 2
      // Predicated region
      $region45: #{forward.19} parent=5 // pred_check
        %p371 = pneg %p370
      $region46: #{forward.19} parent=5 // pred_check_branch
        %373 = sbr.rel (%p371) target = $region48
      $region47: #{forward.19} parent=5 // pred_region
        // Predicated region
        $region49: #{forward.19} parent=47 // pred_check
          %p374 = pneg %p48
        $region50: #{forward.19} parent=47 // pred_check_branch
          %376 = sbr.rel (%p374) target = $region52
        $region51: #{forward.19} parent=47 // pred_region
          %s377 = sand.u32 %s38, 1
          %s378 = scalar_lea.sflag [#allocation5], %s377
          %s379 = sand.u32 %s38, 1
          %s380 = smul.addr %s379, 24
          %s381 = scalar_lea.vmem [#allocation4], %s380
          %s382 = smul.u32 3, %s28
          %s384 = ssub.s32 384, 384
          %385 = vsyncadd %s378, %s384
          %s386 = smul.addr %s382, 128
          %s387 = scalar_lea.hbm %s0, %s386
          %s388 = sshll.u32 %s381, 4
          %s389 = int_to_ptr.vmem [resolvable:$true] %s388
          %394 = dma.hbm_to_vmem [thread:$0]  %s387, 384, %s389, %s378, 128, 128, 8
        $region52: #{forward.19} parent=47 // pred_fallthru
          _
        // Predicated region
        $region53: #{forward.19} parent=47 // pred_check
          %p395 = pneg %p74
        $region54: #{forward.19} parent=47 // pred_check_branch
          %397 = sbr.rel (%p395) target = $region56
        $region55: #{forward.19} parent=47 // pred_region
          %s398 = sand.u32 %s28, 1
          %s399 = scalar_lea.sflag [#allocation8], %s398
          %s400 = sand.u32 %s64, 1
          %s401 = smul.addr %s400, 48
          %s402 = scalar_lea.vmem [#allocation7], %s401
          %s403 = smul.u32 3, %s28
          %s405 = ssub.s32 768, 768
          %406 = vsyncadd %s399, %s405
          %s407 = smul.addr %s403, 2
          %s408 = smul.addr %s407, 128
          %s409 = scalar_lea.hbm %s1, %s408
          %s410 = sshll.u32 %s402, 4
          %s411 = int_to_ptr.vmem [resolvable:$true] %s410
          %416 = dma.hbm_to_vmem [thread:$0]  %s409, 768, %s411, %s399, 256, 256, 16
        $region56: #{forward.19} parent=47 // pred_fallthru
          _
      $region48: #{forward.19} parent=5 // pred_fallthru
        _
      %p417 = scmp.le.s32.totalorder 1, %s28
      %p418 = scmp.lt.s32.totalorder %s28, 3
      %p419 = pnand %p417, %p418
      %p420 = pneg %p419
      // Predicated region
      $region57: #{forward.19} parent=5 // pred_check
        _
      $region58: #{forward.19} parent=5 // pred_check_branch
        %422 = sbr.rel (%p419) target = $region60
      $region59: #{forward.19} parent=5 // pred_region
        %s423 = ssub.s32 %s28, 1
        %s424 = sand.u32 %s41, 1
        %s425 = scalar_lea.sflag [#allocation5], %s424
        %s426 = sand.u32 %s41, 1
        %s427 = smul.addr %s426, 24
        %s428 = scalar_lea.vmem [#allocation4], %s427
        // Predicated region
        $region61: #{forward.19} parent=59 // pred_check
          %p429 = pneg %p54
        $region62: #{forward.19} parent=59 // pred_check_branch
          %431 = sbr.rel (%p429) target = $region64
        $region63: #{forward.19} parent=59 // pred_region
          %432 = dma.done %s425, 384
        $region64: #{forward.19} parent=59 // pred_fallthru
          _
        %s433 = sand.u32 %s33, 1
        %s434 = scalar_lea.sflag [#allocation8], %s433
        %s435 = sand.u32 %s67, 1
        %s436 = smul.addr %s435, 48
        %s437 = scalar_lea.vmem [#allocation7], %s436
        // Predicated region
        $region65: #{forward.19} parent=59 // pred_check
          %p438 = pneg %p80
        $region66: #{forward.19} parent=59 // pred_check_branch
          %440 = sbr.rel (%p438) target = $region68
        $region67: #{forward.19} parent=59 // pred_region
          %441 = dma.done %s434, 768
        $region68: #{forward.19} parent=59 // pred_fallthru
          _
        // Predicated region
        $region69: #{forward.19} parent=59 // pred_check
          %p442 = pneg %p101
        $region70: #{forward.19} parent=59 // pred_check_branch
          %444 = sbr.rel (%p442) target = $region72
        $region71: #{forward.19} parent=59 // pred_region
          %445 = dma.done [#allocation8], 32
        $region72: #{forward.19} parent=59 // pred_fallthru
          _
        // Predicated region
        $region73: #{forward.19} parent=59 // pred_check
          %p446 = pneg %p122
        $region74: #{forward.19} parent=59 // pred_check_branch
          %448 = sbr.rel (%p446) target = $region76
        $region75: #{forward.19} parent=59 // pred_region
          %449 = dma.done [#allocation11], 2176
        $region76: #{forward.19} parent=59 // pred_fallthru
          _
        // Predicated region
        $region77: #{forward.19} parent=59 // pred_check
          %p450 = pneg %p143
        $region78: #{forward.19} parent=59 // pred_check_branch
          %452 = sbr.rel (%p450) target = $region80
        $region79: #{forward.19} parent=59 // pred_region
          %453 = dma.done [#allocation11], 32
        $region80: #{forward.19} parent=59 // pred_fallthru
          _
        // Predicated region
        $region81: #{forward.19} parent=59 // pred_check
          %p454 = pneg %p164
        $region82: #{forward.19} parent=59 // pred_check_branch
          %456 = sbr.rel (%p454) target = $region84
        $region83: #{forward.19} parent=59 // pred_region
          %457 = dma.done [#allocation14], 32
        $region84: #{forward.19} parent=59 // pred_fallthru
          _
        // Predicated region
        $region85: #{forward.19} parent=59 // pred_check
          %p458 = pneg %p185
        $region86: #{forward.19} parent=59 // pred_check_branch
          %460 = sbr.rel (%p458) target = $region88
        $region87: #{forward.19} parent=59 // pred_region
          %461 = dma.done [#allocation14], 4096
        $region88: #{forward.19} parent=59 // pred_fallthru
          _
        // Predicated region
        $region89: #{forward.19} parent=59 // pred_check
          %p462 = pneg %p206
        $region90: #{forward.19} parent=59 // pred_check_branch
          %464 = sbr.rel (%p462) target = $region92
        $region91: #{forward.19} parent=59 // pred_region
          %465 = dma.done [#allocation17], 32
        $region92: #{forward.19} parent=59 // pred_fallthru
          _
        // Predicated region
        $region93: #{forward.19} parent=59 // pred_check
          %p466 = pneg %p227
        $region94: #{forward.19} parent=59 // pred_check_branch
          %468 = sbr.rel (%p466) target = $region96
        $region95: #{forward.19} parent=59 // pred_region
          %469 = dma.done [#allocation17], 2048
        $region96: #{forward.19} parent=59 // pred_fallthru
          _
        %s470 = sand.u32 %s41, 1
        %s471 = scalar_lea.sflag [#allocation5], %s470
        %s472 = sand.u32 %s41, 1
        %s473 = smul.addr %s472, 24
        %s474 = scalar_lea.vmem [#allocation4], %s473
        %p475 = pneg %p54
        %p476 = pneg %p51
        %s477 = sand.u32 %s33, 1
        %s478 = scalar_lea.sflag [#allocation8], %s477
        %s479 = sand.u32 %s67, 1
        %s480 = smul.addr %s479, 48
        %s481 = scalar_lea.vmem [#allocation7], %s480
        %p482 = pneg %p80
        %p483 = pneg %p77
        %p484 = pneg %p101
        %p485 = pneg %p98
        %p486 = pneg %p122
        %p487 = pneg %p119
        %p488 = pneg %p143
        %p489 = pneg %p140
        %p490 = pneg %p164
        %p491 = pneg %p161
        %p492 = pneg %p185
        %p493 = pneg %p182
        %p494 = pneg %p206
        %p495 = pneg %p203
        %p496 = pneg %p227
        %p497 = pneg %p224
        %p498 = pneg %p248
        %p499 = pneg %p245
        %p500 = pneg %p269
        %p501 = pneg %p266
        %s502 = smul.u32 3, %s33
        %s503 = smul.u32 3, %s33
        %p505 = scmp.eq.s32.totalorder %s33, 0
        // Predicated region
        $region97: #{forward.19} parent=59 // pred_check
          %p506 = pneg %p505
        $region98: #{forward.19} parent=59 // pred_check_branch
          %508 = sbr.rel (%p506) target = $region100
        $region99: #{forward.19} parent=59 // pred_region
          %vm509 = vcmask 1041408
          %vm510 = vcmask 19458
          %vm511 = vmor %vm510, %vm509
          %512 = vst.msk [vmem:[#allocation2] sm:$0xf] %vm511, 0.0
        $region100: #{forward.19} parent=59 // pred_fallthru
          _
        %v513 = vld [vmem:[#allocation2] sm:$0xf]
        %v514 = vld [vmem:[%s428] sm:$0xff]
        %v515 = vld [vmem:[%s428 + $0x8] sm:$0xff]
        %v516 = vld [vmem:[%s428 + $0x10] sm:$0xff]
        %v517 = vld [vmem:[%s437] sm:$0xff]
        %v518 = vld [vmem:[%s437 + $0x8] sm:$0xff]
        %v519 = vld [vmem:[%s437 + $0x10] sm:$0xff]
        %v520 = vld [vmem:[%s437 + $0x18] sm:$0xff]
        %v521 = vld [vmem:[%s437 + $0x20] sm:$0xff]
        %v522 = vld [vmem:[%s437 + $0x28] sm:$0xff]
        %523 = vxpose.xlu0.b32.start [1/16] %v514, 128
        %524 = vxpose.xlu0.b32.cont [2/16] %v515, 128
        %525 = vxpose.xlu0.b32.cont [3/16] %v516, 128
        %526 = vxpose.xlu0.b32.cont [4/16] 0.0, 128
        %527 = vxpose.xlu0.b32.cont [5/16] 0.0, 128
        %528 = vxpose.xlu0.b32.cont [6/16] 0.0, 128
        %529 = vxpose.xlu0.b32.cont [7/16] 0.0, 128
        %530 = vxpose.xlu0.b32.cont [8/16] 0.0, 128
        %531 = vxpose.xlu0.b32.cont [9/16] 0.0, 128
        %532 = vxpose.xlu0.b32.cont [10/16] 0.0, 128
        %533 = vxpose.xlu0.b32.cont [11/16] 0.0, 128
        %534 = vxpose.xlu0.b32.cont [12/16] 0.0, 128
        %535 = vxpose.xlu0.b32.cont [13/16] 0.0, 128
        %536 = vxpose.xlu0.b32.cont [14/16] 0.0, 128
        %537 = vxpose.xlu0.b32.cont [15/16] 0.0, 128
        %538 = vxpose.xlu0.b32.end [16/16] 0.0, 128
        %v539 = vpop.trf.xlu0
        %v540 = vpop.trf.xlu0
        %v541 = vpop.trf.xlu0
        %v542 = vpop.trf.xlu0
        %v543 = vpop.trf.xlu0
        %v544 = vpop.trf.xlu0
        %v545 = vpop.trf.xlu0
        %v546 = vpop.trf.xlu0
        %v547 = vpop.trf.xlu0
        %v548 = vpop.trf.xlu0
        %v549 = vpop.trf.xlu0
        %v550 = vpop.trf.xlu0
        %v551 = vpop.trf.xlu0
        %v552 = vpop.trf.xlu0
        %v553 = vpop.trf.xlu0
        %v554 = vpop.trf.xlu0
        %vm555 = vcmask 195584
        %v557 = vsel %vm555, %v539, 0
        %559 = vmatprep.subr.mxu0 %v518
        %560 = vmatpush1.msra.mxu0 %v517
        %561 = vmatprep.subr.mxu0 %v520
        %562 = vmatpush1.msra.mxu0 %v519
        %563 = vmatprep.subr.mxu0 %v522
        %564 = vmatpush1.msra.mxu0 %v521
        %565 = vmatprep.subr.mxu0 0.0
        %566 = vmatpush1.msra.mxu0 0.0
        %567 = vmatprep.subr.mxu0 0.0
        %568 = vmatpush1.msra.mxu0 0.0
        %569 = vmatprep.subr.mxu0 0.0
        %570 = vmatpush1.msra.mxu0 0.0
        %571 = vmatprep.subr.mxu0 0.0
        %572 = vmatpush1.msra.mxu0 0.0
        %573 = vmatprep.subr.mxu0 0.0
        %574 = vmatpush1.msra.mxu0 0.0
        %575 = vmatprep.subr.mxu0 0.0
        %576 = vmatpush1.msra.mxu0 0.0
        %577 = vmatprep.subr.mxu0 0.0
        %578 = vmatpush1.msra.mxu0 0.0
        %579 = vmatprep.subr.mxu0 0.0
        %580 = vmatpush1.msra.mxu0 0.0
        %581 = vmatprep.subr.mxu0 0.0
        %582 = vmatpush1.msra.mxu0 0.0
        %583 = vmatprep.subr.mxu0 0.0
        %584 = vmatpush1.msra.mxu0 0.0
        %585 = vmatprep.subr.mxu0 0.0
        %586 = vmatpush1.msra.mxu0 0.0
        %587 = vmatprep.subr.mxu0 0.0
        %588 = vmatpush1.msra.mxu0 0.0
        %589 = vmatprep.subr.mxu0 0.0
        %590 = vmatpush1.msra.mxu0 0.0
        %591 = vmatprep.subr.mxu0 0.0
        %592 = vmatpush1.msra.mxu0 0.0
        %593 = vmatprep.subr.mxu0 0.0
        %594 = vmatpush1.msra.mxu0 0.0
        %595 = vmatprep.subr.mxu0 0.0
        %596 = vmatpush1.msra.mxu0 0.0
        %597 = vmatprep.subr.mxu0 0.0
        %598 = vmatpush1.msra.mxu0 0.0
        %599 = vmatprep.subr.mxu0 0.0
        %600 = vmatpush1.msra.mxu0 0.0
        %601 = vmatprep.subr.mxu0 0.0
        %602 = vmatpush1.msra.mxu0 0.0
        %603 = vmatprep.subr.mxu0 0.0
        %604 = vmatpush1.msra.mxu0 0.0
        %605 = vmatprep.subr.mxu0 0.0
        %606 = vmatpush1.msra.mxu0 0.0
        %607 = vmatprep.subr.mxu0 0.0
        %608 = vmatpush1.msra.mxu0 0.0
        %609 = vmatprep.subr.mxu0 0.0
        %610 = vmatpush1.msra.mxu0 0.0
        %611 = vmatprep.subr.mxu0 0.0
        %612 = vmatpush1.msra.mxu0 0.0
        %613 = vmatprep.subr.mxu0 0.0
        %614 = vmatpush1.msra.mxu0 0.0
        %615 = vmatprep.subr.mxu0 0.0
        %616 = vmatpush1.msra.mxu0 0.0
        %617 = vmatprep.subr.mxu0 0.0
        %618 = vmatpush1.msra.mxu0 0.0
        %619 = vmatprep.subr.mxu0 0.0
        %620 = vmatpush1.msra.mxu0 0.0
        %621 = vmatprep.subr.mxu0 0.0
        %622 = vmatpush1.msra.mxu0 0.0
        %623 = vmatprep.mubr.f32.mxu0 0.0
        %624 = vmatmul.mubr.f32.gmra.mrb[0].mxu0 %v557
        %v625 = vpop.f32.mrb[0].mxu0
        %v626 = vadd.f32 0.0, %v625
        %v627 = vpop.f32.mrb[0].mxu0
        %v628 = vadd.f32 0.0, %v627
        %629 = vdwg.mxu0
        %v632 = vcombine.low %v626, %v628
        %v634 = vunpack.c.l.s4 1983009808
        %v635 = vunpack.c.0.s8 %v634
        %v636 = vlaneseq
        %v637 = vshrl.u32 %v636, 7
        %v638 = vsub.s32 %v635, %v637
        %v639 = vrot.slane %v632, %v638
        %v641 = vadd.f32 %v513, %v639
        %vm642 = vcmask 1041408
        %vm643 = vcmask 19458
        %vm644 = vmor %vm643, %vm642
        %645 = vst.msk [vmem:[#allocation2] sm:$0xf] %vm644, %v641
        %p646 = scmp.eq.s32.totalorder %s33, 1
        // Predicated region
        $region101: #{forward.19} parent=59 // pred_check
          %p647 = pneg %p646
        $region102: #{forward.19} parent=59 // pred_check_branch
          %649 = sbr.rel (%p647) target = $region104
        $region103: #{forward.19} parent=59 // pred_region
          %v650 = vld [vmem:[#allocation2] sm:$0xf]
          %v653 = vunpack.c.l.s4 1983009808
          %v654 = vunpack.c.0.s8 %v653
          %v655 = vlaneseq
          %v656 = vshrl.u32 %v655, 7
          %v657 = vsub.s32 %v654, %v656
          %v658 = vrot.slane %v650, %v657
          %v659 = vcombine.high %v658, %v658
          %v662 = vpack.c.bf16 %v658, %v658
          %v663 = vpack.c.bf16 %v659, %v659
          %v664 = vld [vmem:[#allocation10] sm:$0xff]
          %v665 = vld [vmem:[#allocation10 + $0x8] sm:$0xff]
          %v666 = vld [vmem:[#allocation10 + $0x10] sm:$0xff]
          %v667 = vld [vmem:[#allocation10 + $0x18] sm:$0xff]
          %v668 = vld [vmem:[#allocation10 + $0x20] sm:$0xff]
          %v669 = vld [vmem:[#allocation10 + $0x28] sm:$0xff]
          %v670 = vld [vmem:[#allocation10 + $0x30] sm:$0xff]
          %v671 = vld [vmem:[#allocation10 + $0x38] sm:$0xff]
          %v672 = vld [vmem:[#allocation10 + $0x40] sm:$0xff]
          %v673 = vld [vmem:[#allocation10 + $0x48] sm:$0xff]
          %v674 = vld [vmem:[#allocation10 + $0x50] sm:$0xff]
          %v675 = vld [vmem:[#allocation10 + $0x58] sm:$0xff]
          %v676 = vld [vmem:[#allocation10 + $0x60] sm:$0xff]
          %v677 = vld [vmem:[#allocation10 + $0x68] sm:$0xff]
          %v678 = vld [vmem:[#allocation10 + $0x70] sm:$0xff]
          %v679 = vld [vmem:[#allocation10 + $0x78] sm:$0xff]
          %v680 = vld [vmem:[#allocation10 + $0x80] sm:$0x33]
          %v681 = vld [vmem:[#allocation9] sm:$0x3]
          %v682 = vpack.c.bf16 %v681, %v681
          %v683 = vld [vmem:[#allocation12] sm:$0x3]
          %v686 = vunpack.c.l.s4 1966171168
          %v687 = vunpack.c.0.s8 %v686
          %v688 = vlaneseq
          %v689 = vshrl.u32 %v688, 7
          %v690 = vsub.s32 %v687, %v689
          %v691 = vrot.slane %v683, %v690
          %v692 = vcombine.high %v691, %v691
          %v694 = vunpack.c.l.s4 1966171168
          %v695 = vunpack.c.0.s8 %v694
          %v696 = vlaneseq
          %v697 = vshrl.u32 %v696, 7
          %v698 = vsub.s32 %v695, %v697
          %v699 = vrot.slane %v691, %v698
          %v701 = vunpack.c.l.s4 1966171168
          %v702 = vunpack.c.0.s8 %v701
          %v703 = vlaneseq
          %v704 = vshrl.u32 %v703, 7
          %v705 = vsub.s32 %v702, %v704
          %v706 = vrot.slane %v692, %v705
          %vm707 = vcmask 15360
          %v709 = vsel %vm707, %v682, 0
          %vm711 = vcmask 1040384
          %v713 = vsel %vm711, %v699, 0
          %v716 = vsel %vm711, %v706, 0
          %718 = vmatprep.subr.bf16.mxu0 %v716
          %719 = vmatpush1.bf16.msra.mxu0 %v713
          %720 = vmatprep.subr.bf16.mxu0 0
          %721 = vmatpush1.bf16.msra.mxu0 0
          %722 = vmatprep.subr.bf16.mxu0 0
          %723 = vmatpush1.bf16.msra.mxu0 0
          %724 = vmatprep.subr.bf16.mxu0 0
          %725 = vmatpush1.bf16.msra.mxu0 0
          %726 = vmatprep.subr.bf16.mxu0 0
          %727 = vmatpush1.bf16.msra.mxu0 0
          %728 = vmatprep.subr.bf16.mxu0 0
          %729 = vmatpush1.bf16.msra.mxu0 0
          %730 = vmatprep.subr.bf16.mxu0 0
          %731 = vmatpush1.bf16.msra.mxu0 0
          %732 = vmatprep.subr.bf16.mxu0 0
          %733 = vmatpush1.bf16.msra.mxu0 0
          %734 = vmatprep.subr.bf16.mxu0 0
          %735 = vmatpush1.bf16.msra.mxu0 0
          %736 = vmatprep.subr.bf16.mxu0 0
          %737 = vmatpush1.bf16.msra.mxu0 0
          %738 = vmatprep.subr.bf16.mxu0 0
          %739 = vmatpush1.bf16.msra.mxu0 0
          %740 = vmatprep.subr.bf16.mxu0 0
          %741 = vmatpush1.bf16.msra.mxu0 0
          %742 = vmatprep.subr.bf16.mxu0 0
          %743 = vmatpush1.bf16.msra.mxu0 0
          %744 = vmatprep.subr.bf16.mxu0 0
          %745 = vmatpush1.bf16.msra.mxu0 0
          %746 = vmatprep.subr.bf16.mxu0 0
          %747 = vmatpush1.bf16.msra.mxu0 0
          %748 = vmatprep.subr.bf16.mxu0 0
          %749 = vmatpush1.bf16.msra.mxu0 0
          %750 = vmatprep.mubr.bf16.mxu0 0
          %751 = vmatmul.mubr.bf16.gmra.mrb[0].mxu0 %v709
          %v752 = vpop.f32.mrb[0].mxu0
          %v753 = vadd.f32 0.0, %v752
          %v754 = vpop.f32.mrb[0].mxu0
          %v755 = vadd.f32 0.0, %v754
          %v756 = vpop.f32.mrb[0].mxu0
          %v757 = vpop.f32.mrb[0].mxu0
          %758 = vdwg.mxu0
          %v776 = vunpack.c.l.b16 %v664
          %v777 = vunpack.c.h.b16 %v664
          %v778 = vunpack.c.l.b16 %v665
          %v779 = vunpack.c.h.b16 %v665
          %v780 = vunpack.c.l.b16 %v666
          %v781 = vunpack.c.h.b16 %v666
          %v782 = vunpack.c.l.b16 %v667
          %v783 = vunpack.c.h.b16 %v667
          %v784 = vunpack.c.l.b16 %v668
          %v785 = vunpack.c.h.b16 %v668
          %v786 = vunpack.c.l.b16 %v669
          %v787 = vunpack.c.h.b16 %v669
          %v788 = vunpack.c.l.b16 %v670
          %v789 = vunpack.c.h.b16 %v670
          %v790 = vunpack.c.l.b16 %v671
          %v791 = vunpack.c.h.b16 %v671
          %v792 = vunpack.c.l.b16 %v672
          %v793 = vunpack.c.h.b16 %v672
          %v794 = vunpack.c.l.b16 %v673
          %v795 = vunpack.c.h.b16 %v673
          %v796 = vunpack.c.l.b16 %v674
          %v797 = vunpack.c.h.b16 %v674
          %v798 = vunpack.c.l.b16 %v675
          %v799 = vunpack.c.h.b16 %v675
          %v800 = vunpack.c.l.b16 %v676
          %v801 = vunpack.c.h.b16 %v676
          %v802 = vunpack.c.l.b16 %v677
          %v803 = vunpack.c.h.b16 %v677
          %v804 = vunpack.c.l.b16 %v678
          %v805 = vunpack.c.h.b16 %v678
          %v806 = vunpack.c.l.b16 %v679
          %v807 = vunpack.c.h.b16 %v679
          %v808 = vunpack.c.l.b16 %v680
          %v809 = vunpack.c.h.b16 %v680
          %v810 = vpack.c.b16 %v778, %v776
          %v811 = vpack.c.b16 %v779, %v777
          %v812 = vpack.c.b16 %v782, %v780
          %v813 = vpack.c.b16 %v783, %v781
          %v814 = vpack.c.b16 %v786, %v784
          %v815 = vpack.c.b16 %v787, %v785
          %v816 = vpack.c.b16 %v790, %v788
          %v817 = vpack.c.b16 %v791, %v789
          %v818 = vpack.c.b16 %v794, %v792
          %v819 = vpack.c.b16 %v795, %v793
          %v820 = vpack.c.b16 %v798, %v796
          %v821 = vpack.c.b16 %v799, %v797
          %v822 = vpack.c.b16 %v802, %v800
          %v823 = vpack.c.b16 %v803, %v801
          %v824 = vpack.c.b16 %v806, %v804
          %v825 = vpack.c.b16 %v807, %v805
          %v826 = vpack.c.b16 %v808, %v808
          %v827 = vpack.c.b16 %v809, %v809
          %vm844 = vcmask 23552
          %v846 = vsel %vm844, %v663, 0
          %v848 = vsel %vm711, 4294967295, 65535
          %v849 = vsel %vm642, %v848, 0
          %v851 = vand.u32 %v826, %v849
          %v854 = vand.u32 %v827, %v849
          %856 = vmatprep.subr.bf16.mxu0 %v811
          %857 = vmatpush1.bf16.msra.mxu0 %v810
          %858 = vmatprep.subr.bf16.mxu0 %v813
          %859 = vmatpush1.bf16.msra.mxu0 %v812
          %860 = vmatprep.subr.bf16.mxu0 %v815
          %861 = vmatpush1.bf16.msra.mxu0 %v814
          %862 = vmatprep.subr.bf16.mxu0 %v817
          %863 = vmatpush1.bf16.msra.mxu0 %v816
          %864 = vmatprep.subr.bf16.mxu0 %v819
          %865 = vmatpush1.bf16.msra.mxu0 %v818
          %866 = vmatprep.subr.bf16.mxu0 %v821
          %867 = vmatpush1.bf16.msra.mxu0 %v820
          %868 = vmatprep.subr.bf16.mxu0 %v823
          %869 = vmatpush1.bf16.msra.mxu0 %v822
          %870 = vmatprep.subr.bf16.mxu0 %v825
          %871 = vmatpush1.bf16.msra.mxu0 %v824
          %872 = vmatprep.subr.bf16.mxu0 %v854
          %873 = vmatpush1.bf16.msra.mxu0 %v851
          %874 = vmatprep.subr.bf16.mxu0 0
          %875 = vmatpush1.bf16.msra.mxu0 0
          %876 = vmatprep.subr.bf16.mxu0 0
          %877 = vmatpush1.bf16.msra.mxu0 0
          %878 = vmatprep.subr.bf16.mxu0 0
          %879 = vmatpush1.bf16.msra.mxu0 0
          %880 = vmatprep.subr.bf16.mxu0 0
          %881 = vmatpush1.bf16.msra.mxu0 0
          %882 = vmatprep.subr.bf16.mxu0 0
          %883 = vmatpush1.bf16.msra.mxu0 0
          %884 = vmatprep.subr.bf16.mxu0 0
          %885 = vmatpush1.bf16.msra.mxu0 0
          %886 = vmatprep.subr.bf16.mxu0 0
          %887 = vmatpush1.bf16.msra.mxu0 0
          %888 = vmatprep.mubr.bf16.mxu0 %v846
          %889 = vmatmul.mubr.bf16.gmra.mrb[0].mxu0 %v662
          %v890 = vpop.f32.mrb[0].mxu0
          %v891 = vadd.f32 %v753, %v890
          %v892 = vpop.f32.mrb[0].mxu0
          %v893 = vadd.f32 %v755, %v892
          %v894 = vpop.f32.mrb[0].mxu0
          %v895 = vpop.f32.mrb[0].mxu0
          %896 = vdwg.mxu0
          %v897 = vld [vmem:[#allocation13] sm:$0x3]
          %v899 = vlaneseq
          %v900 = vshrl.u32 %v899, 7
          %v901 = vsub.s32 0, %v900
          %v902 = vrot.slane %v897, %v901
          %v903 = vlaneseq
          %v904 = vshrl.u32 %v903, 7
          %v905 = vsub.s32 1, %v904
          %v906 = vrot.slane %v897, %v905
          %v909 = vadd.f32 %v891, %v902
          %v910 = vadd.f32 %v893, %v906
          %v911 = vmax.f32 %v909, 0.0
          %v912 = vmax.f32 %v910, 0.0
          %v913 = vpack.c.bf16 %v911, %v911
          %v914 = vpack.c.bf16 %v912, %v912
          %v915 = vld [vmem:[#allocation15] sm:$0xff]
          %v916 = vld [vmem:[#allocation15 + $0x8] sm:$0xff]
          %v917 = vld [vmem:[#allocation15 + $0x10] sm:$0xff]
          %v918 = vld [vmem:[#allocation15 + $0x18] sm:$0xff]
          %v919 = vld [vmem:[#allocation15 + $0x20] sm:$0xff]
          %v920 = vld [vmem:[#allocation15 + $0x28] sm:$0xff]
          %v921 = vld [vmem:[#allocation15 + $0x30] sm:$0xff]
          %v922 = vld [vmem:[#allocation15 + $0x38] sm:$0xff]
          %v923 = vld [vmem:[#allocation15 + $0x40] sm:$0xff]
          %v924 = vld [vmem:[#allocation15 + $0x48] sm:$0xff]
          %v925 = vld [vmem:[#allocation15 + $0x50] sm:$0xff]
          %v926 = vld [vmem:[#allocation15 + $0x58] sm:$0xff]
          %v927 = vld [vmem:[#allocation15 + $0x60] sm:$0xff]
          %v928 = vld [vmem:[#allocation15 + $0x68] sm:$0xff]
          %v929 = vld [vmem:[#allocation15 + $0x70] sm:$0xff]
          %v930 = vld [vmem:[#allocation15 + $0x78] sm:$0xff]
          %v931 = vld [vmem:[#allocation15 + $0x80] sm:$0xff]
          %v932 = vld [vmem:[#allocation15 + $0x88] sm:$0xff]
          %v933 = vld [vmem:[#allocation15 + $0x90] sm:$0xff]
          %v934 = vld [vmem:[#allocation15 + $0x98] sm:$0xff]
          %v935 = vld [vmem:[#allocation15 + $0xa0] sm:$0xff]
          %v936 = vld [vmem:[#allocation15 + $0xa8] sm:$0xff]
          %v937 = vld [vmem:[#allocation15 + $0xb0] sm:$0xff]
          %v938 = vld [vmem:[#allocation15 + $0xb8] sm:$0xff]
          %v939 = vld [vmem:[#allocation15 + $0xc0] sm:$0xff]
          %v940 = vld [vmem:[#allocation15 + $0xc8] sm:$0xff]
          %v941 = vld [vmem:[#allocation15 + $0xd0] sm:$0xff]
          %v942 = vld [vmem:[#allocation15 + $0xd8] sm:$0xff]
          %v943 = vld [vmem:[#allocation15 + $0xe0] sm:$0xff]
          %v944 = vld [vmem:[#allocation15 + $0xe8] sm:$0xff]
          %v945 = vld [vmem:[#allocation15 + $0xf0] sm:$0xff]
          %v946 = vld [vmem:[#allocation15 + $0xf8] sm:$0xff]
          %v947 = vld [vmem:[#allocation16] sm:$0x3]
          %v949 = vlaneseq
          %v950 = vshrl.u32 %v949, 7
          %v951 = vsub.s32 0, %v950
          %v952 = vrot.slane %v947, %v951
          %v953 = vlaneseq
          %v954 = vshrl.u32 %v953, 7
          %v955 = vsub.s32 1, %v954
          %v956 = vrot.slane %v947, %v955
          %v991 = vunpack.c.l.b16 %v915
          %v992 = vunpack.c.h.b16 %v915
          %v993 = vunpack.c.l.b16 %v916
          %v994 = vunpack.c.h.b16 %v916
          %v995 = vunpack.c.l.b16 %v917
          %v996 = vunpack.c.h.b16 %v917
          %v997 = vunpack.c.l.b16 %v918
          %v998 = vunpack.c.h.b16 %v918
          %v999 = vunpack.c.l.b16 %v919
          %v1000 = vunpack.c.h.b16 %v919
          %v1001 = vunpack.c.l.b16 %v920
          %v1002 = vunpack.c.h.b16 %v920
          %v1003 = vunpack.c.l.b16 %v921
          %v1004 = vunpack.c.h.b16 %v921
          %v1005 = vunpack.c.l.b16 %v922
          %v1006 = vunpack.c.h.b16 %v922
          %v1007 = vunpack.c.l.b16 %v923
          %v1008 = vunpack.c.h.b16 %v923
          %v1009 = vunpack.c.l.b16 %v924
          %v1010 = vunpack.c.h.b16 %v924
          %v1011 = vunpack.c.l.b16 %v925
          %v1012 = vunpack.c.h.b16 %v925
          %v1013 = vunpack.c.l.b16 %v926
          %v1014 = vunpack.c.h.b16 %v926
          %v1015 = vunpack.c.l.b16 %v927
          %v1016 = vunpack.c.h.b16 %v927
          %v1017 = vunpack.c.l.b16 %v928
          %v1018 = vunpack.c.h.b16 %v928
          %v1019 = vunpack.c.l.b16 %v929
          %v1020 = vunpack.c.h.b16 %v929
          %v1021 = vunpack.c.l.b16 %v930
          %v1022 = vunpack.c.h.b16 %v930
          %v1023 = vunpack.c.l.b16 %v931
          %v1024 = vunpack.c.h.b16 %v931
          %v1025 = vunpack.c.l.b16 %v932
          %v1026 = vunpack.c.h.b16 %v932
          %v1027 = vunpack.c.l.b16 %v933
          %v1028 = vunpack.c.h.b16 %v933
          %v1029 = vunpack.c.l.b16 %v934
          %v1030 = vunpack.c.h.b16 %v934
          %v1031 = vunpack.c.l.b16 %v935
          %v1032 = vunpack.c.h.b16 %v935
          %v1033 = vunpack.c.l.b16 %v936
          %v1034 = vunpack.c.h.b16 %v936
          %v1035 = vunpack.c.l.b16 %v937
          %v1036 = vunpack.c.h.b16 %v937
          %v1037 = vunpack.c.l.b16 %v938
          %v1038 = vunpack.c.h.b16 %v938
          %v1039 = vunpack.c.l.b16 %v939
          %v1040 = vunpack.c.h.b16 %v939
          %v1041 = vunpack.c.l.b16 %v940
          %v1042 = vunpack.c.h.b16 %v940
          %v1043 = vunpack.c.l.b16 %v941
          %v1044 = vunpack.c.h.b16 %v941
          %v1045 = vunpack.c.l.b16 %v942
          %v1046 = vunpack.c.h.b16 %v942
          %v1047 = vunpack.c.l.b16 %v943
          %v1048 = vunpack.c.h.b16 %v943
          %v1049 = vunpack.c.l.b16 %v944
          %v1050 = vunpack.c.h.b16 %v944
          %v1051 = vunpack.c.l.b16 %v945
          %v1052 = vunpack.c.h.b16 %v945
          %v1053 = vunpack.c.l.b16 %v946
          %v1054 = vunpack.c.h.b16 %v946
          %v1055 = vpack.c.b16 %v993, %v991
          %v1056 = vpack.c.b16 %v994, %v992
          %v1057 = vpack.c.b16 %v997, %v995
          %v1058 = vpack.c.b16 %v998, %v996
          %v1059 = vpack.c.b16 %v1001, %v999
          %v1060 = vpack.c.b16 %v1002, %v1000
          %v1061 = vpack.c.b16 %v1005, %v1003
          %v1062 = vpack.c.b16 %v1006, %v1004
          %v1063 = vpack.c.b16 %v1009, %v1007
          %v1064 = vpack.c.b16 %v1010, %v1008
          %v1065 = vpack.c.b16 %v1013, %v1011
          %v1066 = vpack.c.b16 %v1014, %v1012
          %v1067 = vpack.c.b16 %v1017, %v1015
          %v1068 = vpack.c.b16 %v1018, %v1016
          %v1069 = vpack.c.b16 %v1021, %v1019
          %v1070 = vpack.c.b16 %v1022, %v1020
          %v1071 = vpack.c.b16 %v1025, %v1023
          %v1072 = vpack.c.b16 %v1026, %v1024
          %v1073 = vpack.c.b16 %v1029, %v1027
          %v1074 = vpack.c.b16 %v1030, %v1028
          %v1075 = vpack.c.b16 %v1033, %v1031
          %v1076 = vpack.c.b16 %v1034, %v1032
          %v1077 = vpack.c.b16 %v1037, %v1035
          %v1078 = vpack.c.b16 %v1038, %v1036
          %v1079 = vpack.c.b16 %v1041, %v1039
          %v1080 = vpack.c.b16 %v1042, %v1040
          %v1081 = vpack.c.b16 %v1045, %v1043
          %v1082 = vpack.c.b16 %v1046, %v1044
          %v1083 = vpack.c.b16 %v1049, %v1047
          %v1084 = vpack.c.b16 %v1050, %v1048
          %v1085 = vpack.c.b16 %v1053, %v1051
          %v1086 = vpack.c.b16 %v1054, %v1052
          %1119 = vmatprep.subr.bf16.mxu0 %v1056
          %1120 = vmatpush1.bf16.msra.mxu0 %v1055
          %1121 = vmatprep.subr.bf16.mxu0 %v1058
          %1122 = vmatpush1.bf16.msra.mxu0 %v1057
          %1123 = vmatprep.subr.bf16.mxu0 %v1060
          %1124 = vmatpush1.bf16.msra.mxu0 %v1059
          %1125 = vmatprep.subr.bf16.mxu0 %v1062
          %1126 = vmatpush1.bf16.msra.mxu0 %v1061
          %1127 = vmatprep.subr.bf16.mxu0 %v1064
          %1128 = vmatpush1.bf16.msra.mxu0 %v1063
          %1129 = vmatprep.subr.bf16.mxu0 %v1066
          %1130 = vmatpush1.bf16.msra.mxu0 %v1065
          %1131 = vmatprep.subr.bf16.mxu0 %v1068
          %1132 = vmatpush1.bf16.msra.mxu0 %v1067
          %1133 = vmatprep.subr.bf16.mxu0 %v1070
          %1134 = vmatpush1.bf16.msra.mxu0 %v1069
          %1135 = vmatprep.subr.bf16.mxu0 %v1072
          %1136 = vmatpush1.bf16.msra.mxu0 %v1071
          %1137 = vmatprep.subr.bf16.mxu0 %v1074
          %1138 = vmatpush1.bf16.msra.mxu0 %v1073
          %1139 = vmatprep.subr.bf16.mxu0 %v1076
          %1140 = vmatpush1.bf16.msra.mxu0 %v1075
          %1141 = vmatprep.subr.bf16.mxu0 %v1078
          %1142 = vmatpush1.bf16.msra.mxu0 %v1077
          %1143 = vmatprep.subr.bf16.mxu0 %v1080
          %1144 = vmatpush1.bf16.msra.mxu0 %v1079
          %1145 = vmatprep.subr.bf16.mxu0 %v1082
          %1146 = vmatpush1.bf16.msra.mxu0 %v1081
          %1147 = vmatprep.subr.bf16.mxu0 %v1084
          %1148 = vmatpush1.bf16.msra.mxu0 %v1083
          %1149 = vmatprep.subr.bf16.mxu0 %v1086
          %1150 = vmatpush1.bf16.msra.mxu0 %v1085
          %1151 = vmatprep.mubr.bf16.mxu0 %v914
          %1152 = vmatmul.mubr.bf16.gmra.mrb[0].mxu0 %v913
          %v1153 = vpop.f32.mrb[0].mxu0
          %v1154 = vadd.f32 %v952, %v1153
          %v1155 = vpop.f32.mrb[0].mxu0
          %v1156 = vadd.f32 %v956, %v1155
          %v1157 = vpop.f32.mrb[0].mxu0
          %v1158 = vpop.f32.mrb[0].mxu0
          %1159 = vdwg.mxu0
          %v1160 = vmax.f32 %v1154, 0.0
          %v1161 = vmax.f32 %v1156, 0.0
          %v1162 = vpack.c.bf16 %v1160, %v1160
          %v1163 = vpack.c.bf16 %v1161, %v1161
          %v1164 = vld [vmem:[#allocation18] sm:$0xf]
          %v1165 = vld [vmem:[#allocation18 + $0x4] sm:$0xf]
          %v1166 = vld [vmem:[#allocation18 + $0x8] sm:$0xf]
          %v1167 = vld [vmem:[#allocation18 + $0xc] sm:$0xf]
          %v1168 = vld [vmem:[#allocation18 + $0x10] sm:$0xf]
          %v1169 = vld [vmem:[#allocation18 + $0x14] sm:$0xf]
          %v1170 = vld [vmem:[#allocation18 + $0x18] sm:$0xf]
          %v1171 = vld [vmem:[#allocation18 + $0x1c] sm:$0xf]
          %v1172 = vld [vmem:[#allocation18 + $0x20] sm:$0xf]
          %v1173 = vld [vmem:[#allocation18 + $0x24] sm:$0xf]
          %v1174 = vld [vmem:[#allocation18 + $0x28] sm:$0xf]
          %v1175 = vld [vmem:[#allocation18 + $0x2c] sm:$0xf]
          %v1176 = vld [vmem:[#allocation18 + $0x30] sm:$0xf]
          %v1177 = vld [vmem:[#allocation18 + $0x34] sm:$0xf]
          %v1178 = vld [vmem:[#allocation18 + $0x38] sm:$0xf]
          %v1179 = vld [vmem:[#allocation18 + $0x3c] sm:$0xf]
          %v1180 = vld [vmem:[#allocation18 + $0x40] sm:$0xf]
          %v1181 = vld [vmem:[#allocation18 + $0x44] sm:$0xf]
          %v1182 = vld [vmem:[#allocation18 + $0x48] sm:$0xf]
          %v1183 = vld [vmem:[#allocation18 + $0x4c] sm:$0xf]
          %v1184 = vld [vmem:[#allocation18 + $0x50] sm:$0xf]
          %v1185 = vld [vmem:[#allocation18 + $0x54] sm:$0xf]
          %v1186 = vld [vmem:[#allocation18 + $0x58] sm:$0xf]
          %v1187 = vld [vmem:[#allocation18 + $0x5c] sm:$0xf]
          %v1188 = vld [vmem:[#allocation18 + $0x60] sm:$0xf]
          %v1189 = vld [vmem:[#allocation18 + $0x64] sm:$0xf]
          %v1190 = vld [vmem:[#allocation18 + $0x68] sm:$0xf]
          %v1191 = vld [vmem:[#allocation18 + $0x6c] sm:$0xf]
          %v1192 = vld [vmem:[#allocation18 + $0x70] sm:$0xf]
          %v1193 = vld [vmem:[#allocation18 + $0x74] sm:$0xf]
          %v1194 = vld [vmem:[#allocation18 + $0x78] sm:$0xf]
          %v1195 = vld [vmem:[#allocation18 + $0x7c] sm:$0xf]
          %v1196 = vld [vmem:[#allocation3] sm:$0x1]
          %v1198 = vlaneseq
          %v1199 = vshrl.u32 %v1198, 7
          %v1200 = vsub.s32 0, %v1199
          %v1201 = vrot.slane %v1196, %v1200
          %v1235 = vunpack.c.l.b16 %v1164
          %v1236 = vunpack.c.l.b16 %v1165
          %v1237 = vunpack.c.l.b16 %v1166
          %v1238 = vunpack.c.l.b16 %v1167
          %v1239 = vunpack.c.l.b16 %v1168
          %v1240 = vunpack.c.l.b16 %v1169
          %v1241 = vunpack.c.l.b16 %v1170
          %v1242 = vunpack.c.l.b16 %v1171
          %v1243 = vunpack.c.l.b16 %v1172
          %v1244 = vunpack.c.l.b16 %v1173
          %v1245 = vunpack.c.l.b16 %v1174
          %v1246 = vunpack.c.l.b16 %v1175
          %v1247 = vunpack.c.l.b16 %v1176
          %v1248 = vunpack.c.l.b16 %v1177
          %v1249 = vunpack.c.l.b16 %v1178
          %v1250 = vunpack.c.l.b16 %v1179
          %v1251 = vunpack.c.l.b16 %v1180
          %v1252 = vunpack.c.l.b16 %v1181
          %v1253 = vunpack.c.l.b16 %v1182
          %v1254 = vunpack.c.l.b16 %v1183
          %v1255 = vunpack.c.l.b16 %v1184
          %v1256 = vunpack.c.l.b16 %v1185
          %v1257 = vunpack.c.l.b16 %v1186
          %v1258 = vunpack.c.l.b16 %v1187
          %v1259 = vunpack.c.l.b16 %v1188
          %v1260 = vunpack.c.l.b16 %v1189
          %v1261 = vunpack.c.l.b16 %v1190
          %v1262 = vunpack.c.l.b16 %v1191
          %v1263 = vunpack.c.l.b16 %v1192
          %v1264 = vunpack.c.l.b16 %v1193
          %v1265 = vunpack.c.l.b16 %v1194
          %v1266 = vunpack.c.l.b16 %v1195
          %v1267 = vpack.c.b16 %v1236, %v1235
          %v1268 = vpack.c.b16 %v1238, %v1237
          %v1269 = vpack.c.b16 %v1240, %v1239
          %v1270 = vpack.c.b16 %v1242, %v1241
          %v1271 = vpack.c.b16 %v1244, %v1243
          %v1272 = vpack.c.b16 %v1246, %v1245
          %v1273 = vpack.c.b16 %v1248, %v1247
          %v1274 = vpack.c.b16 %v1250, %v1249
          %v1275 = vpack.c.b16 %v1252, %v1251
          %v1276 = vpack.c.b16 %v1254, %v1253
          %v1277 = vpack.c.b16 %v1256, %v1255
          %v1278 = vpack.c.b16 %v1258, %v1257
          %v1279 = vpack.c.b16 %v1260, %v1259
          %v1280 = vpack.c.b16 %v1262, %v1261
          %v1281 = vpack.c.b16 %v1264, %v1263
          %v1282 = vpack.c.b16 %v1266, %v1265
          %1299 = vmatprep.subr.bf16.mxu0 0
          %1300 = vmatpush1.bf16.msra.mxu0 %v1267
          %1301 = vmatprep.subr.bf16.mxu0 0
          %1302 = vmatpush1.bf16.msra.mxu0 %v1268
          %1303 = vmatprep.subr.bf16.mxu0 0
          %1304 = vmatpush1.bf16.msra.mxu0 %v1269
          %1305 = vmatprep.subr.bf16.mxu0 0
          %1306 = vmatpush1.bf16.msra.mxu0 %v1270
          %1307 = vmatprep.subr.bf16.mxu0 0
          %1308 = vmatpush1.bf16.msra.mxu0 %v1271
          %1309 = vmatprep.subr.bf16.mxu0 0
          %1310 = vmatpush1.bf16.msra.mxu0 %v1272
          %1311 = vmatprep.subr.bf16.mxu0 0
          %1312 = vmatpush1.bf16.msra.mxu0 %v1273
          %1313 = vmatprep.subr.bf16.mxu0 0
          %1314 = vmatpush1.bf16.msra.mxu0 %v1274
          %1315 = vmatprep.subr.bf16.mxu0 0
          %1316 = vmatpush1.bf16.msra.mxu0 %v1275
          %1317 = vmatprep.subr.bf16.mxu0 0
          %1318 = vmatpush1.bf16.msra.mxu0 %v1276
          %1319 = vmatprep.subr.bf16.mxu0 0
          %1320 = vmatpush1.bf16.msra.mxu0 %v1277
          %1321 = vmatprep.subr.bf16.mxu0 0
          %1322 = vmatpush1.bf16.msra.mxu0 %v1278
          %1323 = vmatprep.subr.bf16.mxu0 0
          %1324 = vmatpush1.bf16.msra.mxu0 %v1279
          %1325 = vmatprep.subr.bf16.mxu0 0
          %1326 = vmatpush1.bf16.msra.mxu0 %v1280
          %1327 = vmatprep.subr.bf16.mxu0 0
          %1328 = vmatpush1.bf16.msra.mxu0 %v1281
          %1329 = vmatprep.subr.bf16.mxu0 0
          %1330 = vmatpush1.bf16.msra.mxu0 %v1282
          %1331 = vmatprep.mubr.bf16.mxu0 %v1163
          %1332 = vmatmul.mubr.bf16.gmra.mrb[0].mxu0 %v1162
          %v1333 = vpop.f32.mrb[0].mxu0
          %v1334 = vadd.f32 %v1201, %v1333
          %v1335 = vpop.f32.mrb[0].mxu0
          %v1336 = vpop.f32.mrb[0].mxu0
          %v1337 = vpop.f32.mrb[0].mxu0
          %1338 = vdwg.mxu0
          %vm1339 = vcmask 1024
          %1340 = vst.msk [vmem:[#allocation19] sm:$0x3] %vm1339, %v1334
        $region104: #{forward.19} parent=59 // pred_fallthru
          _
        // Predicated region
        $region105: #{forward.19} parent=59 // pred_check
          %p1341 = pneg %p266
        $region106: #{forward.19} parent=59 // pred_check_branch
          %1343 = sbr.rel (%p1341) target = $region108
        $region107: #{forward.19} parent=59 // pred_region
          %s1345 = ssub.s32 32, 32
          %1346 = vsyncadd [#allocation6], %s1345
          %s1348 = sshll.u32 [#allocation19], 4
          %s1349 = int_to_ptr.vmem [resolvable:$true] %s1348
          %1351 = dma.vmem_to_hbm [thread:$0]  %s1349, 32, %s10, [#allocation6]
        $region108: #{forward.19} parent=59 // pred_fallthru
          _
        // Predicated region
        $region109: #{forward.19} parent=59 // pred_check
          %p1352 = pneg %p266
        $region110: #{forward.19} parent=59 // pred_check_branch
          %1354 = sbr.rel (%p1352) target = $region112
        $region111: #{forward.19} parent=59 // pred_region
          %1355 = dma.done [#allocation6], 32
        $region112: #{forward.19} parent=59 // pred_fallthru
          _
      $region60: #{forward.19} parent=5 // pred_fallthru
        _
      %p1356 = scmp.le.s32.totalorder 2, %s28
      // Predicated region
      $region113: #{forward.19} parent=5 // pred_check
        %p1357 = pneg %p1356
      $region114: #{forward.19} parent=5 // pred_check_branch
        %1359 = sbr.rel (%p1357) target = $region116
      $region115: #{forward.19} parent=5 // pred_region
        %s1360 = ssub.s32 %s28, 2
      $region116: #{forward.19} parent=5 // pred_fallthru
        _
    $region6: #{forward.19} parent=1 // loop_footer
      %s32 = sadd.s32 1, %s28
    $region7: #{forward.19} parent=1 // loop_footer_branch
      %27 = sbr.rel target = $region3
    $region8: #{forward.19} parent=1 // loop_exit
      _
    %1361 = vsyncpa [#allocation5], 1
    %s1362 = scalar_lea.sflag [#allocation5], 1
    %1363 = vsyncpa %s1362, 1
    %1364 = vsyncpa [#allocation8], 1
    %s1365 = scalar_lea.sflag [#allocation8], 1
    %1366 = vsyncpa %s1365, 1
    %1367 = vsyncpa [#allocation11], 1
    %1368 = vsyncpa [#allocation14], 1
    %1369 = vsyncpa [#allocation17], 1
    %1370 = vsyncpa [#allocation6], 1
    %s1371 = scalar_lea.sflag [#allocation6], 1
    %1372 = vsyncpa %s1371, 1

</llo_original>
